<compile_context>
chip_gen: v6e
topology: v6e:2x2x1
jax: 0.10.0
libtpu: 0.0.40
codegen_flags: <defaults>
</compile_context>

<pallas_src>
import functools
import numpy as np
import jax
import jax.numpy as jnp
from jax.experimental import pallas as pl
from jax.experimental.pallas import tpu as pltpu

START_TAG = "<START>"
END_TAG = "<END>"


# -----------------------------------------------------------------------------
# Fused kernel: BiLSTM recurrence + hidden2tag + Viterbi forward + backtrack,
# batched over TILE_B sequences per grid step.
# -----------------------------------------------------------------------------
def bilstm_crf_kernel(emb2_ref, wih_ref, whh_ref, b_ref, h0_ref, c0_ref,
                      woutf_ref, woutb_ref, bout_ref, trans_ref, tend_ref,
                      frames_ref, ps_ref,
                      hid_s, hid_r,
                      *, start_ix):
    rows = emb2_ref.shape[0]          # T * TB
    TB = h0_ref.shape[0]
    T = rows // TB
    n = trans_ref.shape[0]
    h2 = whh_ref.shape[0]             # 2 * hsz
    out_w = ps_ref.shape[1]

    # ---- Stage 1: input-to-hidden projections for BOTH directions and ALL
    # timesteps of ALL tile sequences in one bf16 MXU matmul; result (the gate
    # pre-activation table xg) stays register-resident (no VMEM scratch).
    xg = (jnp.dot(emb2_ref[...], wih_ref[...],
                  preferred_element_type=jnp.float32) + b_ref[...])

    whh = whh_ref[...]                # bf16 (2*hsz, 8*hsz), block-diag, gate-major

    def sig(x):
        # tanh-based sigmoid: single EUP op (separate VLIW slot) instead of
        # exp + f32 divide on the serialized per-step chain.
        return 0.5 * (jnp.tanh(0.5 * x) + 1.0)

    # ---- Stage 2: fused fwd+bwd LSTM recurrence over TB sequences at once.
    # h = [h_fwd | h_bwd], c = [c_fwd | c_bwd]; at step t the fwd chain consumes
    # emb[t] and the bwd chain consumes emb[T-1-t] (baked into emb2 rows).
    # Fully unrolled: T is small and static.
    # TODO(synk): for T > ~16 move backpointers/hidden trajectory handling to
    # lax.fori_loop + VMEM scratch to bound vreg live ranges.
    h = h0_ref[...]                   # (TB, 2*hsz) f32
    c = c0_ref[...]
    for t in range(T):
        pre = xg[t * TB:(t + 1) * TB, :] + jnp.dot(
            h.astype(jnp.bfloat16), whh, preferred_element_type=jnp.float32)
        i_g = sig(pre[:, 0 * h2:1 * h2])     # [i_f | i_b]
        f_g = sig(pre[:, 1 * h2:2 * h2])     # [f_f | f_b]
        g_g = jnp.tanh(pre[:, 2 * h2:3 * h2])
        o_g = sig(pre[:, 3 * h2:4 * h2])
        c = f_g * c + i_g * g_g
        h = o_g * jnp.tanh(c)
        # step-t hidden = [h_fwd(t) | h_bwd(T-1-t)]: store once in step order and
        # once in time-reversed order (replaces the old anti-diagonal flip matmul).
        hid_s[pl.ds(t * TB, TB), :] = h
        hid_r[pl.ds((T - 1 - t) * TB, TB), :] = h

    # ---- Stage 3: hidden2tag.  Block-zero-padded weights pick the forward half
    # out of hid_s and the backward half out of hid_r.
    frames = (jnp.dot(hid_s[...], woutf_ref[...], preferred_element_type=jnp.float32)
              + jnp.dot(hid_r[...], woutb_ref[...], preferred_element_type=jnp.float32)
              + bout_ref[...])                               # (T*TB, n)
    frames_ref[...] = frames

    # ---- Stage 4: batched Viterbi forward recursion (max-plus), unrolled.
    trans = trans_ref[...]
    lane_n = jax.lax.broadcasted_iota(jnp.int32, (TB, n), 1)
    alpha = jnp.where(lane_n == start_ix, 0.0, -10000.0).astype(jnp.float32)
    bts = []                           # per-step backpointers stay register-resident
    for t in range(T):
        # candidate scores per previous tag i (n is tiny, unrolled)
        cands = [alpha[:, i:i + 1] + trans[i:i + 1, :] for i in range(n)]
        m = cands[0]
        for i in range(1, n):
            m = jnp.maximum(m, cands[i])
        bp = jnp.full((TB, n), n, jnp.int32)
        for i in range(n - 1, -1, -1):     # first-match argmax over previous tag
            bp = jnp.where(cands[i] == m, i, bp)
        bts.append(bp)
        # emission is constant over the previous tag -> add after the max
        alpha = m + frames[t * TB:(t + 1) * TB, :]

    final = alpha + tend_ref[...]          # final[b, i] = alpha[b, i] + trans[i, END]
    best = jnp.max(final, axis=1, keepdims=True)                      # (TB, 1)
    idx = jnp.min(jnp.where(final == best, lane_n, n), axis=1, keepdims=True)

    # ---- Stage 5: on-device backtrack; pack path + score into one lane-dense
    # (TB, out_w) f32 row per sequence -> a single unmasked store / DMA.
    lane_w = jax.lax.broadcasted_iota(jnp.int32, (TB, out_w), 1)
    ps = jnp.zeros((TB, out_w), jnp.float32)
    ps = jnp.where(lane_w == T, best, ps)                  # lane T : best score
    ps = jnp.where(lane_w == T - 1, idx.astype(jnp.float32), ps)
    for t in range(T - 1, 0, -1):
        idx = jnp.sum(jnp.where(lane_n == idx, bts[t], 0), axis=1, keepdims=True)
        ps = jnp.where(lane_w == t - 1, idx.astype(jnp.float32), ps)
    ps_ref[...] = ps


def bilstm_crf_forward(emb, fp, n_tags, start_ix, *, tile_b=8):
    """emb: (B, T, E) f32.  Returns (frames (B,T,n_tags), path (B,T) i32, score (B,))."""
    B, T, E = emb.shape
    assert tile_b % 8 == 0 and B % tile_b == 0
    G = B // tile_b                      # grid steps; "parallel" -> 2 TCs on v7x
    hsz = fp["hsz"]
    h2 = 2 * hsz
    rows = T * tile_b
    out_w = max(128, pl.cdiv(T + 1, 128) * 128)

    # Host glue: forward features ++ time-reversed features, laid out so each grid
    # tile sees a contiguous (T*tile_b, 2E) slab with timestep-major rows.
    # TODO(synk): fold this gather/reverse/cast into the kernel via scalar prefetch
    # of the word ids once batch*seq grows enough for the HBM round-trip to show.
    emb2 = jnp.concatenate([emb, emb[:, ::-1, :]], axis=-1)            # (B, T, 2E)
    emb2 = emb2.reshape(G, tile_b, T, 2 * E).transpose(0, 2, 1, 3)     # (G,T,TB,2E)
    emb2 = emb2.reshape(G * rows, 2 * E).astype(jnp.bfloat16)

    args = (emb2, fp["wih_bd"], fp["whh_bd"], fp["b_bd"], fp["h0"], fp["c0"],
            fp["woutf"], fp["woutb"], fp["bout"], fp["trans"], fp["trans_end"])

    def full(a):
        return pl.BlockSpec(a.shape, lambda g, nd=a.ndim: (0,) * nd)

    in_specs = [
        pl.BlockSpec((rows, 2 * E), lambda g: (g, 0)),        # emb2 tile
        full(fp["wih_bd"]), full(fp["whh_bd"]), full(fp["b_bd"]),
        pl.BlockSpec((tile_b, h2), lambda g: (g, 0)),         # h0 tile
        pl.BlockSpec((tile_b, h2), lambda g: (g, 0)),         # c0 tile
        full(fp["woutf"]), full(fp["woutb"]), full(fp["bout"]),
        full(fp["trans"]), full(fp["trans_end"]),
    ]
    out_specs = (
        pl.BlockSpec((rows, n_tags), lambda g: (g, 0)),       # frames (tile-flat)
        pl.BlockSpec((tile_b, out_w), lambda g: (g, 0)),      # packed path + score
    )
    out_shape = (jax.ShapeDtypeStruct((G * rows, n_tags), jnp.float32),
                 jax.ShapeDtypeStruct((B, out_w), jnp.float32))

    kern = functools.partial(bilstm_crf_kernel, start_ix=start_ix)
    frames_flat, ps = pl.pallas_call(
        kern,
        grid=(G,),
        in_specs=in_specs,
        out_specs=out_specs,
        out_shape=out_shape,
        scratch_shapes=[pltpu.VMEM((rows, h2), jnp.float32),   # hid, step order
                        pltpu.VMEM((rows, h2), jnp.float32)],  # hid, reversed order
        compiler_params=pltpu.CompilerParams(
            dimension_semantics=("parallel",),   # v7x: shard batch tiles over 2 TCs
            vmem_limit_bytes=32 * 1024 * 1024),
    )(*args)

    frames = frames_flat.reshape(G, T, tile_b, n_tags).transpose(0, 2, 1, 3)
    frames = frames.reshape(B, T, n_tags)
    path = ps[:, :T].astype(jnp.int32)
    score = ps[:, T]
    return frames, path, score


# -----------------------------------------------------------------------------
# Host-side parameter preparation (pure layout plumbing, done once)
# -----------------------------------------------------------------------------
def _interleave_gates(wf, wb, hsz):
    """Two [i|f|g|o]-blocked matrices (last dim 4*hsz) -> gate-major, direction-minor
    layout [i_f i_b | f_f f_b | g_f g_b | o_f o_b] (last dim 8*hsz)."""
    lead = wf.shape[:-1]
    gf = wf.reshape(lead + (4, hsz))
    gb = wb.reshape(lead + (4, hsz))
    return jnp.stack([gf, gb], axis=-2).reshape(lead + (8 * hsz,))


def prepare_fused_params(p, end_ix):
    hsz = p["whhT_f"].shape[0]
    n_tags = p["bout"].shape[1]
    zE = jnp.zeros_like(p["wihT_f"])
    zH = jnp.zeros_like(p["whhT_f"])
    zhn = jnp.zeros((hsz, n_tags), jnp.float32)
    wih_bd = jnp.concatenate([_interleave_gates(p["wihT_f"], zE, hsz),
                              _interleave_gates(zE, p["wihT_b"], hsz)], axis=0)
    whh_bd = jnp.concatenate([_interleave_gates(p["whhT_f"], zH, hsz),
                              _interleave_gates(zH, p["whhT_b"], hsz)], axis=0)
    return {
        "hsz": hsz,
        "wih_bd": wih_bd.astype(jnp.bfloat16),                       # (2E, 8*hsz)
        "whh_bd": whh_bd.astype(jnp.bfloat16),                       # (2*hsz, 8*hsz)
        "b_bd": _interleave_gates(p["b_f"], p["b_b"], hsz),          # (1, 8*hsz) f32
        "h0": jnp.concatenate([p["h0"][0], p["h0"][1]], axis=1),     # (B, 2*hsz)
        "c0": jnp.concatenate([p["c0"][0], p["c0"][1]], axis=1),
        "woutf": jnp.concatenate([p["woutT_f"], zhn], axis=0),       # (2*hsz, n_tags)
        "woutb": jnp.concatenate([zhn, p["woutT_b"]], axis=0),
        "bout": p["bout"],
        "trans": p["trans"],
        "trans_end": p["trans"][:, end_ix][None, :],                 # (1, n_tags)
    }


# -----------------------------------------------------------------------------
# Deterministic parameter construction + pure references for validation
# -----------------------------------------------------------------------------
def make_params(key, vocab_size, n_tags, E, H, B, start_ix, end_ix):
    hsz = H // 2
    ks = jax.random.split(key, 16)

    def rnd(k, shape, scale=0.1):
        return (scale * jax.random.normal(k, shape)).astype(jnp.float32)

    p = {
        "embedding": rnd(ks[0], (vocab_size, E), 1.0),
        "wihT_f": rnd(ks[1], (E, 4 * hsz)),
        "whhT_f": rnd(ks[2], (hsz, 4 * hsz)),
        "b_f": rnd(ks[3], (1, 4 * hsz)),          # b_ih + b_hh combined
        "wihT_b": rnd(ks[4], (E, 4 * hsz)),
        "whhT_b": rnd(ks[5], (hsz, 4 * hsz)),
        "b_b": rnd(ks[6], (1, 4 * hsz)),
        # TODO(synk): the module draws h0/c0 from torch.randn each forward call;
        # deterministic per-sequence stand-ins keep the kernel checkable.
        "h0": rnd(ks[7], (2, B, hsz), 1.0),
        "c0": rnd(ks[8], (2, B, hsz), 1.0),
        "woutT_f": rnd(ks[9], (hsz, n_tags)),
        "woutT_b": rnd(ks[10], (hsz, n_tags)),
        "bout": rnd(ks[11], (1, n_tags)),
    }
    trans = jax.random.normal(ks[12], (n_tags, n_tags)).astype(jnp.float32)
    trans = trans.at[:, start_ix].set(-10000.0)
    trans = trans.at[end_ix, :].set(-10000.0)
    p["trans"] = trans
    return p


def reference_frames(emb, p):
    """emb: (T, E) single sequence; p['h0']/p['c0'] shaped (2, 1, hsz)."""
    hsz = p["whhT_f"].shape[0]

    def run_dir(xs, wihT, whhT, b, h, c):
        hs = []
        for t in range(xs.shape[0]):
            pre = xs[t:t + 1] @ wihT + h @ whhT + b
            i = jax.nn.sigmoid(pre[:, :hsz]); f = jax.nn.sigmoid(pre[:, hsz:2 * hsz])
            g = jnp.tanh(pre[:, 2 * hsz:3 * hsz]); o = jax.nn.sigmoid(pre[:, 3 * hsz:])
            c = f * c + i * g
            h = o * jnp.tanh(c)
            hs.append(h)
        return jnp.concatenate(hs, axis=0)

    hf = run_dir(emb, p["wihT_f"], p["whhT_f"], p["b_f"], p["h0"][0], p["c0"][0])
    hb = run_dir(emb[::-1], p["wihT_b"], p["whhT_b"], p["b_b"], p["h0"][1], p["c0"][1])[::-1]
    return hf @ p["woutT_f"] + hb @ p["woutT_b"] + p["bout"]


def reference_viterbi(frames, trans, start_ix, end_ix):
    frames = np.asarray(frames); trans = np.asarray(trans)
    n = trans.shape[0]
    alpha = np.full((1, n), -10000.0); alpha[0, start_ix] = 0.0
    backtrace = []
    for t in range(frames.shape[0]):
        smat = alpha.T + frames[t][None, :] + trans
        backtrace.append(smat.argmax(0))
        alpha = smat.max(0)[None, :]
    smat = alpha.T + trans[:, [end_ix]]
    best = int(smat.argmax()); score = float(smat.max())
    path = [best]
    for bp in reversed(backtrace[1:]):
        best = int(bp[best]); path.append(best)
    return score, path[::-1]


if __name__ == "__main__":
    ix2tag = ["B", "I", "O", START_TAG, END_TAG]
    tag2ix = {t: i for i, t in enumerate(ix2tag)}
    start_ix, end_ix = tag2ix[START_TAG], tag2ix[END_TAG]

    # embedding_dim=32, hidden_dim=32, seq_len=8, batch of 16 sequences decoded
    # independently (2 grid tiles of 8 -> v7x gets one tile per TensorCore).
    vocab_size, E, H, T, B = 20, 32, 32, 8, 16
    TILE_B = 8

    p = make_params(jax.random.PRNGKey(0), vocab_size, len(ix2tag), E, H, B,
                    start_ix, end_ix)
    fp = prepare_fused_params(p, end_ix)
    words = jax.random.randint(jax.random.PRNGKey(1), (B, T), 0, vocab_size)

    # glue: embedding lookup (plain JAX gather, tiny)
    emb = p["embedding"][words].astype(jnp.float32)          # (B, T, E)

    # fused hot path: BiLSTM + hidden2tag + Viterbi (forward + backtrack), batched
    frames, path, score = bilstm_crf_forward(emb, fp, len(ix2tag), start_ix,
                                             tile_b=TILE_B)
    jax.block_until_ready((frames, path, score))

    frames_np = np.asarray(frames)
    path_np = np.asarray(path)
    score_np = np.asarray(score)

    for b in range(B):
        pb = dict(p)
        pb["h0"] = p["h0"][:, b:b + 1]
        pb["c0"] = p["c0"][:, b:b + 1]
        # check 1: LSTM features vs pure-f32 JAX reference (kernel uses bf16 matmuls)
        ref_f = np.asarray(reference_frames(emb[b], pb))
        np.testing.assert_allclose(frames_np[b], ref_f, rtol=5e-2, atol=8e-2)
        # check 2: Viterbi decode vs numpy reference run on the kernel's own frames
        ref_score, ref_path = reference_viterbi(frames_np[b], p["trans"],
                                                start_ix, end_ix)
        k_path = [int(v) for v in path_np[b]]
        assert k_path == ref_path, (b, k_path, ref_path)
        np.testing.assert_allclose(float(score_np[b]), ref_score, rtol=1e-4, atol=1e-3)

    tags = [ix2tag[i] for i in path_np[0].tolist()]
    assert len(tags) == T and all(t in ix2tag for t in tags)

    print("KERNEL_OK")
</pallas_src>

<mosaic_0001>
module attributes {stable_mosaic.version = 11 : i64} {
  func.func @bilstm_crf_kernel(%arg0: i32, %arg1: memref<64x64xbf16, #tpu.memory_space<vmem>>, %arg2: memref<64x128xbf16, #tpu.memory_space<vmem>>, %arg3: memref<32x128xbf16, #tpu.memory_space<vmem>>, %arg4: memref<1x128xf32, #tpu.memory_space<vmem>>, %arg5: memref<8x32xf32, #tpu.memory_space<vmem>>, %arg6: memref<8x32xf32, #tpu.memory_space<vmem>>, %arg7: memref<32x5xf32, #tpu.memory_space<vmem>>, %arg8: memref<32x5xf32, #tpu.memory_space<vmem>>, %arg9: memref<1x5xf32, #tpu.memory_space<vmem>>, %arg10: memref<5x5xf32, #tpu.memory_space<vmem>>, %arg11: memref<1x5xf32, #tpu.memory_space<vmem>>, %arg12: memref<64x5xf32, #tpu.memory_space<vmem>>, %arg13: memref<8x128xf32, #tpu.memory_space<vmem>>, %arg14: memref<64x32xf32, #tpu.memory_space<vmem>>, %arg15: memref<64x32xf32, #tpu.memory_space<vmem>>) attributes {dimension_semantics = [#tpu.dimension_semantics<parallel>], iteration_bounds = array<i64: 2>, scalar_prefetch = 0 : i64, scratch_operands = 2 : i64, tpu.core_type = #tpu.core_type<tc>, window_params = [{transform_indices = @transform_0, window_bounds = array<i64: 64, 64>}, {pipeline_mode = #tpu.pipeline_mode<synchronous>, transform_indices = @transform_1, window_bounds = array<i64: 64, 128>}, {pipeline_mode = #tpu.pipeline_mode<synchronous>, transform_indices = @transform_2, window_bounds = array<i64: 32, 128>}, {pipeline_mode = #tpu.pipeline_mode<synchronous>, transform_indices = @transform_3, window_bounds = array<i64: 1, 128>}, {transform_indices = @transform_4, window_bounds = array<i64: 8, 32>}, {transform_indices = @transform_5, window_bounds = array<i64: 8, 32>}, {pipeline_mode = #tpu.pipeline_mode<synchronous>, transform_indices = @transform_6, window_bounds = array<i64: 32, 5>}, {pipeline_mode = #tpu.pipeline_mode<synchronous>, transform_indices = @transform_7, window_bounds = array<i64: 32, 5>}, {pipeline_mode = #tpu.pipeline_mode<synchronous>, transform_indices = @transform_8, window_bounds = array<i64: 1, 5>}, {pipeline_mode = #tpu.pipeline_mode<synchronous>, transform_indices = @transform_9, window_bounds = array<i64: 5, 5>}, {pipeline_mode = #tpu.pipeline_mode<synchronous>, transform_indices = @transform_10, window_bounds = array<i64: 1, 5>}, {transform_indices = @transform_11, window_bounds = array<i64: 64, 5>}, {transform_indices = @transform_12, window_bounds = array<i64: 8, 128>}]} {
    %c0 = arith.constant 0 : index
    %c0_0 = arith.constant 0 : index
    %0 = vector.load %arg1[%c0, %c0_0] : memref<64x64xbf16, #tpu.memory_space<vmem>>, vector<64x64xbf16>
    %c0_1 = arith.constant 0 : index
    %c0_2 = arith.constant 0 : index
    %1 = vector.load %arg2[%c0_1, %c0_2] : memref<64x128xbf16, #tpu.memory_space<vmem>>, vector<64x128xbf16>
    %cst = arith.constant dense<0.000000e+00> : vector<64x128xf32>
    %2 = tpu.matmul %0, %1, %cst {dimension_numbers = #tpu.dot_dimension_numbers<[1], [0], [0], [1], [0, 0, 1, 1], [], []>} : vector<64x64xbf16>, vector<64x128xbf16>, vector<64x128xf32> -> vector<64x128xf32>
    %c0_3 = arith.constant 0 : index
    %c0_4 = arith.constant 0 : index
    %3 = vector.load %arg4[%c0_3, %c0_4] : memref<1x128xf32, #tpu.memory_space<vmem>>, vector<1x128xf32>
    %4 = vector.broadcast %3 : vector<1x128xf32> to vector<64x128xf32>
    %5 = arith.addf %2, %4 : vector<64x128xf32>
    %c0_5 = arith.constant 0 : index
    %c0_6 = arith.constant 0 : index
    %6 = vector.load %arg3[%c0_5, %c0_6] : memref<32x128xbf16, #tpu.memory_space<vmem>>, vector<32x128xbf16>
    %c0_7 = arith.constant 0 : index
    %c0_8 = arith.constant 0 : index
    %7 = vector.load %arg5[%c0_7, %c0_8] : memref<8x32xf32, #tpu.memory_space<vmem>>, vector<8x32xf32>
    %c0_9 = arith.constant 0 : index
    %c0_10 = arith.constant 0 : index
    %8 = vector.load %arg6[%c0_9, %c0_10] : memref<8x32xf32, #tpu.memory_space<vmem>>, vector<8x32xf32>
    %9 = vector.extract_strided_slice %5 {offsets = [0, 0], sizes = [8, 128], strides = [1, 1]} : vector<64x128xf32> to vector<8x128xf32>
    %10 = arith.truncf %7 : vector<8x32xf32> to vector<8x32xbf16>
    %cst_11 = arith.constant dense<0.000000e+00> : vector<8x128xf32>
    %11 = tpu.matmul %10, %6, %cst_11 {dimension_numbers = #tpu.dot_dimension_numbers<[1], [0], [0], [1], [0, 0, 1, 1], [], []>} : vector<8x32xbf16>, vector<32x128xbf16>, vector<8x128xf32> -> vector<8x128xf32>
    %12 = arith.addf %9, %11 : vector<8x128xf32>
    %13 = vector.extract_strided_slice %12 {offsets = [0, 0], sizes = [8, 32], strides = [1, 1]} : vector<8x128xf32> to vector<8x32xf32>
    %cst_12 = arith.constant 5.000000e-01 : f32
    %14 = vector.broadcast %cst_12 : f32 to vector<8x32xf32>
    %15 = arith.mulf %14, %13 : vector<8x32xf32>
    %16 = math.tanh %15 : vector<8x32xf32>
    %cst_13 = arith.constant 1.000000e+00 : f32
    %17 = vector.broadcast %cst_13 : f32 to vector<8x32xf32>
    %18 = arith.addf %16, %17 : vector<8x32xf32>
    %cst_14 = arith.constant 5.000000e-01 : f32
    %19 = vector.broadcast %cst_14 : f32 to vector<8x32xf32>
    %20 = arith.mulf %19, %18 : vector<8x32xf32>
    %21 = vector.extract_strided_slice %12 {offsets = [0, 32], sizes = [8, 32], strides = [1, 1]} : vector<8x128xf32> to vector<8x32xf32>
    %cst_15 = arith.constant 5.000000e-01 : f32
    %22 = vector.broadcast %cst_15 : f32 to vector<8x32xf32>
    %23 = arith.mulf %22, %21 : vector<8x32xf32>
    %24 = math.tanh %23 : vector<8x32xf32>
    %cst_16 = arith.constant 1.000000e+00 : f32
    %25 = vector.broadcast %cst_16 : f32 to vector<8x32xf32>
    %26 = arith.addf %24, %25 : vector<8x32xf32>
    %cst_17 = arith.constant 5.000000e-01 : f32
    %27 = vector.broadcast %cst_17 : f32 to vector<8x32xf32>
    %28 = arith.mulf %27, %26 : vector<8x32xf32>
    %29 = vector.extract_strided_slice %12 {offsets = [0, 64], sizes = [8, 32], strides = [1, 1]} : vector<8x128xf32> to vector<8x32xf32>
    %30 = math.tanh %29 : vector<8x32xf32>
    %31 = vector.extract_strided_slice %12 {offsets = [0, 96], sizes = [8, 32], strides = [1, 1]} : vector<8x128xf32> to vector<8x32xf32>
    %cst_18 = arith.constant 5.000000e-01 : f32
    %32 = vector.broadcast %cst_18 : f32 to vector<8x32xf32>
    %33 = arith.mulf %32, %31 : vector<8x32xf32>
    %34 = math.tanh %33 : vector<8x32xf32>
    %cst_19 = arith.constant 1.000000e+00 : f32
    %35 = vector.broadcast %cst_19 : f32 to vector<8x32xf32>
    %36 = arith.addf %34, %35 : vector<8x32xf32>
    %cst_20 = arith.constant 5.000000e-01 : f32
    %37 = vector.broadcast %cst_20 : f32 to vector<8x32xf32>
    %38 = arith.mulf %37, %36 : vector<8x32xf32>
    %39 = arith.mulf %28, %8 : vector<8x32xf32>
    %40 = arith.mulf %20, %30 : vector<8x32xf32>
    %41 = arith.addf %39, %40 : vector<8x32xf32>
    %42 = math.tanh %41 : vector<8x32xf32>
    %43 = arith.mulf %38, %42 : vector<8x32xf32>
    %c0_21 = arith.constant 0 : index
    %c0_22 = arith.constant 0 : index
    %44 = vector.load %arg14[%c0_21, %c0_22] : memref<64x32xf32, #tpu.memory_space<vmem>>, vector<8x32xf32>
    tpu.vector_store %arg14[%c0_21, %c0_22], %43 {strides = array<i32>} : memref<64x32xf32, #tpu.memory_space<vmem>>, vector<8x32xf32>,
    %c56 = arith.constant 56 : index
    %c0_23 = arith.constant 0 : index
    %45 = vector.load %arg15[%c56, %c0_23] : memref<64x32xf32, #tpu.memory_space<vmem>>, vector<8x32xf32>
    tpu.vector_store %arg15[%c56, %c0_23], %43 {strides = array<i32>} : memref<64x32xf32, #tpu.memory_space<vmem>>, vector<8x32xf32>,
    %46 = vector.extract_strided_slice %5 {offsets = [8, 0], sizes = [8, 128], strides = [1, 1]} : vector<64x128xf32> to vector<8x128xf32>
    %47 = arith.truncf %43 : vector<8x32xf32> to vector<8x32xbf16>
    %cst_24 = arith.constant dense<0.000000e+00> : vector<8x128xf32>
    %48 = tpu.matmul %47, %6, %cst_24 {dimension_numbers = #tpu.dot_dimension_numbers<[1], [0], [0], [1], [0, 0, 1, 1], [], []>} : vector<8x32xbf16>, vector<32x128xbf16>, vector<8x128xf32> -> vector<8x128xf32>
    %49 = arith.addf %46, %48 : vector<8x128xf32>
    %50 = vector.extract_strided_slice %49 {offsets = [0, 0], sizes = [8, 32], strides = [1, 1]} : vector<8x128xf32> to vector<8x32xf32>
    %cst_25 = arith.constant 5.000000e-01 : f32
    %51 = vector.broadcast %cst_25 : f32 to vector<8x32xf32>
    %52 = arith.mulf %51, %50 : vector<8x32xf32>
    %53 = math.tanh %52 : vector<8x32xf32>
    %cst_26 = arith.constant 1.000000e+00 : f32
    %54 = vector.broadcast %cst_26 : f32 to vector<8x32xf32>
    %55 = arith.addf %53, %54 : vector<8x32xf32>
    %cst_27 = arith.constant 5.000000e-01 : f32
    %56 = vector.broadcast %cst_27 : f32 to vector<8x32xf32>
    %57 = arith.mulf %56, %55 : vector<8x32xf32>
    %58 = vector.extract_strided_slice %49 {offsets = [0, 32], sizes = [8, 32], strides = [1, 1]} : vector<8x128xf32> to vector<8x32xf32>
    %cst_28 = arith.constant 5.000000e-01 : f32
    %59 = vector.broadcast %cst_28 : f32 to vector<8x32xf32>
    %60 = arith.mulf %59, %58 : vector<8x32xf32>
    %61 = math.tanh %60 : vector<8x32xf32>
    %cst_29 = arith.constant 1.000000e+00 : f32
    %62 = vector.broadcast %cst_29 : f32 to vector<8x32xf32>
    %63 = arith.addf %61, %62 : vector<8x32xf32>
    %cst_30 = arith.constant 5.000000e-01 : f32
    %64 = vector.broadcast %cst_30 : f32 to vector<8x32xf32>
    %65 = arith.mulf %64, %63 : vector<8x32xf32>
    %66 = vector.extract_strided_slice %49 {offsets = [0, 64], sizes = [8, 32], strides = [1, 1]} : vector<8x128xf32> to vector<8x32xf32>
    %67 = math.tanh %66 : vector<8x32xf32>
    %68 = vector.extract_strided_slice %49 {offsets = [0, 96], sizes = [8, 32], strides = [1, 1]} : vector<8x128xf32> to vector<8x32xf32>
    %cst_31 = arith.constant 5.000000e-01 : f32
    %69 = vector.broadcast %cst_31 : f32 to vector<8x32xf32>
    %70 = arith.mulf %69, %68 : vector<8x32xf32>
    %71 = math.tanh %70 : vector<8x32xf32>
    %cst_32 = arith.constant 1.000000e+00 : f32
    %72 = vector.broadcast %cst_32 : f32 to vector<8x32xf32>
    %73 = arith.addf %71, %72 : vector<8x32xf32>
    %cst_33 = arith.constant 5.000000e-01 : f32
    %74 = vector.broadcast %cst_33 : f32 to vector<8x32xf32>
    %75 = arith.mulf %74, %73 : vector<8x32xf32>
    %76 = arith.mulf %65, %41 : vector<8x32xf32>
    %77 = arith.mulf %57, %67 : vector<8x32xf32>
    %78 = arith.addf %76, %77 : vector<8x32xf32>
    %79 = math.tanh %78 : vector<8x32xf32>
    %80 = arith.mulf %75, %79 : vector<8x32xf32>
    %c8 = arith.constant 8 : index
    %c0_34 = arith.constant 0 : index
    %81 = vector.load %arg14[%c8, %c0_34] : memref<64x32xf32, #tpu.memory_space<vmem>>, vector<8x32xf32>
    tpu.vector_store %arg14[%c8, %c0_34], %80 {strides = array<i32>} : memref<64x32xf32, #tpu.memory_space<vmem>>, vector<8x32xf32>,
    %c48 = arith.constant 48 : index
    %c0_35 = arith.constant 0 : index
    %82 = vector.load %arg15[%c48, %c0_35] : memref<64x32xf32, #tpu.memory_space<vmem>>, vector<8x32xf32>
    tpu.vector_store %arg15[%c48, %c0_35], %80 {strides = array<i32>} : memref<64x32xf32, #tpu.memory_space<vmem>>, vector<8x32xf32>,
    %83 = vector.extract_strided_slice %5 {offsets = [16, 0], sizes = [8, 128], strides = [1, 1]} : vector<64x128xf32> to vector<8x128xf32>
    %84 = arith.truncf %80 : vector<8x32xf32> to vector<8x32xbf16>
    %cst_36 = arith.constant dense<0.000000e+00> : vector<8x128xf32>
    %85 = tpu.matmul %84, %6, %cst_36 {dimension_numbers = #tpu.dot_dimension_numbers<[1], [0], [0], [1], [0, 0, 1, 1], [], []>} : vector<8x32xbf16>, vector<32x128xbf16>, vector<8x128xf32> -> vector<8x128xf32>
    %86 = arith.addf %83, %85 : vector<8x128xf32>
    %87 = vector.extract_strided_slice %86 {offsets = [0, 0], sizes = [8, 32], strides = [1, 1]} : vector<8x128xf32> to vector<8x32xf32>
    %cst_37 = arith.constant 5.000000e-01 : f32
    %88 = vector.broadcast %cst_37 : f32 to vector<8x32xf32>
    %89 = arith.mulf %88, %87 : vector<8x32xf32>
    %90 = math.tanh %89 : vector<8x32xf32>
    %cst_38 = arith.constant 1.000000e+00 : f32
    %91 = vector.broadcast %cst_38 : f32 to vector<8x32xf32>
    %92 = arith.addf %90, %91 : vector<8x32xf32>
    %cst_39 = arith.constant 5.000000e-01 : f32
    %93 = vector.broadcast %cst_39 : f32 to vector<8x32xf32>
    %94 = arith.mulf %93, %92 : vector<8x32xf32>
    %95 = vector.extract_strided_slice %86 {offsets = [0, 32], sizes = [8, 32], strides = [1, 1]} : vector<8x128xf32> to vector<8x32xf32>
    %cst_40 = arith.constant 5.000000e-01 : f32
    %96 = vector.broadcast %cst_40 : f32 to vector<8x32xf32>
    %97 = arith.mulf %96, %95 : vector<8x32xf32>
    %98 = math.tanh %97 : vector<8x32xf32>
    %cst_41 = arith.constant 1.000000e+00 : f32
    %99 = vector.broadcast %cst_41 : f32 to vector<8x32xf32>
    %100 = arith.addf %98, %99 : vector<8x32xf32>
    %cst_42 = arith.constant 5.000000e-01 : f32
    %101 = vector.broadcast %cst_42 : f32 to vector<8x32xf32>
    %102 = arith.mulf %101, %100 : vector<8x32xf32>
    %103 = vector.extract_strided_slice %86 {offsets = [0, 64], sizes = [8, 32], strides = [1, 1]} : vector<8x128xf32> to vector<8x32xf32>
    %104 = math.tanh %103 : vector<8x32xf32>
    %105 = vector.extract_strided_slice %86 {offsets = [0, 96], sizes = [8, 32], strides = [1, 1]} : vector<8x128xf32> to vector<8x32xf32>
    %cst_43 = arith.constant 5.000000e-01 : f32
    %106 = vector.broadcast %cst_43 : f32 to vector<8x32xf32>
    %107 = arith.mulf %106, %105 : vector<8x32xf32>
    %108 = math.tanh %107 : vector<8x32xf32>
    %cst_44 = arith.constant 1.000000e+00 : f32
    %109 = vector.broadcast %cst_44 : f32 to vector<8x32xf32>
    %110 = arith.addf %108, %109 : vector<8x32xf32>
    %cst_45 = arith.constant 5.000000e-01 : f32
    %111 = vector.broadcast %cst_45 : f32 to vector<8x32xf32>
    %112 = arith.mulf %111, %110 : vector<8x32xf32>
    %113 = arith.mulf %102, %78 : vector<8x32xf32>
    %114 = arith.mulf %94, %104 : vector<8x32xf32>
    %115 = arith.addf %113, %114 : vector<8x32xf32>
    %116 = math.tanh %115 : vector<8x32xf32>
    %117 = arith.mulf %112, %116 : vector<8x32xf32>
    %c16 = arith.constant 16 : index
    %c0_46 = arith.constant 0 : index
    %118 = vector.load %arg14[%c16, %c0_46] : memref<64x32xf32, #tpu.memory_space<vmem>>, vector<8x32xf32>
    tpu.vector_store %arg14[%c16, %c0_46], %117 {strides = array<i32>} : memref<64x32xf32, #tpu.memory_space<vmem>>, vector<8x32xf32>,
    %c40 = arith.constant 40 : index
    %c0_47 = arith.constant 0 : index
    %119 = vector.load %arg15[%c40, %c0_47] : memref<64x32xf32, #tpu.memory_space<vmem>>, vector<8x32xf32>
    tpu.vector_store %arg15[%c40, %c0_47], %117 {strides = array<i32>} : memref<64x32xf32, #tpu.memory_space<vmem>>, vector<8x32xf32>,
    %120 = vector.extract_strided_slice %5 {offsets = [24, 0], sizes = [8, 128], strides = [1, 1]} : vector<64x128xf32> to vector<8x128xf32>
    %121 = arith.truncf %117 : vector<8x32xf32> to vector<8x32xbf16>
    %cst_48 = arith.constant dense<0.000000e+00> : vector<8x128xf32>
    %122 = tpu.matmul %121, %6, %cst_48 {dimension_numbers = #tpu.dot_dimension_numbers<[1], [0], [0], [1], [0, 0, 1, 1], [], []>} : vector<8x32xbf16>, vector<32x128xbf16>, vector<8x128xf32> -> vector<8x128xf32>
    %123 = arith.addf %120, %122 : vector<8x128xf32>
    %124 = vector.extract_strided_slice %123 {offsets = [0, 0], sizes = [8, 32], strides = [1, 1]} : vector<8x128xf32> to vector<8x32xf32>
    %cst_49 = arith.constant 5.000000e-01 : f32
    %125 = vector.broadcast %cst_49 : f32 to vector<8x32xf32>
    %126 = arith.mulf %125, %124 : vector<8x32xf32>
    %127 = math.tanh %126 : vector<8x32xf32>
    %cst_50 = arith.constant 1.000000e+00 : f32
    %128 = vector.broadcast %cst_50 : f32 to vector<8x32xf32>
    %129 = arith.addf %127, %128 : vector<8x32xf32>
    %cst_51 = arith.constant 5.000000e-01 : f32
    %130 = vector.broadcast %cst_51 : f32 to vector<8x32xf32>
    %131 = arith.mulf %130, %129 : vector<8x32xf32>
    %132 = vector.extract_strided_slice %123 {offsets = [0, 32], sizes = [8, 32], strides = [1, 1]} : vector<8x128xf32> to vector<8x32xf32>
    %cst_52 = arith.constant 5.000000e-01 : f32
    %133 = vector.broadcast %cst_52 : f32 to vector<8x32xf32>
    %134 = arith.mulf %133, %132 : vector<8x32xf32>
    %135 = math.tanh %134 : vector<8x32xf32>
    %cst_53 = arith.constant 1.000000e+00 : f32
    %136 = vector.broadcast %cst_53 : f32 to vector<8x32xf32>
    %137 = arith.addf %135, %136 : vector<8x32xf32>
    %cst_54 = arith.constant 5.000000e-01 : f32
    %138 = vector.broadcast %cst_54 : f32 to vector<8x32xf32>
    %139 = arith.mulf %138, %137 : vector<8x32xf32>
    %140 = vector.extract_strided_slice %123 {offsets = [0, 64], sizes = [8, 32], strides = [1, 1]} : vector<8x128xf32> to vector<8x32xf32>
    %141 = math.tanh %140 : vector<8x32xf32>
    %142 = vector.extract_strided_slice %123 {offsets = [0, 96], sizes = [8, 32], strides = [1, 1]} : vector<8x128xf32> to vector<8x32xf32>
    %cst_55 = arith.constant 5.000000e-01 : f32
    %143 = vector.broadcast %cst_55 : f32 to vector<8x32xf32>
    %144 = arith.mulf %143, %142 : vector<8x32xf32>
    %145 = math.tanh %144 : vector<8x32xf32>
    %cst_56 = arith.constant 1.000000e+00 : f32
    %146 = vector.broadcast %cst_56 : f32 to vector<8x32xf32>
    %147 = arith.addf %145, %146 : vector<8x32xf32>
    %cst_57 = arith.constant 5.000000e-01 : f32
    %148 = vector.broadcast %cst_57 : f32 to vector<8x32xf32>
    %149 = arith.mulf %148, %147 : vector<8x32xf32>
    %150 = arith.mulf %139, %115 : vector<8x32xf32>
    %151 = arith.mulf %131, %141 : vector<8x32xf32>
    %152 = arith.addf %150, %151 : vector<8x32xf32>
    %153 = math.tanh %152 : vector<8x32xf32>
    %154 = arith.mulf %149, %153 : vector<8x32xf32>
    %c24 = arith.constant 24 : index
    %c0_58 = arith.constant 0 : index
    %155 = vector.load %arg14[%c24, %c0_58] : memref<64x32xf32, #tpu.memory_space<vmem>>, vector<8x32xf32>
    tpu.vector_store %arg14[%c24, %c0_58], %154 {strides = array<i32>} : memref<64x32xf32, #tpu.memory_space<vmem>>, vector<8x32xf32>,
    %c32 = arith.constant 32 : index
    %c0_59 = arith.constant 0 : index
    %156 = vector.load %arg15[%c32, %c0_59] : memref<64x32xf32, #tpu.memory_space<vmem>>, vector<8x32xf32>
    tpu.vector_store %arg15[%c32, %c0_59], %154 {strides = array<i32>} : memref<64x32xf32, #tpu.memory_space<vmem>>, vector<8x32xf32>,
    %157 = vector.extract_strided_slice %5 {offsets = [32, 0], sizes = [8, 128], strides = [1, 1]} : vector<64x128xf32> to vector<8x128xf32>
    %158 = arith.truncf %154 : vector<8x32xf32> to vector<8x32xbf16>
    %cst_60 = arith.constant dense<0.000000e+00> : vector<8x128xf32>
    %159 = tpu.matmul %158, %6, %cst_60 {dimension_numbers = #tpu.dot_dimension_numbers<[1], [0], [0], [1], [0, 0, 1, 1], [], []>} : vector<8x32xbf16>, vector<32x128xbf16>, vector<8x128xf32> -> vector<8x128xf32>
    %160 = arith.addf %157, %159 : vector<8x128xf32>
    %161 = vector.extract_strided_slice %160 {offsets = [0, 0], sizes = [8, 32], strides = [1, 1]} : vector<8x128xf32> to vector<8x32xf32>
    %cst_61 = arith.constant 5.000000e-01 : f32
    %162 = vector.broadcast %cst_61 : f32 to vector<8x32xf32>
    %163 = arith.mulf %162, %161 : vector<8x32xf32>
    %164 = math.tanh %163 : vector<8x32xf32>
    %cst_62 = arith.constant 1.000000e+00 : f32
    %165 = vector.broadcast %cst_62 : f32 to vector<8x32xf32>
    %166 = arith.addf %164, %165 : vector<8x32xf32>
    %cst_63 = arith.constant 5.000000e-01 : f32
    %167 = vector.broadcast %cst_63 : f32 to vector<8x32xf32>
    %168 = arith.mulf %167, %166 : vector<8x32xf32>
    %169 = vector.extract_strided_slice %160 {offsets = [0, 32], sizes = [8, 32], strides = [1, 1]} : vector<8x128xf32> to vector<8x32xf32>
    %cst_64 = arith.constant 5.000000e-01 : f32
    %170 = vector.broadcast %cst_64 : f32 to vector<8x32xf32>
    %171 = arith.mulf %170, %169 : vector<8x32xf32>
    %172 = math.tanh %171 : vector<8x32xf32>
    %cst_65 = arith.constant 1.000000e+00 : f32
    %173 = vector.broadcast %cst_65 : f32 to vector<8x32xf32>
    %174 = arith.addf %172, %173 : vector<8x32xf32>
    %cst_66 = arith.constant 5.000000e-01 : f32
    %175 = vector.broadcast %cst_66 : f32 to vector<8x32xf32>
    %176 = arith.mulf %175, %174 : vector<8x32xf32>
    %177 = vector.extract_strided_slice %160 {offsets = [0, 64], sizes = [8, 32], strides = [1, 1]} : vector<8x128xf32> to vector<8x32xf32>
    %178 = math.tanh %177 : vector<8x32xf32>
    %179 = vector.extract_strided_slice %160 {offsets = [0, 96], sizes = [8, 32], strides = [1, 1]} : vector<8x128xf32> to vector<8x32xf32>
    %cst_67 = arith.constant 5.000000e-01 : f32
    %180 = vector.broadcast %cst_67 : f32 to vector<8x32xf32>
    %181 = arith.mulf %180, %179 : vector<8x32xf32>
    %182 = math.tanh %181 : vector<8x32xf32>
    %cst_68 = arith.constant 1.000000e+00 : f32
    %183 = vector.broadcast %cst_68 : f32 to vector<8x32xf32>
    %184 = arith.addf %182, %183 : vector<8x32xf32>
    %cst_69 = arith.constant 5.000000e-01 : f32
    %185 = vector.broadcast %cst_69 : f32 to vector<8x32xf32>
    %186 = arith.mulf %185, %184 : vector<8x32xf32>
    %187 = arith.mulf %176, %152 : vector<8x32xf32>
    %188 = arith.mulf %168, %178 : vector<8x32xf32>
    %189 = arith.addf %187, %188 : vector<8x32xf32>
    %190 = math.tanh %189 : vector<8x32xf32>
    %191 = arith.mulf %186, %190 : vector<8x32xf32>
    %c32_70 = arith.constant 32 : index
    %c0_71 = arith.constant 0 : index
    %192 = vector.load %arg14[%c32_70, %c0_71] : memref<64x32xf32, #tpu.memory_space<vmem>>, vector<8x32xf32>
    tpu.vector_store %arg14[%c32_70, %c0_71], %191 {strides = array<i32>} : memref<64x32xf32, #tpu.memory_space<vmem>>, vector<8x32xf32>,
    %c24_72 = arith.constant 24 : index
    %c0_73 = arith.constant 0 : index
    %193 = vector.load %arg15[%c24_72, %c0_73] : memref<64x32xf32, #tpu.memory_space<vmem>>, vector<8x32xf32>
    tpu.vector_store %arg15[%c24_72, %c0_73], %191 {strides = array<i32>} : memref<64x32xf32, #tpu.memory_space<vmem>>, vector<8x32xf32>,
    %194 = vector.extract_strided_slice %5 {offsets = [40, 0], sizes = [8, 128], strides = [1, 1]} : vector<64x128xf32> to vector<8x128xf32>
    %195 = arith.truncf %191 : vector<8x32xf32> to vector<8x32xbf16>
    %cst_74 = arith.constant dense<0.000000e+00> : vector<8x128xf32>
    %196 = tpu.matmul %195, %6, %cst_74 {dimension_numbers = #tpu.dot_dimension_numbers<[1], [0], [0], [1], [0, 0, 1, 1], [], []>} : vector<8x32xbf16>, vector<32x128xbf16>, vector<8x128xf32> -> vector<8x128xf32>
    %197 = arith.addf %194, %196 : vector<8x128xf32>
    %198 = vector.extract_strided_slice %197 {offsets = [0, 0], sizes = [8, 32], strides = [1, 1]} : vector<8x128xf32> to vector<8x32xf32>
    %cst_75 = arith.constant 5.000000e-01 : f32
    %199 = vector.broadcast %cst_75 : f32 to vector<8x32xf32>
    %200 = arith.mulf %199, %198 : vector<8x32xf32>
    %201 = math.tanh %200 : vector<8x32xf32>
    %cst_76 = arith.constant 1.000000e+00 : f32
    %202 = vector.broadcast %cst_76 : f32 to vector<8x32xf32>
    %203 = arith.addf %201, %202 : vector<8x32xf32>
    %cst_77 = arith.constant 5.000000e-01 : f32
    %204 = vector.broadcast %cst_77 : f32 to vector<8x32xf32>
    %205 = arith.mulf %204, %203 : vector<8x32xf32>
    %206 = vector.extract_strided_slice %197 {offsets = [0, 32], sizes = [8, 32], strides = [1, 1]} : vector<8x128xf32> to vector<8x32xf32>
    %cst_78 = arith.constant 5.000000e-01 : f32
    %207 = vector.broadcast %cst_78 : f32 to vector<8x32xf32>
    %208 = arith.mulf %207, %206 : vector<8x32xf32>
    %209 = math.tanh %208 : vector<8x32xf32>
    %cst_79 = arith.constant 1.000000e+00 : f32
    %210 = vector.broadcast %cst_79 : f32 to vector<8x32xf32>
    %211 = arith.addf %209, %210 : vector<8x32xf32>
    %cst_80 = arith.constant 5.000000e-01 : f32
    %212 = vector.broadcast %cst_80 : f32 to vector<8x32xf32>
    %213 = arith.mulf %212, %211 : vector<8x32xf32>
    %214 = vector.extract_strided_slice %197 {offsets = [0, 64], sizes = [8, 32], strides = [1, 1]} : vector<8x128xf32> to vector<8x32xf32>
    %215 = math.tanh %214 : vector<8x32xf32>
    %216 = vector.extract_strided_slice %197 {offsets = [0, 96], sizes = [8, 32], strides = [1, 1]} : vector<8x128xf32> to vector<8x32xf32>
    %cst_81 = arith.constant 5.000000e-01 : f32
    %217 = vector.broadcast %cst_81 : f32 to vector<8x32xf32>
    %218 = arith.mulf %217, %216 : vector<8x32xf32>
    %219 = math.tanh %218 : vector<8x32xf32>
    %cst_82 = arith.constant 1.000000e+00 : f32
    %220 = vector.broadcast %cst_82 : f32 to vector<8x32xf32>
    %221 = arith.addf %219, %220 : vector<8x32xf32>
    %cst_83 = arith.constant 5.000000e-01 : f32
    %222 = vector.broadcast %cst_83 : f32 to vector<8x32xf32>
    %223 = arith.mulf %222, %221 : vector<8x32xf32>
    %224 = arith.mulf %213, %189 : vector<8x32xf32>
    %225 = arith.mulf %205, %215 : vector<8x32xf32>
    %226 = arith.addf %224, %225 : vector<8x32xf32>
    %227 = math.tanh %226 : vector<8x32xf32>
    %228 = arith.mulf %223, %227 : vector<8x32xf32>
    %c40_84 = arith.constant 40 : index
    %c0_85 = arith.constant 0 : index
    %229 = vector.load %arg14[%c40_84, %c0_85] : memref<64x32xf32, #tpu.memory_space<vmem>>, vector<8x32xf32>
    tpu.vector_store %arg14[%c40_84, %c0_85], %228 {strides = array<i32>} : memref<64x32xf32, #tpu.memory_space<vmem>>, vector<8x32xf32>,
    %c16_86 = arith.constant 16 : index
    %c0_87 = arith.constant 0 : index
    %230 = vector.load %arg15[%c16_86, %c0_87] : memref<64x32xf32, #tpu.memory_space<vmem>>, vector<8x32xf32>
    tpu.vector_store %arg15[%c16_86, %c0_87], %228 {strides = array<i32>} : memref<64x32xf32, #tpu.memory_space<vmem>>, vector<8x32xf32>,
    %231 = vector.extract_strided_slice %5 {offsets = [48, 0], sizes = [8, 128], strides = [1, 1]} : vector<64x128xf32> to vector<8x128xf32>
    %232 = arith.truncf %228 : vector<8x32xf32> to vector<8x32xbf16>
    %cst_88 = arith.constant dense<0.000000e+00> : vector<8x128xf32>
    %233 = tpu.matmul %232, %6, %cst_88 {dimension_numbers = #tpu.dot_dimension_numbers<[1], [0], [0], [1], [0, 0, 1, 1], [], []>} : vector<8x32xbf16>, vector<32x128xbf16>, vector<8x128xf32> -> vector<8x128xf32>
    %234 = arith.addf %231, %233 : vector<8x128xf32>
    %235 = vector.extract_strided_slice %234 {offsets = [0, 0], sizes = [8, 32], strides = [1, 1]} : vector<8x128xf32> to vector<8x32xf32>
    %cst_89 = arith.constant 5.000000e-01 : f32
    %236 = vector.broadcast %cst_89 : f32 to vector<8x32xf32>
    %237 = arith.mulf %236, %235 : vector<8x32xf32>
    %238 = math.tanh %237 : vector<8x32xf32>
    %cst_90 = arith.constant 1.000000e+00 : f32
    %239 = vector.broadcast %cst_90 : f32 to vector<8x32xf32>
    %240 = arith.addf %238, %239 : vector<8x32xf32>
    %cst_91 = arith.constant 5.000000e-01 : f32
    %241 = vector.broadcast %cst_91 : f32 to vector<8x32xf32>
    %242 = arith.mulf %241, %240 : vector<8x32xf32>
    %243 = vector.extract_strided_slice %234 {offsets = [0, 32], sizes = [8, 32], strides = [1, 1]} : vector<8x128xf32> to vector<8x32xf32>
    %cst_92 = arith.constant 5.000000e-01 : f32
    %244 = vector.broadcast %cst_92 : f32 to vector<8x32xf32>
    %245 = arith.mulf %244, %243 : vector<8x32xf32>
    %246 = math.tanh %245 : vector<8x32xf32>
    %cst_93 = arith.constant 1.000000e+00 : f32
    %247 = vector.broadcast %cst_93 : f32 to vector<8x32xf32>
    %248 = arith.addf %246, %247 : vector<8x32xf32>
    %cst_94 = arith.constant 5.000000e-01 : f32
    %249 = vector.broadcast %cst_94 : f32 to vector<8x32xf32>
    %250 = arith.mulf %249, %248 : vector<8x32xf32>
    %251 = vector.extract_strided_slice %234 {offsets = [0, 64], sizes = [8, 32], strides = [1, 1]} : vector<8x128xf32> to vector<8x32xf32>
    %252 = math.tanh %251 : vector<8x32xf32>
    %253 = vector.extract_strided_slice %234 {offsets = [0, 96], sizes = [8, 32], strides = [1, 1]} : vector<8x128xf32> to vector<8x32xf32>
    %cst_95 = arith.constant 5.000000e-01 : f32
    %254 = vector.broadcast %cst_95 : f32 to vector<8x32xf32>
    %255 = arith.mulf %254, %253 : vector<8x32xf32>
    %256 = math.tanh %255 : vector<8x32xf32>
    %cst_96 = arith.constant 1.000000e+00 : f32
    %257 = vector.broadcast %cst_96 : f32 to vector<8x32xf32>
    %258 = arith.addf %256, %257 : vector<8x32xf32>
    %cst_97 = arith.constant 5.000000e-01 : f32
    %259 = vector.broadcast %cst_97 : f32 to vector<8x32xf32>
    %260 = arith.mulf %259, %258 : vector<8x32xf32>
    %261 = arith.mulf %250, %226 : vector<8x32xf32>
    %262 = arith.mulf %242, %252 : vector<8x32xf32>
    %263 = arith.addf %261, %262 : vector<8x32xf32>
    %264 = math.tanh %263 : vector<8x32xf32>
    %265 = arith.mulf %260, %264 : vector<8x32xf32>
    %c48_98 = arith.constant 48 : index
    %c0_99 = arith.constant 0 : index
    %266 = vector.load %arg14[%c48_98, %c0_99] : memref<64x32xf32, #tpu.memory_space<vmem>>, vector<8x32xf32>
    tpu.vector_store %arg14[%c48_98, %c0_99], %265 {strides = array<i32>} : memref<64x32xf32, #tpu.memory_space<vmem>>, vector<8x32xf32>,
    %c8_100 = arith.constant 8 : index
    %c0_101 = arith.constant 0 : index
    %267 = vector.load %arg15[%c8_100, %c0_101] : memref<64x32xf32, #tpu.memory_space<vmem>>, vector<8x32xf32>
    tpu.vector_store %arg15[%c8_100, %c0_101], %265 {strides = array<i32>} : memref<64x32xf32, #tpu.memory_space<vmem>>, vector<8x32xf32>,
    %268 = vector.extract_strided_slice %5 {offsets = [56, 0], sizes = [8, 128], strides = [1, 1]} : vector<64x128xf32> to vector<8x128xf32>
    %269 = arith.truncf %265 : vector<8x32xf32> to vector<8x32xbf16>
    %cst_102 = arith.constant dense<0.000000e+00> : vector<8x128xf32>
    %270 = tpu.matmul %269, %6, %cst_102 {dimension_numbers = #tpu.dot_dimension_numbers<[1], [0], [0], [1], [0, 0, 1, 1], [], []>} : vector<8x32xbf16>, vector<32x128xbf16>, vector<8x128xf32> -> vector<8x128xf32>
    %271 = arith.addf %268, %270 : vector<8x128xf32>
    %272 = vector.extract_strided_slice %271 {offsets = [0, 0], sizes = [8, 32], strides = [1, 1]} : vector<8x128xf32> to vector<8x32xf32>
    %cst_103 = arith.constant 5.000000e-01 : f32
    %273 = vector.broadcast %cst_103 : f32 to vector<8x32xf32>
    %274 = arith.mulf %273, %272 : vector<8x32xf32>
    %275 = math.tanh %274 : vector<8x32xf32>
    %cst_104 = arith.constant 1.000000e+00 : f32
    %276 = vector.broadcast %cst_104 : f32 to vector<8x32xf32>
    %277 = arith.addf %275, %276 : vector<8x32xf32>
    %cst_105 = arith.constant 5.000000e-01 : f32
    %278 = vector.broadcast %cst_105 : f32 to vector<8x32xf32>
    %279 = arith.mulf %278, %277 : vector<8x32xf32>
    %280 = vector.extract_strided_slice %271 {offsets = [0, 32], sizes = [8, 32], strides = [1, 1]} : vector<8x128xf32> to vector<8x32xf32>
    %cst_106 = arith.constant 5.000000e-01 : f32
    %281 = vector.broadcast %cst_106 : f32 to vector<8x32xf32>
    %282 = arith.mulf %281, %280 : vector<8x32xf32>
    %283 = math.tanh %282 : vector<8x32xf32>
    %cst_107 = arith.constant 1.000000e+00 : f32
    %284 = vector.broadcast %cst_107 : f32 to vector<8x32xf32>
    %285 = arith.addf %283, %284 : vector<8x32xf32>
    %cst_108 = arith.constant 5.000000e-01 : f32
    %286 = vector.broadcast %cst_108 : f32 to vector<8x32xf32>
    %287 = arith.mulf %286, %285 : vector<8x32xf32>
    %288 = vector.extract_strided_slice %271 {offsets = [0, 64], sizes = [8, 32], strides = [1, 1]} : vector<8x128xf32> to vector<8x32xf32>
    %289 = math.tanh %288 : vector<8x32xf32>
    %290 = vector.extract_strided_slice %271 {offsets = [0, 96], sizes = [8, 32], strides = [1, 1]} : vector<8x128xf32> to vector<8x32xf32>
    %cst_109 = arith.constant 5.000000e-01 : f32
    %291 = vector.broadcast %cst_109 : f32 to vector<8x32xf32>
    %292 = arith.mulf %291, %290 : vector<8x32xf32>
    %293 = math.tanh %292 : vector<8x32xf32>
    %cst_110 = arith.constant 1.000000e+00 : f32
    %294 = vector.broadcast %cst_110 : f32 to vector<8x32xf32>
    %295 = arith.addf %293, %294 : vector<8x32xf32>
    %cst_111 = arith.constant 5.000000e-01 : f32
    %296 = vector.broadcast %cst_111 : f32 to vector<8x32xf32>
    %297 = arith.mulf %296, %295 : vector<8x32xf32>
    %298 = arith.mulf %287, %263 : vector<8x32xf32>
    %299 = arith.mulf %279, %289 : vector<8x32xf32>
    %300 = arith.addf %298, %299 : vector<8x32xf32>
    %301 = math.tanh %300 : vector<8x32xf32>
    %302 = arith.mulf %297, %301 : vector<8x32xf32>
    %c56_112 = arith.constant 56 : index
    %c0_113 = arith.constant 0 : index
    %303 = vector.load %arg14[%c56_112, %c0_113] : memref<64x32xf32, #tpu.memory_space<vmem>>, vector<8x32xf32>
    tpu.vector_store %arg14[%c56_112, %c0_113], %302 {strides = array<i32>} : memref<64x32xf32, #tpu.memory_space<vmem>>, vector<8x32xf32>,
    %c0_114 = arith.constant 0 : index
    %c0_115 = arith.constant 0 : index
    %304 = vector.load %arg15[%c0_114, %c0_115] : memref<64x32xf32, #tpu.memory_space<vmem>>, vector<8x32xf32>
    tpu.vector_store %arg15[%c0_114, %c0_115], %302 {strides = array<i32>} : memref<64x32xf32, #tpu.memory_space<vmem>>, vector<8x32xf32>,
    %c0_116 = arith.constant 0 : index
    %c0_117 = arith.constant 0 : index
    %305 = vector.load %arg14[%c0_116, %c0_117] : memref<64x32xf32, #tpu.memory_space<vmem>>, vector<64x32xf32>
    %c0_118 = arith.constant 0 : index
    %c0_119 = arith.constant 0 : index
    %306 = vector.load %arg7[%c0_118, %c0_119] : memref<32x5xf32, #tpu.memory_space<vmem>>, vector<32x5xf32>
    %cst_120 = arith.constant dense<0.000000e+00> : vector<64x5xf32>
    %307 = tpu.matmul %305, %306, %cst_120 {dimension_numbers = #tpu.dot_dimension_numbers<[1], [0], [0], [1], [0, 0, 1, 1], [], []>} : vector<64x32xf32>, vector<32x5xf32>, vector<64x5xf32> -> vector<64x5xf32>
    %c0_121 = arith.constant 0 : index
    %c0_122 = arith.constant 0 : index
    %308 = vector.load %arg15[%c0_121, %c0_122] : memref<64x32xf32, #tpu.memory_space<vmem>>, vector<64x32xf32>
    %c0_123 = arith.constant 0 : index
    %c0_124 = arith.constant 0 : index
    %309 = vector.load %arg8[%c0_123, %c0_124] : memref<32x5xf32, #tpu.memory_space<vmem>>, vector<32x5xf32>
    %cst_125 = arith.constant dense<0.000000e+00> : vector<64x5xf32>
    %310 = tpu.matmul %308, %309, %cst_125 {dimension_numbers = #tpu.dot_dimension_numbers<[1], [0], [0], [1], [0, 0, 1, 1], [], []>} : vector<64x32xf32>, vector<32x5xf32>, vector<64x5xf32> -> vector<64x5xf32>
    %311 = arith.addf %307, %310 : vector<64x5xf32>
    %c0_126 = arith.constant 0 : index
    %c0_127 = arith.constant 0 : index
    %312 = vector.load %arg9[%c0_126, %c0_127] : memref<1x5xf32, #tpu.memory_space<vmem>>, vector<1x5xf32>
    %313 = vector.broadcast %312 : vector<1x5xf32> to vector<64x5xf32>
    %314 = arith.addf %311, %313 : vector<64x5xf32>
    %c0_128 = arith.constant 0 : index
    %c0_129 = arith.constant 0 : index
    %315 = vector.load %arg12[%c0_128, %c0_129] : memref<64x5xf32, #tpu.memory_space<vmem>>, vector<64x5xf32>
    tpu.vector_store %arg12[%c0_128, %c0_129], %314 {strides = array<i32>} : memref<64x5xf32, #tpu.memory_space<vmem>>, vector<64x5xf32>,
    %c0_130 = arith.constant 0 : index
    %c0_131 = arith.constant 0 : index
    %316 = vector.load %arg10[%c0_130, %c0_131] : memref<5x5xf32, #tpu.memory_space<vmem>>, vector<5x5xf32>
    %317 = tpu.iota {dimensions = array<i32: 1>} : vector<8x5xi32>
    %c3_i32 = arith.constant 3 : i32
    %318 = vector.broadcast %c3_i32 : i32 to vector<8x5xi32>
    %319 = arith.cmpi eq, %317, %318 : vector<8x5xi32>
    %cst_132 = arith.constant 0.000000e+00 : f32
    %cst_133 = arith.constant -1.000000e+04 : f32
    %320 = vector.broadcast %cst_132 : f32 to vector<8x5xf32>
    %321 = vector.broadcast %cst_133 : f32 to vector<8x5xf32>
    %322 = arith.select %319, %320, %321 : vector<8x5xi1>, vector<8x5xf32>
    %323 = vector.extract_strided_slice %322 {offsets = [0, 0], sizes = [8, 1], strides = [1, 1]} : vector<8x5xf32> to vector<8x1xf32>
    %324 = vector.extract_strided_slice %316 {offsets = [0, 0], sizes = [1, 5], strides = [1, 1]} : vector<5x5xf32> to vector<1x5xf32>
    %325 = vector.broadcast %323 : vector<8x1xf32> to vector<8x5xf32>
    %326 = vector.broadcast %324 : vector<1x5xf32> to vector<8x5xf32>
    %327 = arith.addf %325, %326 : vector<8x5xf32>
    %328 = vector.extract_strided_slice %322 {offsets = [0, 1], sizes = [8, 1], strides = [1, 1]} : vector<8x5xf32> to vector<8x1xf32>
    %329 = vector.extract_strided_slice %316 {offsets = [1, 0], sizes = [1, 5], strides = [1, 1]} : vector<5x5xf32> to vector<1x5xf32>
    %330 = vector.broadcast %328 : vector<8x1xf32> to vector<8x5xf32>
    %331 = vector.broadcast %329 : vector<1x5xf32> to vector<8x5xf32>
    %332 = arith.addf %330, %331 : vector<8x5xf32>
    %333 = vector.extract_strided_slice %322 {offsets = [0, 2], sizes = [8, 1], strides = [1, 1]} : vector<8x5xf32> to vector<8x1xf32>
    %334 = vector.extract_strided_slice %316 {offsets = [2, 0], sizes = [1, 5], strides = [1, 1]} : vector<5x5xf32> to vector<1x5xf32>
    %335 = vector.broadcast %333 : vector<8x1xf32> to vector<8x5xf32>
    %336 = vector.broadcast %334 : vector<1x5xf32> to vector<8x5xf32>
    %337 = arith.addf %335, %336 : vector<8x5xf32>
    %338 = vector.extract_strided_slice %322 {offsets = [0, 3], sizes = [8, 1], strides = [1, 1]} : vector<8x5xf32> to vector<8x1xf32>
    %339 = vector.extract_strided_slice %316 {offsets = [3, 0], sizes = [1, 5], strides = [1, 1]} : vector<5x5xf32> to vector<1x5xf32>
    %340 = vector.broadcast %338 : vector<8x1xf32> to vector<8x5xf32>
    %341 = vector.broadcast %339 : vector<1x5xf32> to vector<8x5xf32>
    %342 = arith.addf %340, %341 : vector<8x5xf32>
    %343 = vector.extract_strided_slice %322 {offsets = [0, 4], sizes = [8, 1], strides = [1, 1]} : vector<8x5xf32> to vector<8x1xf32>
    %344 = vector.extract_strided_slice %316 {offsets = [4, 0], sizes = [1, 5], strides = [1, 1]} : vector<5x5xf32> to vector<1x5xf32>
    %345 = vector.broadcast %343 : vector<8x1xf32> to vector<8x5xf32>
    %346 = vector.broadcast %344 : vector<1x5xf32> to vector<8x5xf32>
    %347 = arith.addf %345, %346 : vector<8x5xf32>
    %348 = arith.maximumf %327, %332 : vector<8x5xf32>
    %349 = arith.maximumf %348, %337 : vector<8x5xf32>
    %350 = arith.maximumf %349, %342 : vector<8x5xf32>
    %351 = arith.maximumf %350, %347 : vector<8x5xf32>
    %352 = vector.extract_strided_slice %314 {offsets = [0, 0], sizes = [8, 5], strides = [1, 1]} : vector<64x5xf32> to vector<8x5xf32>
    %353 = arith.addf %351, %352 : vector<8x5xf32>
    %354 = vector.extract_strided_slice %353 {offsets = [0, 0], sizes = [8, 1], strides = [1, 1]} : vector<8x5xf32> to vector<8x1xf32>
    %355 = vector.extract_strided_slice %316 {offsets = [0, 0], sizes = [1, 5], strides = [1, 1]} : vector<5x5xf32> to vector<1x5xf32>
    %356 = vector.broadcast %354 : vector<8x1xf32> to vector<8x5xf32>
    %357 = vector.broadcast %355 : vector<1x5xf32> to vector<8x5xf32>
    %358 = arith.addf %356, %357 : vector<8x5xf32>
    %359 = vector.extract_strided_slice %353 {offsets = [0, 1], sizes = [8, 1], strides = [1, 1]} : vector<8x5xf32> to vector<8x1xf32>
    %360 = vector.extract_strided_slice %316 {offsets = [1, 0], sizes = [1, 5], strides = [1, 1]} : vector<5x5xf32> to vector<1x5xf32>
    %361 = vector.broadcast %359 : vector<8x1xf32> to vector<8x5xf32>
    %362 = vector.broadcast %360 : vector<1x5xf32> to vector<8x5xf32>
    %363 = arith.addf %361, %362 : vector<8x5xf32>
    %364 = vector.extract_strided_slice %353 {offsets = [0, 2], sizes = [8, 1], strides = [1, 1]} : vector<8x5xf32> to vector<8x1xf32>
    %365 = vector.extract_strided_slice %316 {offsets = [2, 0], sizes = [1, 5], strides = [1, 1]} : vector<5x5xf32> to vector<1x5xf32>
    %366 = vector.broadcast %364 : vector<8x1xf32> to vector<8x5xf32>
    %367 = vector.broadcast %365 : vector<1x5xf32> to vector<8x5xf32>
    %368 = arith.addf %366, %367 : vector<8x5xf32>
    %369 = vector.extract_strided_slice %353 {offsets = [0, 3], sizes = [8, 1], strides = [1, 1]} : vector<8x5xf32> to vector<8x1xf32>
    %370 = vector.extract_strided_slice %316 {offsets = [3, 0], sizes = [1, 5], strides = [1, 1]} : vector<5x5xf32> to vector<1x5xf32>
    %371 = vector.broadcast %369 : vector<8x1xf32> to vector<8x5xf32>
    %372 = vector.broadcast %370 : vector<1x5xf32> to vector<8x5xf32>
    %373 = arith.addf %371, %372 : vector<8x5xf32>
    %374 = vector.extract_strided_slice %353 {offsets = [0, 4], sizes = [8, 1], strides = [1, 1]} : vector<8x5xf32> to vector<8x1xf32>
    %375 = vector.extract_strided_slice %316 {offsets = [4, 0], sizes = [1, 5], strides = [1, 1]} : vector<5x5xf32> to vector<1x5xf32>
    %376 = vector.broadcast %374 : vector<8x1xf32> to vector<8x5xf32>
    %377 = vector.broadcast %375 : vector<1x5xf32> to vector<8x5xf32>
    %378 = arith.addf %376, %377 : vector<8x5xf32>
    %379 = arith.maximumf %358, %363 : vector<8x5xf32>
    %380 = arith.maximumf %379, %368 : vector<8x5xf32>
    %381 = arith.maximumf %380, %373 : vector<8x5xf32>
    %382 = arith.maximumf %381, %378 : vector<8x5xf32>
    %c5_i32 = arith.constant 5 : i32
    %383 = vector.broadcast %c5_i32 : i32 to vector<8x5xi32>
    %384 = arith.cmpf oeq, %378, %382 : vector<8x5xf32>
    %c4_i32 = arith.constant 4 : i32
    %385 = vector.broadcast %c4_i32 : i32 to vector<8x5xi32>
    %386 = arith.select %384, %385, %383 : vector<8x5xi1>, vector<8x5xi32>
    %387 = arith.cmpf oeq, %373, %382 : vector<8x5xf32>
    %c3_i32_134 = arith.constant 3 : i32
    %388 = vector.broadcast %c3_i32_134 : i32 to vector<8x5xi32>
    %389 = arith.select %387, %388, %386 : vector<8x5xi1>, vector<8x5xi32>
    %390 = arith.cmpf oeq, %368, %382 : vector<8x5xf32>
    %c2_i32 = arith.constant 2 : i32
    %391 = vector.broadcast %c2_i32 : i32 to vector<8x5xi32>
    %392 = arith.select %390, %391, %389 : vector<8x5xi1>, vector<8x5xi32>
    %393 = arith.cmpf oeq, %363, %382 : vector<8x5xf32>
    %c1_i32 = arith.constant 1 : i32
    %394 = vector.broadcast %c1_i32 : i32 to vector<8x5xi32>
    %395 = arith.select %393, %394, %392 : vector<8x5xi1>, vector<8x5xi32>
    %396 = arith.cmpf oeq, %358, %382 : vector<8x5xf32>
    %c0_i32 = arith.constant 0 : i32
    %397 = vector.broadcast %c0_i32 : i32 to vector<8x5xi32>
    %398 = arith.select %396, %397, %395 : vector<8x5xi1>, vector<8x5xi32>
    %399 = vector.extract_strided_slice %314 {offsets = [8, 0], sizes = [8, 5], strides = [1, 1]} : vector<64x5xf32> to vector<8x5xf32>
    %400 = arith.addf %382, %399 : vector<8x5xf32>
    %401 = vector.extract_strided_slice %400 {offsets = [0, 0], sizes = [8, 1], strides = [1, 1]} : vector<8x5xf32> to vector<8x1xf32>
    %402 = vector.extract_strided_slice %316 {offsets = [0, 0], sizes = [1, 5], strides = [1, 1]} : vector<5x5xf32> to vector<1x5xf32>
    %403 = vector.broadcast %401 : vector<8x1xf32> to vector<8x5xf32>
    %404 = vector.broadcast %402 : vector<1x5xf32> to vector<8x5xf32>
    %405 = arith.addf %403, %404 : vector<8x5xf32>
    %406 = vector.extract_strided_slice %400 {offsets = [0, 1], sizes = [8, 1], strides = [1, 1]} : vector<8x5xf32> to vector<8x1xf32>
    %407 = vector.extract_strided_slice %316 {offsets = [1, 0], sizes = [1, 5], strides = [1, 1]} : vector<5x5xf32> to vector<1x5xf32>
    %408 = vector.broadcast %406 : vector<8x1xf32> to vector<8x5xf32>
    %409 = vector.broadcast %407 : vector<1x5xf32> to vector<8x5xf32>
    %410 = arith.addf %408, %409 : vector<8x5xf32>
    %411 = vector.extract_strided_slice %400 {offsets = [0, 2], sizes = [8, 1], strides = [1, 1]} : vector<8x5xf32> to vector<8x1xf32>
    %412 = vector.extract_strided_slice %316 {offsets = [2, 0], sizes = [1, 5], strides = [1, 1]} : vector<5x5xf32> to vector<1x5xf32>
    %413 = vector.broadcast %411 : vector<8x1xf32> to vector<8x5xf32>
    %414 = vector.broadcast %412 : vector<1x5xf32> to vector<8x5xf32>
    %415 = arith.addf %413, %414 : vector<8x5xf32>
    %416 = vector.extract_strided_slice %400 {offsets = [0, 3], sizes = [8, 1], strides = [1, 1]} : vector<8x5xf32> to vector<8x1xf32>
    %417 = vector.extract_strided_slice %316 {offsets = [3, 0], sizes = [1, 5], strides = [1, 1]} : vector<5x5xf32> to vector<1x5xf32>
    %418 = vector.broadcast %416 : vector<8x1xf32> to vector<8x5xf32>
    %419 = vector.broadcast %417 : vector<1x5xf32> to vector<8x5xf32>
    %420 = arith.addf %418, %419 : vector<8x5xf32>
    %421 = vector.extract_strided_slice %400 {offsets = [0, 4], sizes = [8, 1], strides = [1, 1]} : vector<8x5xf32> to vector<8x1xf32>
    %422 = vector.extract_strided_slice %316 {offsets = [4, 0], sizes = [1, 5], strides = [1, 1]} : vector<5x5xf32> to vector<1x5xf32>
    %423 = vector.broadcast %421 : vector<8x1xf32> to vector<8x5xf32>
    %424 = vector.broadcast %422 : vector<1x5xf32> to vector<8x5xf32>
    %425 = arith.addf %423, %424 : vector<8x5xf32>
    %426 = arith.maximumf %405, %410 : vector<8x5xf32>
    %427 = arith.maximumf %426, %415 : vector<8x5xf32>
    %428 = arith.maximumf %427, %420 : vector<8x5xf32>
    %429 = arith.maximumf %428, %425 : vector<8x5xf32>
    %c5_i32_135 = arith.constant 5 : i32
    %430 = vector.broadcast %c5_i32_135 : i32 to vector<8x5xi32>
    %431 = arith.cmpf oeq, %425, %429 : vector<8x5xf32>
    %c4_i32_136 = arith.constant 4 : i32
    %432 = vector.broadcast %c4_i32_136 : i32 to vector<8x5xi32>
    %433 = arith.select %431, %432, %430 : vector<8x5xi1>, vector<8x5xi32>
    %434 = arith.cmpf oeq, %420, %429 : vector<8x5xf32>
    %c3_i32_137 = arith.constant 3 : i32
    %435 = vector.broadcast %c3_i32_137 : i32 to vector<8x5xi32>
    %436 = arith.select %434, %435, %433 : vector<8x5xi1>, vector<8x5xi32>
    %437 = arith.cmpf oeq, %415, %429 : vector<8x5xf32>
    %c2_i32_138 = arith.constant 2 : i32
    %438 = vector.broadcast %c2_i32_138 : i32 to vector<8x5xi32>
    %439 = arith.select %437, %438, %436 : vector<8x5xi1>, vector<8x5xi32>
    %440 = arith.cmpf oeq, %410, %429 : vector<8x5xf32>
    %c1_i32_139 = arith.constant 1 : i32
    %441 = vector.broadcast %c1_i32_139 : i32 to vector<8x5xi32>
    %442 = arith.select %440, %441, %439 : vector<8x5xi1>, vector<8x5xi32>
    %443 = arith.cmpf oeq, %405, %429 : vector<8x5xf32>
    %c0_i32_140 = arith.constant 0 : i32
    %444 = vector.broadcast %c0_i32_140 : i32 to vector<8x5xi32>
    %445 = arith.select %443, %444, %442 : vector<8x5xi1>, vector<8x5xi32>
    %446 = vector.extract_strided_slice %314 {offsets = [16, 0], sizes = [8, 5], strides = [1, 1]} : vector<64x5xf32> to vector<8x5xf32>
    %447 = arith.addf %429, %446 : vector<8x5xf32>
    %448 = vector.extract_strided_slice %447 {offsets = [0, 0], sizes = [8, 1], strides = [1, 1]} : vector<8x5xf32> to vector<8x1xf32>
    %449 = vector.extract_strided_slice %316 {offsets = [0, 0], sizes = [1, 5], strides = [1, 1]} : vector<5x5xf32> to vector<1x5xf32>
    %450 = vector.broadcast %448 : vector<8x1xf32> to vector<8x5xf32>
    %451 = vector.broadcast %449 : vector<1x5xf32> to vector<8x5xf32>
    %452 = arith.addf %450, %451 : vector<8x5xf32>
    %453 = vector.extract_strided_slice %447 {offsets = [0, 1], sizes = [8, 1], strides = [1, 1]} : vector<8x5xf32> to vector<8x1xf32>
    %454 = vector.extract_strided_slice %316 {offsets = [1, 0], sizes = [1, 5], strides = [1, 1]} : vector<5x5xf32> to vector<1x5xf32>
    %455 = vector.broadcast %453 : vector<8x1xf32> to vector<8x5xf32>
    %456 = vector.broadcast %454 : vector<1x5xf32> to vector<8x5xf32>
    %457 = arith.addf %455, %456 : vector<8x5xf32>
    %458 = vector.extract_strided_slice %447 {offsets = [0, 2], sizes = [8, 1], strides = [1, 1]} : vector<8x5xf32> to vector<8x1xf32>
    %459 = vector.extract_strided_slice %316 {offsets = [2, 0], sizes = [1, 5], strides = [1, 1]} : vector<5x5xf32> to vector<1x5xf32>
    %460 = vector.broadcast %458 : vector<8x1xf32> to vector<8x5xf32>
    %461 = vector.broadcast %459 : vector<1x5xf32> to vector<8x5xf32>
    %462 = arith.addf %460, %461 : vector<8x5xf32>
    %463 = vector.extract_strided_slice %447 {offsets = [0, 3], sizes = [8, 1], strides = [1, 1]} : vector<8x5xf32> to vector<8x1xf32>
    %464 = vector.extract_strided_slice %316 {offsets = [3, 0], sizes = [1, 5], strides = [1, 1]} : vector<5x5xf32> to vector<1x5xf32>
    %465 = vector.broadcast %463 : vector<8x1xf32> to vector<8x5xf32>
    %466 = vector.broadcast %464 : vector<1x5xf32> to vector<8x5xf32>
    %467 = arith.addf %465, %466 : vector<8x5xf32>
    %468 = vector.extract_strided_slice %447 {offsets = [0, 4], sizes = [8, 1], strides = [1, 1]} : vector<8x5xf32> to vector<8x1xf32>
    %469 = vector.extract_strided_slice %316 {offsets = [4, 0], sizes = [1, 5], strides = [1, 1]} : vector<5x5xf32> to vector<1x5xf32>
    %470 = vector.broadcast %468 : vector<8x1xf32> to vector<8x5xf32>
    %471 = vector.broadcast %469 : vector<1x5xf32> to vector<8x5xf32>
    %472 = arith.addf %470, %471 : vector<8x5xf32>
    %473 = arith.maximumf %452, %457 : vector<8x5xf32>
    %474 = arith.maximumf %473, %462 : vector<8x5xf32>
    %475 = arith.maximumf %474, %467 : vector<8x5xf32>
    %476 = arith.maximumf %475, %472 : vector<8x5xf32>
    %c5_i32_141 = arith.constant 5 : i32
    %477 = vector.broadcast %c5_i32_141 : i32 to vector<8x5xi32>
    %478 = arith.cmpf oeq, %472, %476 : vector<8x5xf32>
    %c4_i32_142 = arith.constant 4 : i32
    %479 = vector.broadcast %c4_i32_142 : i32 to vector<8x5xi32>
    %480 = arith.select %478, %479, %477 : vector<8x5xi1>, vector<8x5xi32>
    %481 = arith.cmpf oeq, %467, %476 : vector<8x5xf32>
    %c3_i32_143 = arith.constant 3 : i32
    %482 = vector.broadcast %c3_i32_143 : i32 to vector<8x5xi32>
    %483 = arith.select %481, %482, %480 : vector<8x5xi1>, vector<8x5xi32>
    %484 = arith.cmpf oeq, %462, %476 : vector<8x5xf32>
    %c2_i32_144 = arith.constant 2 : i32
    %485 = vector.broadcast %c2_i32_144 : i32 to vector<8x5xi32>
    %486 = arith.select %484, %485, %483 : vector<8x5xi1>, vector<8x5xi32>
    %487 = arith.cmpf oeq, %457, %476 : vector<8x5xf32>
    %c1_i32_145 = arith.constant 1 : i32
    %488 = vector.broadcast %c1_i32_145 : i32 to vector<8x5xi32>
    %489 = arith.select %487, %488, %486 : vector<8x5xi1>, vector<8x5xi32>
    %490 = arith.cmpf oeq, %452, %476 : vector<8x5xf32>
    %c0_i32_146 = arith.constant 0 : i32
    %491 = vector.broadcast %c0_i32_146 : i32 to vector<8x5xi32>
    %492 = arith.select %490, %491, %489 : vector<8x5xi1>, vector<8x5xi32>
    %493 = vector.extract_strided_slice %314 {offsets = [24, 0], sizes = [8, 5], strides = [1, 1]} : vector<64x5xf32> to vector<8x5xf32>
    %494 = arith.addf %476, %493 : vector<8x5xf32>
    %495 = vector.extract_strided_slice %494 {offsets = [0, 0], sizes = [8, 1], strides = [1, 1]} : vector<8x5xf32> to vector<8x1xf32>
    %496 = vector.extract_strided_slice %316 {offsets = [0, 0], sizes = [1, 5], strides = [1, 1]} : vector<5x5xf32> to vector<1x5xf32>
    %497 = vector.broadcast %495 : vector<8x1xf32> to vector<8x5xf32>
    %498 = vector.broadcast %496 : vector<1x5xf32> to vector<8x5xf32>
    %499 = arith.addf %497, %498 : vector<8x5xf32>
    %500 = vector.extract_strided_slice %494 {offsets = [0, 1], sizes = [8, 1], strides = [1, 1]} : vector<8x5xf32> to vector<8x1xf32>
    %501 = vector.extract_strided_slice %316 {offsets = [1, 0], sizes = [1, 5], strides = [1, 1]} : vector<5x5xf32> to vector<1x5xf32>
    %502 = vector.broadcast %500 : vector<8x1xf32> to vector<8x5xf32>
    %503 = vector.broadcast %501 : vector<1x5xf32> to vector<8x5xf32>
    %504 = arith.addf %502, %503 : vector<8x5xf32>
    %505 = vector.extract_strided_slice %494 {offsets = [0, 2], sizes = [8, 1], strides = [1, 1]} : vector<8x5xf32> to vector<8x1xf32>
    %506 = vector.extract_strided_slice %316 {offsets = [2, 0], sizes = [1, 5], strides = [1, 1]} : vector<5x5xf32> to vector<1x5xf32>
    %507 = vector.broadcast %505 : vector<8x1xf32> to vector<8x5xf32>
    %508 = vector.broadcast %506 : vector<1x5xf32> to vector<8x5xf32>
    %509 = arith.addf %507, %508 : vector<8x5xf32>
    %510 = vector.extract_strided_slice %494 {offsets = [0, 3], sizes = [8, 1], strides = [1, 1]} : vector<8x5xf32> to vector<8x1xf32>
    %511 = vector.extract_strided_slice %316 {offsets = [3, 0], sizes = [1, 5], strides = [1, 1]} : vector<5x5xf32> to vector<1x5xf32>
    %512 = vector.broadcast %510 : vector<8x1xf32> to vector<8x5xf32>
    %513 = vector.broadcast %511 : vector<1x5xf32> to vector<8x5xf32>
    %514 = arith.addf %512, %513 : vector<8x5xf32>
    %515 = vector.extract_strided_slice %494 {offsets = [0, 4], sizes = [8, 1], strides = [1, 1]} : vector<8x5xf32> to vector<8x1xf32>
    %516 = vector.extract_strided_slice %316 {offsets = [4, 0], sizes = [1, 5], strides = [1, 1]} : vector<5x5xf32> to vector<1x5xf32>
    %517 = vector.broadcast %515 : vector<8x1xf32> to vector<8x5xf32>
    %518 = vector.broadcast %516 : vector<1x5xf32> to vector<8x5xf32>
    %519 = arith.addf %517, %518 : vector<8x5xf32>
    %520 = arith.maximumf %499, %504 : vector<8x5xf32>
    %521 = arith.maximumf %520, %509 : vector<8x5xf32>
    %522 = arith.maximumf %521, %514 : vector<8x5xf32>
    %523 = arith.maximumf %522, %519 : vector<8x5xf32>
    %c5_i32_147 = arith.constant 5 : i32
    %524 = vector.broadcast %c5_i32_147 : i32 to vector<8x5xi32>
    %525 = arith.cmpf oeq, %519, %523 : vector<8x5xf32>
    %c4_i32_148 = arith.constant 4 : i32
    %526 = vector.broadcast %c4_i32_148 : i32 to vector<8x5xi32>
    %527 = arith.select %525, %526, %524 : vector<8x5xi1>, vector<8x5xi32>
    %528 = arith.cmpf oeq, %514, %523 : vector<8x5xf32>
    %c3_i32_149 = arith.constant 3 : i32
    %529 = vector.broadcast %c3_i32_149 : i32 to vector<8x5xi32>
    %530 = arith.select %528, %529, %527 : vector<8x5xi1>, vector<8x5xi32>
    %531 = arith.cmpf oeq, %509, %523 : vector<8x5xf32>
    %c2_i32_150 = arith.constant 2 : i32
    %532 = vector.broadcast %c2_i32_150 : i32 to vector<8x5xi32>
    %533 = arith.select %531, %532, %530 : vector<8x5xi1>, vector<8x5xi32>
    %534 = arith.cmpf oeq, %504, %523 : vector<8x5xf32>
    %c1_i32_151 = arith.constant 1 : i32
    %535 = vector.broadcast %c1_i32_151 : i32 to vector<8x5xi32>
    %536 = arith.select %534, %535, %533 : vector<8x5xi1>, vector<8x5xi32>
    %537 = arith.cmpf oeq, %499, %523 : vector<8x5xf32>
    %c0_i32_152 = arith.constant 0 : i32
    %538 = vector.broadcast %c0_i32_152 : i32 to vector<8x5xi32>
    %539 = arith.select %537, %538, %536 : vector<8x5xi1>, vector<8x5xi32>
    %540 = vector.extract_strided_slice %314 {offsets = [32, 0], sizes = [8, 5], strides = [1, 1]} : vector<64x5xf32> to vector<8x5xf32>
    %541 = arith.addf %523, %540 : vector<8x5xf32>
    %542 = vector.extract_strided_slice %541 {offsets = [0, 0], sizes = [8, 1], strides = [1, 1]} : vector<8x5xf32> to vector<8x1xf32>
    %543 = vector.extract_strided_slice %316 {offsets = [0, 0], sizes = [1, 5], strides = [1, 1]} : vector<5x5xf32> to vector<1x5xf32>
    %544 = vector.broadcast %542 : vector<8x1xf32> to vector<8x5xf32>
    %545 = vector.broadcast %543 : vector<1x5xf32> to vector<8x5xf32>
    %546 = arith.addf %544, %545 : vector<8x5xf32>
    %547 = vector.extract_strided_slice %541 {offsets = [0, 1], sizes = [8, 1], strides = [1, 1]} : vector<8x5xf32> to vector<8x1xf32>
    %548 = vector.extract_strided_slice %316 {offsets = [1, 0], sizes = [1, 5], strides = [1, 1]} : vector<5x5xf32> to vector<1x5xf32>
    %549 = vector.broadcast %547 : vector<8x1xf32> to vector<8x5xf32>
    %550 = vector.broadcast %548 : vector<1x5xf32> to vector<8x5xf32>
    %551 = arith.addf %549, %550 : vector<8x5xf32>
    %552 = vector.extract_strided_slice %541 {offsets = [0, 2], sizes = [8, 1], strides = [1, 1]} : vector<8x5xf32> to vector<8x1xf32>
    %553 = vector.extract_strided_slice %316 {offsets = [2, 0], sizes = [1, 5], strides = [1, 1]} : vector<5x5xf32> to vector<1x5xf32>
    %554 = vector.broadcast %552 : vector<8x1xf32> to vector<8x5xf32>
    %555 = vector.broadcast %553 : vector<1x5xf32> to vector<8x5xf32>
    %556 = arith.addf %554, %555 : vector<8x5xf32>
    %557 = vector.extract_strided_slice %541 {offsets = [0, 3], sizes = [8, 1], strides = [1, 1]} : vector<8x5xf32> to vector<8x1xf32>
    %558 = vector.extract_strided_slice %316 {offsets = [3, 0], sizes = [1, 5], strides = [1, 1]} : vector<5x5xf32> to vector<1x5xf32>
    %559 = vector.broadcast %557 : vector<8x1xf32> to vector<8x5xf32>
    %560 = vector.broadcast %558 : vector<1x5xf32> to vector<8x5xf32>
    %561 = arith.addf %559, %560 : vector<8x5xf32>
    %562 = vector.extract_strided_slice %541 {offsets = [0, 4], sizes = [8, 1], strides = [1, 1]} : vector<8x5xf32> to vector<8x1xf32>
    %563 = vector.extract_strided_slice %316 {offsets = [4, 0], sizes = [1, 5], strides = [1, 1]} : vector<5x5xf32> to vector<1x5xf32>
    %564 = vector.broadcast %562 : vector<8x1xf32> to vector<8x5xf32>
    %565 = vector.broadcast %563 : vector<1x5xf32> to vector<8x5xf32>
    %566 = arith.addf %564, %565 : vector<8x5xf32>
    %567 = arith.maximumf %546, %551 : vector<8x5xf32>
    %568 = arith.maximumf %567, %556 : vector<8x5xf32>
    %569 = arith.maximumf %568, %561 : vector<8x5xf32>
    %570 = arith.maximumf %569, %566 : vector<8x5xf32>
    %c5_i32_153 = arith.constant 5 : i32
    %571 = vector.broadcast %c5_i32_153 : i32 to vector<8x5xi32>
    %572 = arith.cmpf oeq, %566, %570 : vector<8x5xf32>
    %c4_i32_154 = arith.constant 4 : i32
    %573 = vector.broadcast %c4_i32_154 : i32 to vector<8x5xi32>
    %574 = arith.select %572, %573, %571 : vector<8x5xi1>, vector<8x5xi32>
    %575 = arith.cmpf oeq, %561, %570 : vector<8x5xf32>
    %c3_i32_155 = arith.constant 3 : i32
    %576 = vector.broadcast %c3_i32_155 : i32 to vector<8x5xi32>
    %577 = arith.select %575, %576, %574 : vector<8x5xi1>, vector<8x5xi32>
    %578 = arith.cmpf oeq, %556, %570 : vector<8x5xf32>
    %c2_i32_156 = arith.constant 2 : i32
    %579 = vector.broadcast %c2_i32_156 : i32 to vector<8x5xi32>
    %580 = arith.select %578, %579, %577 : vector<8x5xi1>, vector<8x5xi32>
    %581 = arith.cmpf oeq, %551, %570 : vector<8x5xf32>
    %c1_i32_157 = arith.constant 1 : i32
    %582 = vector.broadcast %c1_i32_157 : i32 to vector<8x5xi32>
    %583 = arith.select %581, %582, %580 : vector<8x5xi1>, vector<8x5xi32>
    %584 = arith.cmpf oeq, %546, %570 : vector<8x5xf32>
    %c0_i32_158 = arith.constant 0 : i32
    %585 = vector.broadcast %c0_i32_158 : i32 to vector<8x5xi32>
    %586 = arith.select %584, %585, %583 : vector<8x5xi1>, vector<8x5xi32>
    %587 = vector.extract_strided_slice %314 {offsets = [40, 0], sizes = [8, 5], strides = [1, 1]} : vector<64x5xf32> to vector<8x5xf32>
    %588 = arith.addf %570, %587 : vector<8x5xf32>
    %589 = vector.extract_strided_slice %588 {offsets = [0, 0], sizes = [8, 1], strides = [1, 1]} : vector<8x5xf32> to vector<8x1xf32>
    %590 = vector.extract_strided_slice %316 {offsets = [0, 0], sizes = [1, 5], strides = [1, 1]} : vector<5x5xf32> to vector<1x5xf32>
    %591 = vector.broadcast %589 : vector<8x1xf32> to vector<8x5xf32>
    %592 = vector.broadcast %590 : vector<1x5xf32> to vector<8x5xf32>
    %593 = arith.addf %591, %592 : vector<8x5xf32>
    %594 = vector.extract_strided_slice %588 {offsets = [0, 1], sizes = [8, 1], strides = [1, 1]} : vector<8x5xf32> to vector<8x1xf32>
    %595 = vector.extract_strided_slice %316 {offsets = [1, 0], sizes = [1, 5], strides = [1, 1]} : vector<5x5xf32> to vector<1x5xf32>
    %596 = vector.broadcast %594 : vector<8x1xf32> to vector<8x5xf32>
    %597 = vector.broadcast %595 : vector<1x5xf32> to vector<8x5xf32>
    %598 = arith.addf %596, %597 : vector<8x5xf32>
    %599 = vector.extract_strided_slice %588 {offsets = [0, 2], sizes = [8, 1], strides = [1, 1]} : vector<8x5xf32> to vector<8x1xf32>
    %600 = vector.extract_strided_slice %316 {offsets = [2, 0], sizes = [1, 5], strides = [1, 1]} : vector<5x5xf32> to vector<1x5xf32>
    %601 = vector.broadcast %599 : vector<8x1xf32> to vector<8x5xf32>
    %602 = vector.broadcast %600 : vector<1x5xf32> to vector<8x5xf32>
    %603 = arith.addf %601, %602 : vector<8x5xf32>
    %604 = vector.extract_strided_slice %588 {offsets = [0, 3], sizes = [8, 1], strides = [1, 1]} : vector<8x5xf32> to vector<8x1xf32>
    %605 = vector.extract_strided_slice %316 {offsets = [3, 0], sizes = [1, 5], strides = [1, 1]} : vector<5x5xf32> to vector<1x5xf32>
    %606 = vector.broadcast %604 : vector<8x1xf32> to vector<8x5xf32>
    %607 = vector.broadcast %605 : vector<1x5xf32> to vector<8x5xf32>
    %608 = arith.addf %606, %607 : vector<8x5xf32>
    %609 = vector.extract_strided_slice %588 {offsets = [0, 4], sizes = [8, 1], strides = [1, 1]} : vector<8x5xf32> to vector<8x1xf32>
    %610 = vector.extract_strided_slice %316 {offsets = [4, 0], sizes = [1, 5], strides = [1, 1]} : vector<5x5xf32> to vector<1x5xf32>
    %611 = vector.broadcast %609 : vector<8x1xf32> to vector<8x5xf32>
    %612 = vector.broadcast %610 : vector<1x5xf32> to vector<8x5xf32>
    %613 = arith.addf %611, %612 : vector<8x5xf32>
    %614 = arith.maximumf %593, %598 : vector<8x5xf32>
    %615 = arith.maximumf %614, %603 : vector<8x5xf32>
    %616 = arith.maximumf %615, %608 : vector<8x5xf32>
    %617 = arith.maximumf %616, %613 : vector<8x5xf32>
    %c5_i32_159 = arith.constant 5 : i32
    %618 = vector.broadcast %c5_i32_159 : i32 to vector<8x5xi32>
    %619 = arith.cmpf oeq, %613, %617 : vector<8x5xf32>
    %c4_i32_160 = arith.constant 4 : i32
    %620 = vector.broadcast %c4_i32_160 : i32 to vector<8x5xi32>
    %621 = arith.select %619, %620, %618 : vector<8x5xi1>, vector<8x5xi32>
    %622 = arith.cmpf oeq, %608, %617 : vector<8x5xf32>
    %c3_i32_161 = arith.constant 3 : i32
    %623 = vector.broadcast %c3_i32_161 : i32 to vector<8x5xi32>
    %624 = arith.select %622, %623, %621 : vector<8x5xi1>, vector<8x5xi32>
    %625 = arith.cmpf oeq, %603, %617 : vector<8x5xf32>
    %c2_i32_162 = arith.constant 2 : i32
    %626 = vector.broadcast %c2_i32_162 : i32 to vector<8x5xi32>
    %627 = arith.select %625, %626, %624 : vector<8x5xi1>, vector<8x5xi32>
    %628 = arith.cmpf oeq, %598, %617 : vector<8x5xf32>
    %c1_i32_163 = arith.constant 1 : i32
    %629 = vector.broadcast %c1_i32_163 : i32 to vector<8x5xi32>
    %630 = arith.select %628, %629, %627 : vector<8x5xi1>, vector<8x5xi32>
    %631 = arith.cmpf oeq, %593, %617 : vector<8x5xf32>
    %c0_i32_164 = arith.constant 0 : i32
    %632 = vector.broadcast %c0_i32_164 : i32 to vector<8x5xi32>
    %633 = arith.select %631, %632, %630 : vector<8x5xi1>, vector<8x5xi32>
    %634 = vector.extract_strided_slice %314 {offsets = [48, 0], sizes = [8, 5], strides = [1, 1]} : vector<64x5xf32> to vector<8x5xf32>
    %635 = arith.addf %617, %634 : vector<8x5xf32>
    %636 = vector.extract_strided_slice %635 {offsets = [0, 0], sizes = [8, 1], strides = [1, 1]} : vector<8x5xf32> to vector<8x1xf32>
    %637 = vector.extract_strided_slice %316 {offsets = [0, 0], sizes = [1, 5], strides = [1, 1]} : vector<5x5xf32> to vector<1x5xf32>
    %638 = vector.broadcast %636 : vector<8x1xf32> to vector<8x5xf32>
    %639 = vector.broadcast %637 : vector<1x5xf32> to vector<8x5xf32>
    %640 = arith.addf %638, %639 : vector<8x5xf32>
    %641 = vector.extract_strided_slice %635 {offsets = [0, 1], sizes = [8, 1], strides = [1, 1]} : vector<8x5xf32> to vector<8x1xf32>
    %642 = vector.extract_strided_slice %316 {offsets = [1, 0], sizes = [1, 5], strides = [1, 1]} : vector<5x5xf32> to vector<1x5xf32>
    %643 = vector.broadcast %641 : vector<8x1xf32> to vector<8x5xf32>
    %644 = vector.broadcast %642 : vector<1x5xf32> to vector<8x5xf32>
    %645 = arith.addf %643, %644 : vector<8x5xf32>
    %646 = vector.extract_strided_slice %635 {offsets = [0, 2], sizes = [8, 1], strides = [1, 1]} : vector<8x5xf32> to vector<8x1xf32>
    %647 = vector.extract_strided_slice %316 {offsets = [2, 0], sizes = [1, 5], strides = [1, 1]} : vector<5x5xf32> to vector<1x5xf32>
    %648 = vector.broadcast %646 : vector<8x1xf32> to vector<8x5xf32>
    %649 = vector.broadcast %647 : vector<1x5xf32> to vector<8x5xf32>
    %650 = arith.addf %648, %649 : vector<8x5xf32>
    %651 = vector.extract_strided_slice %635 {offsets = [0, 3], sizes = [8, 1], strides = [1, 1]} : vector<8x5xf32> to vector<8x1xf32>
    %652 = vector.extract_strided_slice %316 {offsets = [3, 0], sizes = [1, 5], strides = [1, 1]} : vector<5x5xf32> to vector<1x5xf32>
    %653 = vector.broadcast %651 : vector<8x1xf32> to vector<8x5xf32>
    %654 = vector.broadcast %652 : vector<1x5xf32> to vector<8x5xf32>
    %655 = arith.addf %653, %654 : vector<8x5xf32>
    %656 = vector.extract_strided_slice %635 {offsets = [0, 4], sizes = [8, 1], strides = [1, 1]} : vector<8x5xf32> to vector<8x1xf32>
    %657 = vector.extract_strided_slice %316 {offsets = [4, 0], sizes = [1, 5], strides = [1, 1]} : vector<5x5xf32> to vector<1x5xf32>
    %658 = vector.broadcast %656 : vector<8x1xf32> to vector<8x5xf32>
    %659 = vector.broadcast %657 : vector<1x5xf32> to vector<8x5xf32>
    %660 = arith.addf %658, %659 : vector<8x5xf32>
    %661 = arith.maximumf %640, %645 : vector<8x5xf32>
    %662 = arith.maximumf %661, %650 : vector<8x5xf32>
    %663 = arith.maximumf %662, %655 : vector<8x5xf32>
    %664 = arith.maximumf %663, %660 : vector<8x5xf32>
    %c5_i32_165 = arith.constant 5 : i32
    %665 = vector.broadcast %c5_i32_165 : i32 to vector<8x5xi32>
    %666 = arith.cmpf oeq, %660, %664 : vector<8x5xf32>
    %c4_i32_166 = arith.constant 4 : i32
    %667 = vector.broadcast %c4_i32_166 : i32 to vector<8x5xi32>
    %668 = arith.select %666, %667, %665 : vector<8x5xi1>, vector<8x5xi32>
    %669 = arith.cmpf oeq, %655, %664 : vector<8x5xf32>
    %c3_i32_167 = arith.constant 3 : i32
    %670 = vector.broadcast %c3_i32_167 : i32 to vector<8x5xi32>
    %671 = arith.select %669, %670, %668 : vector<8x5xi1>, vector<8x5xi32>
    %672 = arith.cmpf oeq, %650, %664 : vector<8x5xf32>
    %c2_i32_168 = arith.constant 2 : i32
    %673 = vector.broadcast %c2_i32_168 : i32 to vector<8x5xi32>
    %674 = arith.select %672, %673, %671 : vector<8x5xi1>, vector<8x5xi32>
    %675 = arith.cmpf oeq, %645, %664 : vector<8x5xf32>
    %c1_i32_169 = arith.constant 1 : i32
    %676 = vector.broadcast %c1_i32_169 : i32 to vector<8x5xi32>
    %677 = arith.select %675, %676, %674 : vector<8x5xi1>, vector<8x5xi32>
    %678 = arith.cmpf oeq, %640, %664 : vector<8x5xf32>
    %c0_i32_170 = arith.constant 0 : i32
    %679 = vector.broadcast %c0_i32_170 : i32 to vector<8x5xi32>
    %680 = arith.select %678, %679, %677 : vector<8x5xi1>, vector<8x5xi32>
    %681 = vector.extract_strided_slice %314 {offsets = [56, 0], sizes = [8, 5], strides = [1, 1]} : vector<64x5xf32> to vector<8x5xf32>
    %682 = arith.addf %664, %681 : vector<8x5xf32>
    %c0_171 = arith.constant 0 : index
    %c0_172 = arith.constant 0 : index
    %683 = vector.load %arg11[%c0_171, %c0_172] : memref<1x5xf32, #tpu.memory_space<vmem>>, vector<1x5xf32>
    %684 = vector.broadcast %683 : vector<1x5xf32> to vector<8x5xf32>
    %685 = arith.addf %682, %684 : vector<8x5xf32>
    %cst_173 = arith.constant dense<0xFF800000> : vector<8xf32>
    %686 = vector.multi_reduction <maximumf>, %685, %cst_173 [1] : vector<8x5xf32> to vector<8xf32>
    %687 = vector.shape_cast %686 : vector<8xf32> to vector<8x1xf32>
    %688 = vector.broadcast %687 : vector<8x1xf32> to vector<8x5xf32>
    %689 = arith.cmpf oeq, %685, %688 : vector<8x5xf32>
    %c5_i32_174 = arith.constant 5 : i32
    %690 = vector.broadcast %c5_i32_174 : i32 to vector<8x5xi32>
    %691 = arith.select %689, %317, %690 : vector<8x5xi1>, vector<8x5xi32>
    %cst_175 = arith.constant dense<2147483647> : vector<8xi32>
    %692 = vector.multi_reduction <minsi>, %691, %cst_175 [1] : vector<8x5xi32> to vector<8xi32>
    %693 = vector.shape_cast %692 : vector<8xi32> to vector<8x1xi32>
    %694 = tpu.iota {dimensions = array<i32: 1>} : vector<8x128xi32>
    %cst_176 = arith.constant 0.000000e+00 : f32
    %695 = vector.broadcast %cst_176 : f32 to vector<8x128xf32>
    %c8_i32 = arith.constant 8 : i32
    %696 = vector.broadcast %c8_i32 : i32 to vector<8x128xi32>
    %697 = arith.cmpi eq, %694, %696 : vector<8x128xi32>
    %698 = vector.shape_cast %687 : vector<8x1xf32> to vector<8x1xf32>
    %699 = vector.broadcast %698 : vector<8x1xf32> to vector<8x128xf32>
    %700 = arith.select %697, %699, %695 : vector<8x128xi1>, vector<8x128xf32>
    %c7_i32 = arith.constant 7 : i32
    %701 = vector.broadcast %c7_i32 : i32 to vector<8x128xi32>
    %702 = arith.cmpi eq, %694, %701 : vector<8x128xi32>
    %703 = arith.sitofp %693 : vector<8x1xi32> to vector<8x1xf32>
    %704 = vector.shape_cast %703 : vector<8x1xf32> to vector<8x1xf32>
    %705 = vector.broadcast %704 : vector<8x1xf32> to vector<8x128xf32>
    %706 = arith.select %702, %705, %700 : vector<8x128xi1>, vector<8x128xf32>
    %707 = vector.broadcast %693 : vector<8x1xi32> to vector<8x5xi32>
    %708 = arith.cmpi eq, %317, %707 : vector<8x5xi32>
    %c0_i32_177 = arith.constant 0 : i32
    %709 = vector.broadcast %c0_i32_177 : i32 to vector<8x5xi32>
    %710 = arith.select %708, %680, %709 : vector<8x5xi1>, vector<8x5xi32>
    %cst_178 = arith.constant dense<0> : vector<8xi32>
    %711 = vector.multi_reduction <add>, %710, %cst_178 [1] : vector<8x5xi32> to vector<8xi32>
    %712 = vector.shape_cast %711 : vector<8xi32> to vector<8x1xi32>
    %c6_i32 = arith.constant 6 : i32
    %713 = vector.broadcast %c6_i32 : i32 to vector<8x128xi32>
    %714 = arith.cmpi eq, %694, %713 : vector<8x128xi32>
    %715 = arith.sitofp %712 : vector<8x1xi32> to vector<8x1xf32>
    %716 = vector.shape_cast %715 : vector<8x1xf32> to vector<8x1xf32>
    %717 = vector.broadcast %716 : vector<8x1xf32> to vector<8x128xf32>
    %718 = arith.select %714, %717, %706 : vector<8x128xi1>, vector<8x128xf32>
    %719 = vector.broadcast %712 : vector<8x1xi32> to vector<8x5xi32>
    %720 = arith.cmpi eq, %317, %719 : vector<8x5xi32>
    %c0_i32_179 = arith.constant 0 : i32
    %721 = vector.broadcast %c0_i32_179 : i32 to vector<8x5xi32>
    %722 = arith.select %720, %633, %721 : vector<8x5xi1>, vector<8x5xi32>
    %cst_180 = arith.constant dense<0> : vector<8xi32>
    %723 = vector.multi_reduction <add>, %722, %cst_180 [1] : vector<8x5xi32> to vector<8xi32>
    %724 = vector.shape_cast %723 : vector<8xi32> to vector<8x1xi32>
    %c5_i32_181 = arith.constant 5 : i32
    %725 = vector.broadcast %c5_i32_181 : i32 to vector<8x128xi32>
    %726 = arith.cmpi eq, %694, %725 : vector<8x128xi32>
    %727 = arith.sitofp %724 : vector<8x1xi32> to vector<8x1xf32>
    %728 = vector.shape_cast %727 : vector<8x1xf32> to vector<8x1xf32>
    %729 = vector.broadcast %728 : vector<8x1xf32> to vector<8x128xf32>
    %730 = arith.select %726, %729, %718 : vector<8x128xi1>, vector<8x128xf32>
    %731 = vector.broadcast %724 : vector<8x1xi32> to vector<8x5xi32>
    %732 = arith.cmpi eq, %317, %731 : vector<8x5xi32>
    %c0_i32_182 = arith.constant 0 : i32
    %733 = vector.broadcast %c0_i32_182 : i32 to vector<8x5xi32>
    %734 = arith.select %732, %586, %733 : vector<8x5xi1>, vector<8x5xi32>
    %cst_183 = arith.constant dense<0> : vector<8xi32>
    %735 = vector.multi_reduction <add>, %734, %cst_183 [1] : vector<8x5xi32> to vector<8xi32>
    %736 = vector.shape_cast %735 : vector<8xi32> to vector<8x1xi32>
    %c4_i32_184 = arith.constant 4 : i32
    %737 = vector.broadcast %c4_i32_184 : i32 to vector<8x128xi32>
    %738 = arith.cmpi eq, %694, %737 : vector<8x128xi32>
    %739 = arith.sitofp %736 : vector<8x1xi32> to vector<8x1xf32>
    %740 = vector.shape_cast %739 : vector<8x1xf32> to vector<8x1xf32>
    %741 = vector.broadcast %740 : vector<8x1xf32> to vector<8x128xf32>
    %742 = arith.select %738, %741, %730 : vector<8x128xi1>, vector<8x128xf32>
    %743 = vector.broadcast %736 : vector<8x1xi32> to vector<8x5xi32>
    %744 = arith.cmpi eq, %317, %743 : vector<8x5xi32>
    %c0_i32_185 = arith.constant 0 : i32
    %745 = vector.broadcast %c0_i32_185 : i32 to vector<8x5xi32>
    %746 = arith.select %744, %539, %745 : vector<8x5xi1>, vector<8x5xi32>
    %cst_186 = arith.constant dense<0> : vector<8xi32>
    %747 = vector.multi_reduction <add>, %746, %cst_186 [1] : vector<8x5xi32> to vector<8xi32>
    %748 = vector.shape_cast %747 : vector<8xi32> to vector<8x1xi32>
    %c3_i32_187 = arith.constant 3 : i32
    %749 = vector.broadcast %c3_i32_187 : i32 to vector<8x128xi32>
    %750 = arith.cmpi eq, %694, %749 : vector<8x128xi32>
    %751 = arith.sitofp %748 : vector<8x1xi32> to vector<8x1xf32>
    %752 = vector.shape_cast %751 : vector<8x1xf32> to vector<8x1xf32>
    %753 = vector.broadcast %752 : vector<8x1xf32> to vector<8x128xf32>
    %754 = arith.select %750, %753, %742 : vector<8x128xi1>, vector<8x128xf32>
    %755 = vector.broadcast %748 : vector<8x1xi32> to vector<8x5xi32>
    %756 = arith.cmpi eq, %317, %755 : vector<8x5xi32>
    %c0_i32_188 = arith.constant 0 : i32
    %757 = vector.broadcast %c0_i32_188 : i32 to vector<8x5xi32>
    %758 = arith.select %756, %492, %757 : vector<8x5xi1>, vector<8x5xi32>
    %cst_189 = arith.constant dense<0> : vector<8xi32>
    %759 = vector.multi_reduction <add>, %758, %cst_189 [1] : vector<8x5xi32> to vector<8xi32>
    %760 = vector.shape_cast %759 : vector<8xi32> to vector<8x1xi32>
    %c2_i32_190 = arith.constant 2 : i32
    %761 = vector.broadcast %c2_i32_190 : i32 to vector<8x128xi32>
    %762 = arith.cmpi eq, %694, %761 : vector<8x128xi32>
    %763 = arith.sitofp %760 : vector<8x1xi32> to vector<8x1xf32>
    %764 = vector.shape_cast %763 : vector<8x1xf32> to vector<8x1xf32>
    %765 = vector.broadcast %764 : vector<8x1xf32> to vector<8x128xf32>
    %766 = arith.select %762, %765, %754 : vector<8x128xi1>, vector<8x128xf32>
    %767 = vector.broadcast %760 : vector<8x1xi32> to vector<8x5xi32>
    %768 = arith.cmpi eq, %317, %767 : vector<8x5xi32>
    %c0_i32_191 = arith.constant 0 : i32
    %769 = vector.broadcast %c0_i32_191 : i32 to vector<8x5xi32>
    %770 = arith.select %768, %445, %769 : vector<8x5xi1>, vector<8x5xi32>
    %cst_192 = arith.constant dense<0> : vector<8xi32>
    %771 = vector.multi_reduction <add>, %770, %cst_192 [1] : vector<8x5xi32> to vector<8xi32>
    %772 = vector.shape_cast %771 : vector<8xi32> to vector<8x1xi32>
    %c1_i32_193 = arith.constant 1 : i32
    %773 = vector.broadcast %c1_i32_193 : i32 to vector<8x128xi32>
    %774 = arith.cmpi eq, %694, %773 : vector<8x128xi32>
    %775 = arith.sitofp %772 : vector<8x1xi32> to vector<8x1xf32>
    %776 = vector.shape_cast %775 : vector<8x1xf32> to vector<8x1xf32>
    %777 = vector.broadcast %776 : vector<8x1xf32> to vector<8x128xf32>
    %778 = arith.select %774, %777, %766 : vector<8x128xi1>, vector<8x128xf32>
    %779 = vector.broadcast %772 : vector<8x1xi32> to vector<8x5xi32>
    %780 = arith.cmpi eq, %317, %779 : vector<8x5xi32>
    %c0_i32_194 = arith.constant 0 : i32
    %781 = vector.broadcast %c0_i32_194 : i32 to vector<8x5xi32>
    %782 = arith.select %780, %398, %781 : vector<8x5xi1>, vector<8x5xi32>
    %cst_195 = arith.constant dense<0> : vector<8xi32>
    %783 = vector.multi_reduction <add>, %782, %cst_195 [1] : vector<8x5xi32> to vector<8xi32>
    %784 = vector.shape_cast %783 : vector<8xi32> to vector<8x1xi32>
    %c0_i32_196 = arith.constant 0 : i32
    %785 = vector.broadcast %c0_i32_196 : i32 to vector<8x128xi32>
    %786 = arith.cmpi eq, %694, %785 : vector<8x128xi32>
    %787 = arith.sitofp %784 : vector<8x1xi32> to vector<8x1xf32>
    %788 = vector.shape_cast %787 : vector<8x1xf32> to vector<8x1xf32>
    %789 = vector.broadcast %788 : vector<8x1xf32> to vector<8x128xf32>
    %790 = arith.select %786, %789, %778 : vector<8x128xi1>, vector<8x128xf32>
    %c0_197 = arith.constant 0 : index
    %c0_198 = arith.constant 0 : index
    %791 = vector.load %arg13[%c0_197, %c0_198] : memref<8x128xf32, #tpu.memory_space<vmem>>, vector<8x128xf32>
    tpu.vector_store %arg13[%c0_197, %c0_198], %790 {strides = array<i32>} : memref<8x128xf32, #tpu.memory_space<vmem>>, vector<8x128xf32>,
    return
  }
  func.func @transform_0(%arg0: i32) -> (i32, i32) {
    %c0_i32 = arith.constant 0 : i32
    %c0_i32_0 = arith.constant 0 : i32
    return %arg0, %c0_i32 : i32, i32
  }
  func.func @transform_1(%arg0: i32) -> (i32, i32) {
    %c0_i32 = arith.constant 0 : i32
    %c0_i32_0 = arith.constant 0 : i32
    %c0_i32_1 = arith.constant 0 : i32
    return %c0_i32, %c0_i32_0 : i32, i32
  }
  func.func @transform_2(%arg0: i32) -> (i32, i32) {
    %c0_i32 = arith.constant 0 : i32
    %c0_i32_0 = arith.constant 0 : i32
    %c0_i32_1 = arith.constant 0 : i32
    return %c0_i32, %c0_i32_0 : i32, i32
  }
  func.func @transform_3(%arg0: i32) -> (i32, i32) {
    %c0_i32 = arith.constant 0 : i32
    %c0_i32_0 = arith.constant 0 : i32
    %c0_i32_1 = arith.constant 0 : i32
    return %c0_i32, %c0_i32_0 : i32, i32
  }
  func.func @transform_4(%arg0: i32) -> (i32, i32) {
    %c0_i32 = arith.constant 0 : i32
    %c0_i32_0 = arith.constant 0 : i32
    return %arg0, %c0_i32 : i32, i32
  }
  func.func @transform_5(%arg0: i32) -> (i32, i32) {
    %c0_i32 = arith.constant 0 : i32
    %c0_i32_0 = arith.constant 0 : i32
    return %arg0, %c0_i32 : i32, i32
  }
  func.func @transform_6(%arg0: i32) -> (i32, i32) {
    %c0_i32 = arith.constant 0 : i32
    %c0_i32_0 = arith.constant 0 : i32
    %c0_i32_1 = arith.constant 0 : i32
    return %c0_i32, %c0_i32_0 : i32, i32
  }
  func.func @transform_7(%arg0: i32) -> (i32, i32) {
    %c0_i32 = arith.constant 0 : i32
    %c0_i32_0 = arith.constant 0 : i32
    %c0_i32_1 = arith.constant 0 : i32
    return %c0_i32, %c0_i32_0 : i32, i32
  }
  func.func @transform_8(%arg0: i32) -> (i32, i32) {
    %c0_i32 = arith.constant 0 : i32
    %c0_i32_0 = arith.constant 0 : i32
    %c0_i32_1 = arith.constant 0 : i32
    return %c0_i32, %c0_i32_0 : i32, i32
  }
  func.func @transform_9(%arg0: i32) -> (i32, i32) {
    %c0_i32 = arith.constant 0 : i32
    %c0_i32_0 = arith.constant 0 : i32
    %c0_i32_1 = arith.constant 0 : i32
    return %c0_i32, %c0_i32_0 : i32, i32
  }
  func.func @transform_10(%arg0: i32) -> (i32, i32) {
    %c0_i32 = arith.constant 0 : i32
    %c0_i32_0 = arith.constant 0 : i32
    %c0_i32_1 = arith.constant 0 : i32
    return %c0_i32, %c0_i32_0 : i32, i32
  }
  func.func @transform_11(%arg0: i32) -> (i32, i32) {
    %c0_i32 = arith.constant 0 : i32
    %c0_i32_0 = arith.constant 0 : i32
    return %arg0, %c0_i32 : i32, i32
  }
  func.func @transform_12(%arg0: i32) -> (i32, i32) {
    %c0_i32 = arith.constant 0 : i32
    %c0_i32_0 = arith.constant 0 : i32
    return %arg0, %c0_i32 : i32, i32
  }
}

</mosaic_0001>

<llo_original>
// kernel: tpu_custom_call.1
$region0: #{tpu_custom_call.1}
  #allocation0 [shape = 'u32[]', space=smem, size = 0x4, offset = 0x4, fixed_abs, tag = 'smem constant byte address 0x4 - core index']
  #allocation1 [shape = 'u32[144,128]{1,0:T(1,128)}', space=vmem, size = 0x12000, scoped, tag = 'internal scratch']
  #allocation2 [shape = 'f32[64,32]{1,0:T(8,128)}', space=vmem, size = 0x8000, scoped, tag = 'scratch operand']
  #allocation3 [shape = 'f32[64,32]{1,0:T(8,128)}', space=vmem, size = 0x8000, scoped, tag = 'scratch operand']
  %s0 = inlined_call_operand.vmem [shape: bf16[128,64], index: 0, kind: input, shape index: {}]
  %s1 = inlined_call_operand.vmem [shape: bf16[64,128], index: 1, kind: input, shape index: {}]
  %s2 = inlined_call_operand.vmem [shape: bf16[32,128], index: 2, kind: input, shape index: {}]
  %s3 = inlined_call_operand.vmem [shape: f32[1,128], index: 3, kind: input, shape index: {}]
  %s4 = inlined_call_operand.vmem [shape: f32[16,32], index: 4, kind: input, shape index: {}]
  %s5 = inlined_call_operand.vmem [shape: f32[16,32], index: 5, kind: input, shape index: {}]
  %s6 = inlined_call_operand.vmem [shape: f32[32,5], index: 6, kind: input, shape index: {}]
  %s7 = inlined_call_operand.vmem [shape: f32[32,5], index: 7, kind: input, shape index: {}]
  %s8 = inlined_call_operand.vmem [shape: f32[1,5], index: 8, kind: input, shape index: {}]
  %s9 = inlined_call_operand.vmem [shape: f32[5,5], index: 9, kind: input, shape index: {}]
  %s10 = inlined_call_operand.vmem [shape: f32[1,5], index: 10, kind: input, shape index: {}]
  %s11 = inlined_call_operand.vmem [shape: f32[128,5], index: 11, kind: output, shape index: {0}]
  %s12 = inlined_call_operand.hbm [shape: f32[16,128], index: 12, kind: output, shape index: {1}]
  %13 = xla_tuple %s11, %s12
  %s14 = sld [smem:[#allocation0]]
  $region85: #{tpu_custom_call.1} parent=0
    _
  %s16 = ssub.s32 1, %s14
  %s17 = scalar_select 0, %s16, %s14
  $region1: #{tpu_custom_call.1} parent=0
    #allocation4 [shape = 'u8[8192]{0}', space=vmem, size = 0x2000, scoped, tag = 'output window, operand 1']
    #allocation5 [shape = 's32[2]{0}', space=sflag, size = 0x8, scoped, tag = 'scoped memory for tpu_custom_call.1']
    %18 = vsyncpa [#allocation5], 0
    %s19 = scalar_lea.sflag [#allocation5], 1
    %20 = vsyncpa %s19, 0
    loop: start=0, step=1, limit=4
    $region2: #{tpu_custom_call.1} parent=1 // loop_pre_header
      _
    $region3: #{tpu_custom_call.1} parent=1 // loop_header
      %s22 = sphi 0, %s26
      %p23 = scmp.ge.s32.totalorder %s22, 4
      %s32 = sphi 0, %s34
      %s35 = sphi 0, %s32
      %s36 = sphi 0, %s35
      %s52 = sphi 0, %s36
      %s56 = sphi 0, %s56
      %s58 = sphi 0, %s56
      %s59 = sphi 0, %s58
      %s73 = sphi 0, %s59
      %s77 = sphi 0, %s77
      %s79 = sphi 0, %s77
      %s80 = sphi 0, %s79
      %s94 = sphi 0, %s80
      %s98 = sphi 0, %s98
      %s100 = sphi 0, %s98
      %s101 = sphi 0, %s100
      %s115 = sphi 0, %s101
      %s121 = sphi 0, %s123
      %s124 = sphi 0, %s121
      %s125 = sphi 0, %s124
      %s141 = sphi 0, %s125
      %s147 = sphi 0, %s149
      %s150 = sphi 0, %s147
      %s151 = sphi 0, %s150
      %s167 = sphi 0, %s151
      %s171 = sphi 0, %s171
      %s173 = sphi 0, %s171
      %s174 = sphi 0, %s173
      %s188 = sphi 0, %s174
      %s192 = sphi 0, %s192
      %s194 = sphi 0, %s192
      %s195 = sphi 0, %s194
      %s209 = sphi 0, %s195
      %s213 = sphi 0, %s213
      %s215 = sphi 0, %s213
      %s216 = sphi 0, %s215
      %s230 = sphi 0, %s216
      %s234 = sphi 0, %s234
      %s236 = sphi 0, %s234
      %s237 = sphi 0, %s236
      %s251 = sphi 0, %s237
      %s255 = sphi 0, %s255
      %s257 = sphi 0, %s255
      %s258 = sphi 0, %s257
      %s272 = sphi 0, %s258
      %s278 = sphi 0, %s280
      %s281 = sphi 0, %s278
      %s282 = sphi 0, %s281
      %s298 = sphi 0, %s282
      %s304 = sphi 0, %s306
      %s307 = sphi 0, %s304
      %s308 = sphi 0, %s307
      %s324 = sphi 0, %s308
    $region4: #{tpu_custom_call.1} parent=1 // loop_header_branch
      %25 = sbr.rel (%p23) target = $region8
    $region5: #{tpu_custom_call.1} parent=1 // loop_body
      %s27 = ssub.s32 %s22, 1
      %s28 = ssub.s32 %s22, 2
      %s29 = sadd.s32 %s22, 1
      %s30 = ssub.s32 %s22, %s29
      %p31 = scmp.eq.s32.totalorder %s30, 0
      %s33 = sadd.s32 %s32, 1
      %s34 = scalar_select %p31, %s32, %s33
      %p37 = pneg %p31
      %p38 = scmp.eq.s32.totalorder %s22, 1
      %p39 = por %p37, %p38
      %p40 = scmp.ne.s32.totalorder %s32, %s35
      %p41 = scmp.eq.s32.totalorder %s22, 0
      %p42 = por %p40, %p41
      %p43 = scmp.ne.s32.totalorder %s32, %s35
      %p44 = scmp.eq.s32.totalorder %s27, 1
      %p45 = por %p43, %p44
      %p46 = scmp.ne.s32.totalorder %s35, %s36
      %p47 = scmp.eq.s32.totalorder %s27, 0
      %p48 = por %p46, %p47
      %p49 = scmp.ne.s32.totalorder %s35, %s36
      %p50 = scmp.eq.s32.totalorder %s28, 1
      %p51 = por %p49, %p50
      %p53 = scmp.ne.s32.totalorder %s36, %s52
      %p54 = scmp.eq.s32.totalorder %s28, 0
      %p55 = por %p53, %p54
      %s57 = sadd.s32 %s56, 1
      %p60 = scmp.eq.s32.totalorder %s22, 1
      %p61 = scmp.ne.s32.totalorder %s56, %s58
      %p62 = scmp.eq.s32.totalorder %s22, 0
      %p63 = por %p61, %p62
      %p64 = scmp.ne.s32.totalorder %s56, %s58
      %p65 = scmp.eq.s32.totalorder %s27, 1
      %p66 = por %p64, %p65
      %p67 = scmp.ne.s32.totalorder %s58, %s59
      %p68 = scmp.eq.s32.totalorder %s27, 0
      %p69 = por %p67, %p68
      %p70 = scmp.ne.s32.totalorder %s58, %s59
      %p71 = scmp.eq.s32.totalorder %s28, 1
      %p72 = por %p70, %p71
      %p74 = scmp.ne.s32.totalorder %s59, %s73
      %p75 = scmp.eq.s32.totalorder %s28, 0
      %p76 = por %p74, %p75
      %s78 = sadd.s32 %s77, 1
      %p81 = scmp.eq.s32.totalorder %s22, 1
      %p82 = scmp.ne.s32.totalorder %s77, %s79
      %p83 = scmp.eq.s32.totalorder %s22, 0
      %p84 = por %p82, %p83
      %p85 = scmp.ne.s32.totalorder %s77, %s79
      %p86 = scmp.eq.s32.totalorder %s27, 1
      %p87 = por %p85, %p86
      %p88 = scmp.ne.s32.totalorder %s79, %s80
      %p89 = scmp.eq.s32.totalorder %s27, 0
      %p90 = por %p88, %p89
      %p91 = scmp.ne.s32.totalorder %s79, %s80
      %p92 = scmp.eq.s32.totalorder %s28, 1
      %p93 = por %p91, %p92
      %p95 = scmp.ne.s32.totalorder %s80, %s94
      %p96 = scmp.eq.s32.totalorder %s28, 0
      %p97 = por %p95, %p96
      %s99 = sadd.s32 %s98, 1
      %p102 = scmp.eq.s32.totalorder %s22, 1
      %p103 = scmp.ne.s32.totalorder %s98, %s100
      %p104 = scmp.eq.s32.totalorder %s22, 0
      %p105 = por %p103, %p104
      %p106 = scmp.ne.s32.totalorder %s98, %s100
      %p107 = scmp.eq.s32.totalorder %s27, 1
      %p108 = por %p106, %p107
      %p109 = scmp.ne.s32.totalorder %s100, %s101
      %p110 = scmp.eq.s32.totalorder %s27, 0
      %p111 = por %p109, %p110
      %p112 = scmp.ne.s32.totalorder %s100, %s101
      %p113 = scmp.eq.s32.totalorder %s28, 1
      %p114 = por %p112, %p113
      %p116 = scmp.ne.s32.totalorder %s101, %s115
      %p117 = scmp.eq.s32.totalorder %s28, 0
      %p118 = por %p116, %p117
      %s119 = ssub.s32 %s22, %s29
      %p120 = scmp.eq.s32.totalorder %s119, 0
      %s122 = sadd.s32 %s121, 1
      %s123 = scalar_select %p120, %s121, %s122
      %p126 = pneg %p120
      %p127 = scmp.eq.s32.totalorder %s22, 1
      %p128 = por %p126, %p127
      %p129 = scmp.ne.s32.totalorder %s121, %s124
      %p130 = scmp.eq.s32.totalorder %s22, 0
      %p131 = por %p129, %p130
      %p132 = scmp.ne.s32.totalorder %s121, %s124
      %p133 = scmp.eq.s32.totalorder %s27, 1
      %p134 = por %p132, %p133
      %p135 = scmp.ne.s32.totalorder %s124, %s125
      %p136 = scmp.eq.s32.totalorder %s27, 0
      %p137 = por %p135, %p136
      %p138 = scmp.ne.s32.totalorder %s124, %s125
      %p139 = scmp.eq.s32.totalorder %s28, 1
      %p140 = por %p138, %p139
      %p142 = scmp.ne.s32.totalorder %s125, %s141
      %p143 = scmp.eq.s32.totalorder %s28, 0
      %p144 = por %p142, %p143
      %s145 = ssub.s32 %s22, %s29
      %p146 = scmp.eq.s32.totalorder %s145, 0
      %s148 = sadd.s32 %s147, 1
      %s149 = scalar_select %p146, %s147, %s148
      %p152 = pneg %p146
      %p153 = scmp.eq.s32.totalorder %s22, 1
      %p154 = por %p152, %p153
      %p155 = scmp.ne.s32.totalorder %s147, %s150
      %p156 = scmp.eq.s32.totalorder %s22, 0
      %p157 = por %p155, %p156
      %p158 = scmp.ne.s32.totalorder %s147, %s150
      %p159 = scmp.eq.s32.totalorder %s27, 1
      %p160 = por %p158, %p159
      %p161 = scmp.ne.s32.totalorder %s150, %s151
      %p162 = scmp.eq.s32.totalorder %s27, 0
      %p163 = por %p161, %p162
      %p164 = scmp.ne.s32.totalorder %s150, %s151
      %p165 = scmp.eq.s32.totalorder %s28, 1
      %p166 = por %p164, %p165
      %p168 = scmp.ne.s32.totalorder %s151, %s167
      %p169 = scmp.eq.s32.totalorder %s28, 0
      %p170 = por %p168, %p169
      %s172 = sadd.s32 %s171, 1
      %p175 = scmp.eq.s32.totalorder %s22, 1
      %p176 = scmp.ne.s32.totalorder %s171, %s173
      %p177 = scmp.eq.s32.totalorder %s22, 0
      %p178 = por %p176, %p177
      %p179 = scmp.ne.s32.totalorder %s171, %s173
      %p180 = scmp.eq.s32.totalorder %s27, 1
      %p181 = por %p179, %p180
      %p182 = scmp.ne.s32.totalorder %s173, %s174
      %p183 = scmp.eq.s32.totalorder %s27, 0
      %p184 = por %p182, %p183
      %p185 = scmp.ne.s32.totalorder %s173, %s174
      %p186 = scmp.eq.s32.totalorder %s28, 1
      %p187 = por %p185, %p186
      %p189 = scmp.ne.s32.totalorder %s174, %s188
      %p190 = scmp.eq.s32.totalorder %s28, 0
      %p191 = por %p189, %p190
      %s193 = sadd.s32 %s192, 1
      %p196 = scmp.eq.s32.totalorder %s22, 1
      %p197 = scmp.ne.s32.totalorder %s192, %s194
      %p198 = scmp.eq.s32.totalorder %s22, 0
      %p199 = por %p197, %p198
      %p200 = scmp.ne.s32.totalorder %s192, %s194
      %p201 = scmp.eq.s32.totalorder %s27, 1
      %p202 = por %p200, %p201
      %p203 = scmp.ne.s32.totalorder %s194, %s195
      %p204 = scmp.eq.s32.totalorder %s27, 0
      %p205 = por %p203, %p204
      %p206 = scmp.ne.s32.totalorder %s194, %s195
      %p207 = scmp.eq.s32.totalorder %s28, 1
      %p208 = por %p206, %p207
      %p210 = scmp.ne.s32.totalorder %s195, %s209
      %p211 = scmp.eq.s32.totalorder %s28, 0
      %p212 = por %p210, %p211
      %s214 = sadd.s32 %s213, 1
      %p217 = scmp.eq.s32.totalorder %s22, 1
      %p218 = scmp.ne.s32.totalorder %s213, %s215
      %p219 = scmp.eq.s32.totalorder %s22, 0
      %p220 = por %p218, %p219
      %p221 = scmp.ne.s32.totalorder %s213, %s215
      %p222 = scmp.eq.s32.totalorder %s27, 1
      %p223 = por %p221, %p222
      %p224 = scmp.ne.s32.totalorder %s215, %s216
      %p225 = scmp.eq.s32.totalorder %s27, 0
      %p226 = por %p224, %p225
      %p227 = scmp.ne.s32.totalorder %s215, %s216
      %p228 = scmp.eq.s32.totalorder %s28, 1
      %p229 = por %p227, %p228
      %p231 = scmp.ne.s32.totalorder %s216, %s230
      %p232 = scmp.eq.s32.totalorder %s28, 0
      %p233 = por %p231, %p232
      %s235 = sadd.s32 %s234, 1
      %p238 = scmp.eq.s32.totalorder %s22, 1
      %p239 = scmp.ne.s32.totalorder %s234, %s236
      %p240 = scmp.eq.s32.totalorder %s22, 0
      %p241 = por %p239, %p240
      %p242 = scmp.ne.s32.totalorder %s234, %s236
      %p243 = scmp.eq.s32.totalorder %s27, 1
      %p244 = por %p242, %p243
      %p245 = scmp.ne.s32.totalorder %s236, %s237
      %p246 = scmp.eq.s32.totalorder %s27, 0
      %p247 = por %p245, %p246
      %p248 = scmp.ne.s32.totalorder %s236, %s237
      %p249 = scmp.eq.s32.totalorder %s28, 1
      %p250 = por %p248, %p249
      %p252 = scmp.ne.s32.totalorder %s237, %s251
      %p253 = scmp.eq.s32.totalorder %s28, 0
      %p254 = por %p252, %p253
      %s256 = sadd.s32 %s255, 1
      %p259 = scmp.eq.s32.totalorder %s22, 1
      %p260 = scmp.ne.s32.totalorder %s255, %s257
      %p261 = scmp.eq.s32.totalorder %s22, 0
      %p262 = por %p260, %p261
      %p263 = scmp.ne.s32.totalorder %s255, %s257
      %p264 = scmp.eq.s32.totalorder %s27, 1
      %p265 = por %p263, %p264
      %p266 = scmp.ne.s32.totalorder %s257, %s258
      %p267 = scmp.eq.s32.totalorder %s27, 0
      %p268 = por %p266, %p267
      %p269 = scmp.ne.s32.totalorder %s257, %s258
      %p270 = scmp.eq.s32.totalorder %s28, 1
      %p271 = por %p269, %p270
      %p273 = scmp.ne.s32.totalorder %s258, %s272
      %p274 = scmp.eq.s32.totalorder %s28, 0
      %p275 = por %p273, %p274
      %s276 = ssub.s32 %s22, %s29
      %p277 = scmp.eq.s32.totalorder %s276, 0
      %s279 = sadd.s32 %s278, 1
      %s280 = scalar_select %p277, %s278, %s279
      %p283 = pneg %p277
      %p284 = scmp.eq.s32.totalorder %s22, 1
      %p285 = por %p283, %p284
      %p286 = scmp.ne.s32.totalorder %s278, %s281
      %p287 = scmp.eq.s32.totalorder %s22, 0
      %p288 = por %p286, %p287
      %p289 = scmp.ne.s32.totalorder %s278, %s281
      %p290 = scmp.eq.s32.totalorder %s27, 1
      %p291 = por %p289, %p290
      %p292 = scmp.ne.s32.totalorder %s281, %s282
      %p293 = scmp.eq.s32.totalorder %s27, 0
      %p294 = por %p292, %p293
      %p295 = scmp.ne.s32.totalorder %s281, %s282
      %p296 = scmp.eq.s32.totalorder %s28, 1
      %p297 = por %p295, %p296
      %p299 = scmp.ne.s32.totalorder %s282, %s298
      %p300 = scmp.eq.s32.totalorder %s28, 0
      %p301 = por %p299, %p300
      %s302 = ssub.s32 %s22, %s29
      %p303 = scmp.eq.s32.totalorder %s302, 0
      %s305 = sadd.s32 %s304, 1
      %s306 = scalar_select %p303, %s304, %s305
      %p309 = pneg %p303
      %p310 = scmp.eq.s32.totalorder %s22, 1
      %p311 = por %p309, %p310
      %p312 = scmp.ne.s32.totalorder %s304, %s307
      %p313 = scmp.eq.s32.totalorder %s22, 0
      %p314 = por %p312, %p313
      %p315 = scmp.ne.s32.totalorder %s304, %s307
      %p316 = scmp.eq.s32.totalorder %s27, 1
      %p317 = por %p315, %p316
      %p318 = scmp.ne.s32.totalorder %s307, %s308
      %p319 = scmp.eq.s32.totalorder %s27, 0
      %p320 = por %p318, %p319
      %p321 = scmp.ne.s32.totalorder %s307, %s308
      %p322 = scmp.eq.s32.totalorder %s28, 1
      %p323 = por %p321, %p322
      %p325 = scmp.ne.s32.totalorder %s308, %s324
      %p326 = scmp.eq.s32.totalorder %s28, 0
      %p327 = por %p325, %p326
      %p328 = scmp.le.s32.totalorder 1, %s22
      %p329 = scmp.lt.s32.totalorder %s22, 3
      %p330 = pnand %p328, %p329
      %p331 = pneg %p330
      // Predicated region
      $region9: #{tpu_custom_call.1} parent=5 // pred_check
        _
      $region10: #{tpu_custom_call.1} parent=5 // pred_check_branch
        %333 = sbr.rel (%p330) target = $region12
      $region11: #{tpu_custom_call.1} parent=5 // pred_region
        %s334 = ssub.s32 %s22, 1
        // Predicated region
        $region13: #{tpu_custom_call.1} parent=11 // pred_check
          %p335 = pneg %p69
        $region14: #{tpu_custom_call.1} parent=11 // pred_check_branch
          %337 = sbr.rel (%p335) target = $region16
        $region15: #{tpu_custom_call.1} parent=11 // pred_region
          _
        $region16: #{tpu_custom_call.1} parent=11 // pred_fallthru
          _
        // Predicated region
        $region17: #{tpu_custom_call.1} parent=11 // pred_check
          %p338 = pneg %p90
        $region18: #{tpu_custom_call.1} parent=11 // pred_check_branch
          %340 = sbr.rel (%p338) target = $region20
        $region19: #{tpu_custom_call.1} parent=11 // pred_region
          _
        $region20: #{tpu_custom_call.1} parent=11 // pred_fallthru
          _
        // Predicated region
        $region21: #{tpu_custom_call.1} parent=11 // pred_check
          %p341 = pneg %p111
        $region22: #{tpu_custom_call.1} parent=11 // pred_check_branch
          %343 = sbr.rel (%p341) target = $region24
        $region23: #{tpu_custom_call.1} parent=11 // pred_region
          _
        $region24: #{tpu_custom_call.1} parent=11 // pred_fallthru
          _
        // Predicated region
        $region25: #{tpu_custom_call.1} parent=11 // pred_check
          %p344 = pneg %p184
        $region26: #{tpu_custom_call.1} parent=11 // pred_check_branch
          %346 = sbr.rel (%p344) target = $region28
        $region27: #{tpu_custom_call.1} parent=11 // pred_region
          _
        $region28: #{tpu_custom_call.1} parent=11 // pred_fallthru
          _
        // Predicated region
        $region29: #{tpu_custom_call.1} parent=11 // pred_check
          %p347 = pneg %p205
        $region30: #{tpu_custom_call.1} parent=11 // pred_check_branch
          %349 = sbr.rel (%p347) target = $region32
        $region31: #{tpu_custom_call.1} parent=11 // pred_region
          _
        $region32: #{tpu_custom_call.1} parent=11 // pred_fallthru
          _
        // Predicated region
        $region33: #{tpu_custom_call.1} parent=11 // pred_check
          %p350 = pneg %p226
        $region34: #{tpu_custom_call.1} parent=11 // pred_check_branch
          %352 = sbr.rel (%p350) target = $region36
        $region35: #{tpu_custom_call.1} parent=11 // pred_region
          _
        $region36: #{tpu_custom_call.1} parent=11 // pred_fallthru
          _
        // Predicated region
        $region37: #{tpu_custom_call.1} parent=11 // pred_check
          %p353 = pneg %p247
        $region38: #{tpu_custom_call.1} parent=11 // pred_check_branch
          %355 = sbr.rel (%p353) target = $region40
        $region39: #{tpu_custom_call.1} parent=11 // pred_region
          _
        $region40: #{tpu_custom_call.1} parent=11 // pred_fallthru
          _
        // Predicated region
        $region41: #{tpu_custom_call.1} parent=11 // pred_check
          %p356 = pneg %p268
        $region42: #{tpu_custom_call.1} parent=11 // pred_check_branch
          %358 = sbr.rel (%p356) target = $region44
        $region43: #{tpu_custom_call.1} parent=11 // pred_region
          _
        $region44: #{tpu_custom_call.1} parent=11 // pred_fallthru
          _
      $region12: #{tpu_custom_call.1} parent=5 // pred_fallthru
        _
      %p359 = scmp.lt.s32.totalorder %s22, 2
      // Predicated region
      $region45: #{tpu_custom_call.1} parent=5 // pred_check
        %p360 = pneg %p359
      $region46: #{tpu_custom_call.1} parent=5 // pred_check_branch
        %362 = sbr.rel (%p360) target = $region48
      $region47: #{tpu_custom_call.1} parent=5 // pred_region
        // Predicated region
        $region49: #{tpu_custom_call.1} parent=47 // pred_check
          %p363 = pneg %p42
        $region50: #{tpu_custom_call.1} parent=47 // pred_check_branch
          %365 = sbr.rel (%p363) target = $region52
        $region51: #{tpu_custom_call.1} parent=47 // pred_region
          %s366 = smul.u32 8, %s22
          %p367 = scmp.lt.s32.totalorder %s366, 15
          %s368 = scalar_select %p367, %s366, 15
          %s369 = smul.addr %s368, 4
          %s370 = scalar_lea.vmem %s0, %s369
          %s371 = smul.u32 8, %s22
        $region52: #{tpu_custom_call.1} parent=47 // pred_fallthru
          _
        // Predicated region
        $region53: #{tpu_custom_call.1} parent=47 // pred_check
          %p372 = pneg %p131
        $region54: #{tpu_custom_call.1} parent=47 // pred_check_branch
          %374 = sbr.rel (%p372) target = $region56
        $region55: #{tpu_custom_call.1} parent=47 // pred_region
          %p375 = scmp.lt.s32.totalorder %s22, 1
          %s376 = scalar_select %p375, %s22, 1
          %s377 = smul.addr %s376, 8
          %s378 = scalar_lea.vmem %s4, %s377
        $region56: #{tpu_custom_call.1} parent=47 // pred_fallthru
          _
        // Predicated region
        $region57: #{tpu_custom_call.1} parent=47 // pred_check
          %p379 = pneg %p157
        $region58: #{tpu_custom_call.1} parent=47 // pred_check_branch
          %381 = sbr.rel (%p379) target = $region60
        $region59: #{tpu_custom_call.1} parent=47 // pred_region
          %p382 = scmp.lt.s32.totalorder %s22, 1
          %s383 = scalar_select %p382, %s22, 1
          %s384 = smul.addr %s383, 8
          %s385 = scalar_lea.vmem %s5, %s384
        $region60: #{tpu_custom_call.1} parent=47 // pred_fallthru
          _
      $region48: #{tpu_custom_call.1} parent=5 // pred_fallthru
        _
      %p386 = scmp.le.s32.totalorder 1, %s22
      %p387 = scmp.lt.s32.totalorder %s22, 3
      %p388 = pnand %p386, %p387
      %p389 = pneg %p388
      // Predicated region
      $region61: #{tpu_custom_call.1} parent=5 // pred_check
        _
      $region62: #{tpu_custom_call.1} parent=5 // pred_check_branch
        %391 = sbr.rel (%p388) target = $region64
      $region63: #{tpu_custom_call.1} parent=5 // pred_region
        %s392 = ssub.s32 %s22, 1
        %s393 = smul.u32 8, %s27
        %p394 = scmp.lt.s32.totalorder %s393, 15
        %s395 = scalar_select %p394, %s393, 15
        %s396 = smul.addr %s395, 4
        %s397 = scalar_lea.vmem %s0, %s396
        %p398 = pneg %p48
        %p399 = pneg %p45
        %p400 = pneg %p69
        %p401 = pneg %p66
        %p402 = pneg %p90
        %p403 = pneg %p87
        %p404 = pneg %p111
        %p405 = pneg %p108
        %p406 = scmp.lt.s32.totalorder %s27, 1
        %s407 = scalar_select %p406, %s27, 1
        %s408 = smul.addr %s407, 8
        %s409 = scalar_lea.vmem %s4, %s408
        %p410 = pneg %p137
        %p411 = pneg %p134
        %p412 = scmp.lt.s32.totalorder %s27, 1
        %s413 = scalar_select %p412, %s27, 1
        %s414 = smul.addr %s413, 8
        %s415 = scalar_lea.vmem %s5, %s414
        %p416 = pneg %p163
        %p417 = pneg %p160
        %p418 = pneg %p184
        %p419 = pneg %p181
        %p420 = pneg %p205
        %p421 = pneg %p202
        %p422 = pneg %p226
        %p423 = pneg %p223
        %p424 = pneg %p247
        %p425 = pneg %p244
        %p426 = pneg %p268
        %p427 = pneg %p265
        %p428 = pneg %p294
        %p429 = pneg %p291
        %s430 = smul.u32 8, %s27
        %p431 = scmp.lt.s32.totalorder %s430, 15
        %s432 = scalar_select %p431, %s430, 15
        %s433 = smul.addr %s432, 8
        %s434 = scalar_lea.vmem %s11, %s433
        %p435 = pneg %p320
        %p436 = pneg %p317
        %s437 = sand.u32 %s307, 1
        %s438 = scalar_lea.sflag [#allocation5], %s437
        %s439 = sand.u32 %s307, 1
        %s440 = smul.addr %s439, 8
        %s441 = scalar_lea.vmem [#allocation4], %s440
        %s442 = smul.u32 8, %s27
        %p443 = scmp.lt.s32.totalorder %s442, 15
        %s444 = scalar_select %p443, %s442, 15
        %s445 = smul.addr %s444, 4
        %s446 = scalar_lea.vmem %s0, %s445
        %s447 = smul.u32 8, %s27
        %p448 = scmp.lt.s32.totalorder %s27, 1
        %s449 = scalar_select %p448, %s27, 1
        %s450 = smul.addr %s449, 8
        %s451 = scalar_lea.vmem %s4, %s450
        %p452 = scmp.lt.s32.totalorder %s27, 1
        %s453 = scalar_select %p452, %s27, 1
        %s454 = smul.addr %s453, 8
        %s455 = scalar_lea.vmem %s5, %s454
        %s456 = smul.u32 8, %s27
        %p457 = scmp.lt.s32.totalorder %s456, 15
        %s458 = scalar_select %p457, %s456, 15
        %s459 = smul.addr %s458, 8
        %s460 = scalar_lea.vmem %s11, %s459
        %s461 = smul.u32 8, %s27
        %v463 = vld [vmem:[%s446] sm:$0xf]
        %v464 = vld [vmem:[%s446 + $0x4] sm:$0xf]
        %v465 = vld [vmem:[%s446 + $0x8] sm:$0xf]
        %v466 = vld [vmem:[%s446 + $0xc] sm:$0xf]
        %v467 = vld [vmem:[%s446 + $0x10] sm:$0xf]
        %v468 = vld [vmem:[%s446 + $0x14] sm:$0xf]
        %v469 = vld [vmem:[%s446 + $0x18] sm:$0xf]
        %v470 = vld [vmem:[%s446 + $0x1c] sm:$0xf]
        %v471 = vld [vmem:[%s1] sm:$0xf]
        %v472 = vld [vmem:[%s1 + $0x4] sm:$0xf]
        %v473 = vld [vmem:[%s1 + $0x8] sm:$0xf]
        %v474 = vld [vmem:[%s1 + $0xc] sm:$0xf]
        %v475 = vld [vmem:[%s1 + $0x10] sm:$0xf]
        %v476 = vld [vmem:[%s1 + $0x14] sm:$0xf]
        %v477 = vld [vmem:[%s1 + $0x18] sm:$0xf]
        %v478 = vld [vmem:[%s1 + $0x1c] sm:$0xf]
        %v479 = vld [vmem:[%s3] sm:$0x1]
        %v481 = vlaneseq
        %v482 = vshrl.u32 %v481, 7
        %v483 = vsub.s32 0, %v482
        %v484 = vrot.slane %v479, %v483
        %v494 = vunpack.c.l.b16 %v463
        %v495 = vunpack.c.l.b16 %v464
        %v496 = vunpack.c.l.b16 %v465
        %v497 = vunpack.c.l.b16 %v466
        %v498 = vunpack.c.l.b16 %v467
        %v499 = vunpack.c.l.b16 %v468
        %v500 = vunpack.c.l.b16 %v469
        %v501 = vunpack.c.l.b16 %v470
        %v502 = vpack.c.b16 %v495, %v494
        %v503 = vpack.c.b16 %v497, %v496
        %v504 = vpack.c.b16 %v499, %v498
        %v505 = vpack.c.b16 %v501, %v500
        %v514 = vunpack.c.l.b16 %v471
        %v515 = vunpack.c.l.b16 %v472
        %v516 = vunpack.c.l.b16 %v473
        %v517 = vunpack.c.l.b16 %v474
        %v518 = vunpack.c.l.b16 %v475
        %v519 = vunpack.c.l.b16 %v476
        %v520 = vunpack.c.l.b16 %v477
        %v521 = vunpack.c.l.b16 %v478
        %v522 = vpack.c.b16 %v515, %v514
        %v523 = vpack.c.b16 %v517, %v516
        %v524 = vpack.c.b16 %v519, %v518
        %v525 = vpack.c.b16 %v521, %v520
        %vm530 = vcmask 523264
        %v532 = vsel %vm530, %v502, 0
        %v535 = vsel %vm530, %v503, 0
        %v538 = vsel %vm530, %v504, 0
        %v541 = vsel %vm530, %v505, 0
        %543 = vmatprep.subr.bf16.mxu0 0
        %544 = vmatpush1.bf16.msra.mxu0 0
        %545 = vmatprep.subr.bf16.mxu0 0
        %546 = vmatpush1.bf16.msra.mxu0 0
        %547 = vmatprep.subr.bf16.mxu0 0
        %548 = vmatpush1.bf16.msra.mxu0 0
        %549 = vmatprep.subr.bf16.mxu0 0
        %550 = vmatpush1.bf16.msra.mxu0 0
        %551 = vmatprep.subr.bf16.mxu0 0
        %552 = vmatpush1.bf16.msra.mxu0 %v525
        %553 = vmatprep.subr.bf16.mxu0 0
        %554 = vmatpush1.bf16.msra.mxu0 %v524
        %555 = vmatprep.subr.bf16.mxu0 0
        %556 = vmatpush1.bf16.msra.mxu0 %v523
        %557 = vmatprep.subr.bf16.mxu0 0
        %558 = vmatpush1.bf16.msra.mxu0 %v522
        %559 = vmatprep.subr.bf16.mxu0 0
        %560 = vmatpush2.bf16.msra.mxu0 0
        %561 = vmatprep.subr.bf16.mxu0 0
        %562 = vmatpush2.bf16.msra.mxu0 0
        %563 = vmatprep.subr.bf16.mxu0 0
        %564 = vmatpush2.bf16.msra.mxu0 0
        %565 = vmatprep.subr.bf16.mxu0 0
        %566 = vmatpush2.bf16.msra.mxu0 0
        %567 = vmatprep.subr.bf16.mxu0 0
        %568 = vmatpush2.bf16.msra.mxu0 0
        %569 = vmatprep.subr.bf16.mxu0 0
        %570 = vmatpush2.bf16.msra.mxu0 0
        %571 = vmatprep.subr.bf16.mxu0 0
        %572 = vmatpush2.bf16.msra.mxu0 0
        %573 = vmatprep.subr.bf16.mxu0 0
        %574 = vmatpush2.bf16.msra.mxu0 0
        %575 = vmatprep.mubr.bf16.mxu0 0
        %576 = vmatmul.mubr.bf16.gmra.mxu0 %v532
        %v577 = vpop.f32.mrf.mxu0
        %v578 = vadd.f32 %v484, %v577
        %v579 = vpop.f32.mrf.mxu0
        %v580 = vpop.f32.mrf.mxu0
        %v581 = vadd.f32 %v484, %v580
        %v582 = vpop.f32.mrf.mxu0
        %583 = vmatprep.mubr.bf16.mxu0 0
        %584 = vmatmul.mubr.bf16.gmra.mxu0 %v535
        %v585 = vpop.f32.mrf.mxu0
        %v586 = vadd.f32 %v484, %v585
        %v587 = vpop.f32.mrf.mxu0
        %v588 = vpop.f32.mrf.mxu0
        %v589 = vadd.f32 %v484, %v588
        %v590 = vpop.f32.mrf.mxu0
        %591 = vmatprep.mubr.bf16.mxu0 0
        %592 = vmatmul.mubr.bf16.gmra.mxu0 %v538
        %v593 = vpop.f32.mrf.mxu0
        %v594 = vadd.f32 %v484, %v593
        %v595 = vpop.f32.mrf.mxu0
        %v596 = vpop.f32.mrf.mxu0
        %v597 = vadd.f32 %v484, %v596
        %v598 = vpop.f32.mrf.mxu0
        %599 = vmatprep.mubr.bf16.mxu0 0
        %600 = vmatmul.mubr.bf16.gmra.mxu0 %v541
        %v601 = vpop.f32.mrf.mxu0
        %v602 = vadd.f32 %v484, %v601
        %v603 = vpop.f32.mrf.mxu0
        %v604 = vpop.f32.mrf.mxu0
        %v605 = vadd.f32 %v484, %v604
        %v606 = vpop.f32.mrf.mxu0
        %607 = vdwg.mxu0
        %v608 = vld [vmem:[%s2] sm:$0xf]
        %v609 = vld [vmem:[%s2 + $0x4] sm:$0xf]
        %v610 = vld [vmem:[%s2 + $0x8] sm:$0xf]
        %v611 = vld [vmem:[%s2 + $0xc] sm:$0xf]
        %v612 = vld [vmem:[%s451] sm:$0xff]
        %v613 = vld [vmem:[%s455] sm:$0xff]
        %v614 = vpack.c.bf16 %v612, %v612
        %v619 = vunpack.c.l.b16 %v608
        %v620 = vunpack.c.l.b16 %v609
        %v621 = vunpack.c.l.b16 %v610
        %v622 = vunpack.c.l.b16 %v611
        %v623 = vpack.c.b16 %v620, %v619
        %v624 = vpack.c.b16 %v622, %v621
        %vm627 = vcmask 261120
        %v629 = vsel %vm627, %v614, 0
        %631 = vmatprep.subr.bf16.mxu0 0
        %632 = vmatpush1.bf16.msra.mxu0 0
        %633 = vmatprep.subr.bf16.mxu0 0
        %634 = vmatpush1.bf16.msra.mxu0 0
        %635 = vmatprep.subr.bf16.mxu0 0
        %636 = vmatpush1.bf16.msra.mxu0 0
        %637 = vmatprep.subr.bf16.mxu0 0
        %638 = vmatpush1.bf16.msra.mxu0 0
        %639 = vmatprep.subr.bf16.mxu0 0
        %640 = vmatpush1.bf16.msra.mxu0 0
        %641 = vmatprep.subr.bf16.mxu0 0
        %642 = vmatpush1.bf16.msra.mxu0 0
        %643 = vmatprep.subr.bf16.mxu0 0
        %644 = vmatpush1.bf16.msra.mxu0 %v624
        %645 = vmatprep.subr.bf16.mxu0 0
        %646 = vmatpush1.bf16.msra.mxu0 %v623
        %647 = vmatprep.subr.bf16.mxu0 0
        %648 = vmatpush2.bf16.msra.mxu0 0
        %649 = vmatprep.subr.bf16.mxu0 0
        %650 = vmatpush2.bf16.msra.mxu0 0
        %651 = vmatprep.subr.bf16.mxu0 0
        %652 = vmatpush2.bf16.msra.mxu0 0
        %653 = vmatprep.subr.bf16.mxu0 0
        %654 = vmatpush2.bf16.msra.mxu0 0
        %655 = vmatprep.subr.bf16.mxu0 0
        %656 = vmatpush2.bf16.msra.mxu0 0
        %657 = vmatprep.subr.bf16.mxu0 0
        %658 = vmatpush2.bf16.msra.mxu0 0
        %659 = vmatprep.subr.bf16.mxu0 0
        %660 = vmatpush2.bf16.msra.mxu0 0
        %661 = vmatprep.subr.bf16.mxu0 0
        %662 = vmatpush2.bf16.msra.mxu0 0
        %663 = vmatprep.mubr.bf16.mxu0 0
        %664 = vmatmul.mubr.bf16.gmra.mxu0 %v629
        %v665 = vpop.f32.mrf.mxu0
        %v666 = vadd.f32 0.0, %v665
        %v667 = vpop.f32.mrf.mxu0
        %v668 = vpop.f32.mrf.mxu0
        %v669 = vpop.f32.mrf.mxu0
        %670 = vdwg.mxu0
        %v671 = vadd.f32 %v578, %v666
        %v672 = vmul.f32 %v671, 0.5
        %v673 = vtanh.pop %v672
        %v674 = vadd.f32 %v673, 1.0
        %v675 = vmul.f32 %v674, 0.5
        %v676 = vtanh.pop %v671
        %678 = vrot.lane.b32.xlu0 %v613, 32
        %v679 = vpop.permute.xlu0 %678
        %v681 = vmul.f32 %v675, %v679
        %683 = vrot.lane.b32.xlu0 %v676, 64
        %v684 = vpop.permute.xlu0 %683
        %v686 = vmul.f32 %v675, %v684
        %688 = vrot.lane.b32.xlu0 %v686, 32
        %v689 = vpop.permute.xlu0 %688
        %v691 = vadd.f32 %v681, %v689
        %v692 = vtanh.pop %v691
        %694 = vrot.lane.b32.xlu0 %v692, 64
        %v695 = vpop.permute.xlu0 %694
        %v697 = vmul.f32 %v675, %v695
        %699 = vrot.lane.b32.xlu0 %v697, 32
        %v700 = vpop.permute.xlu0 %699
        %702 = vst.msk [vmem:[#allocation2] sm:$0xff] %vm627, %v700
        %703 = vst.msk [vmem:[#allocation3 + $0x38] sm:$0xff] %vm627, %v700
        %v704 = vpack.c.bf16 %v697, %v697
        %706 = vrot.lane.b32.xlu0 %v704, 32
        %v707 = vpop.permute.xlu0 %706
        %v709 = vsel %vm627, %v707, 0
        %711 = vmatprep.subr.bf16.mxu0 0
        %712 = vmatpush1.bf16.msra.mxu0 0
        %713 = vmatprep.subr.bf16.mxu0 0
        %714 = vmatpush1.bf16.msra.mxu0 0
        %715 = vmatprep.subr.bf16.mxu0 0
        %716 = vmatpush1.bf16.msra.mxu0 0
        %717 = vmatprep.subr.bf16.mxu0 0
        %718 = vmatpush1.bf16.msra.mxu0 0
        %719 = vmatprep.subr.bf16.mxu0 0
        %720 = vmatpush1.bf16.msra.mxu0 0
        %721 = vmatprep.subr.bf16.mxu0 0
        %722 = vmatpush1.bf16.msra.mxu0 0
        %723 = vmatprep.subr.bf16.mxu0 0
        %724 = vmatpush1.bf16.msra.mxu0 %v624
        %725 = vmatprep.subr.bf16.mxu0 0
        %726 = vmatpush1.bf16.msra.mxu0 %v623
        %727 = vmatprep.subr.bf16.mxu0 0
        %728 = vmatpush2.bf16.msra.mxu0 0
        %729 = vmatprep.subr.bf16.mxu0 0
        %730 = vmatpush2.bf16.msra.mxu0 0
        %731 = vmatprep.subr.bf16.mxu0 0
        %732 = vmatpush2.bf16.msra.mxu0 0
        %733 = vmatprep.subr.bf16.mxu0 0
        %734 = vmatpush2.bf16.msra.mxu0 0
        %735 = vmatprep.subr.bf16.mxu0 0
        %736 = vmatpush2.bf16.msra.mxu0 0
        %737 = vmatprep.subr.bf16.mxu0 0
        %738 = vmatpush2.bf16.msra.mxu0 0
        %739 = vmatprep.subr.bf16.mxu0 0
        %740 = vmatpush2.bf16.msra.mxu0 0
        %741 = vmatprep.subr.bf16.mxu0 0
        %742 = vmatpush2.bf16.msra.mxu0 0
        %743 = vmatprep.mubr.bf16.mxu0 0
        %744 = vmatmul.mubr.bf16.gmra.mxu0 %v709
        %v745 = vpop.f32.mrf.mxu0
        %v746 = vadd.f32 0.0, %v745
        %v747 = vpop.f32.mrf.mxu0
        %v748 = vpop.f32.mrf.mxu0
        %v749 = vpop.f32.mrf.mxu0
        %750 = vdwg.mxu0
        %v751 = vadd.f32 %v581, %v746
        %v752 = vmul.f32 %v751, 0.5
        %v753 = vtanh.pop %v752
        %v754 = vadd.f32 %v753, 1.0
        %v755 = vmul.f32 %v754, 0.5
        %v756 = vtanh.pop %v751
        %v757 = vmul.f32 %v755, %v691
        %759 = vrot.lane.b32.xlu0 %v756, 64
        %v760 = vpop.permute.xlu0 %759
        %v762 = vmul.f32 %v755, %v760
        %764 = vrot.lane.b32.xlu0 %v762, 32
        %v765 = vpop.permute.xlu0 %764
        %v767 = vadd.f32 %v757, %v765
        %v768 = vtanh.pop %v767
        %770 = vrot.lane.b32.xlu0 %v768, 64
        %v771 = vpop.permute.xlu0 %770
        %v773 = vmul.f32 %v755, %v771
        %775 = vrot.lane.b32.xlu0 %v773, 32
        %v776 = vpop.permute.xlu0 %775
        %778 = vst.msk [vmem:[#allocation2 + $0x8] sm:$0xff] %vm627, %v776
        %779 = vst.msk [vmem:[#allocation3 + $0x30] sm:$0xff] %vm627, %v776
        %v780 = vpack.c.bf16 %v773, %v773
        %782 = vrot.lane.b32.xlu0 %v780, 32
        %v783 = vpop.permute.xlu0 %782
        %v785 = vsel %vm627, %v783, 0
        %787 = vmatprep.subr.bf16.mxu0 0
        %788 = vmatpush1.bf16.msra.mxu0 0
        %789 = vmatprep.subr.bf16.mxu0 0
        %790 = vmatpush1.bf16.msra.mxu0 0
        %791 = vmatprep.subr.bf16.mxu0 0
        %792 = vmatpush1.bf16.msra.mxu0 0
        %793 = vmatprep.subr.bf16.mxu0 0
        %794 = vmatpush1.bf16.msra.mxu0 0
        %795 = vmatprep.subr.bf16.mxu0 0
        %796 = vmatpush1.bf16.msra.mxu0 0
        %797 = vmatprep.subr.bf16.mxu0 0
        %798 = vmatpush1.bf16.msra.mxu0 0
        %799 = vmatprep.subr.bf16.mxu0 0
        %800 = vmatpush1.bf16.msra.mxu0 %v624
        %801 = vmatprep.subr.bf16.mxu0 0
        %802 = vmatpush1.bf16.msra.mxu0 %v623
        %803 = vmatprep.subr.bf16.mxu0 0
        %804 = vmatpush2.bf16.msra.mxu0 0
        %805 = vmatprep.subr.bf16.mxu0 0
        %806 = vmatpush2.bf16.msra.mxu0 0
        %807 = vmatprep.subr.bf16.mxu0 0
        %808 = vmatpush2.bf16.msra.mxu0 0
        %809 = vmatprep.subr.bf16.mxu0 0
        %810 = vmatpush2.bf16.msra.mxu0 0
        %811 = vmatprep.subr.bf16.mxu0 0
        %812 = vmatpush2.bf16.msra.mxu0 0
        %813 = vmatprep.subr.bf16.mxu0 0
        %814 = vmatpush2.bf16.msra.mxu0 0
        %815 = vmatprep.subr.bf16.mxu0 0
        %816 = vmatpush2.bf16.msra.mxu0 0
        %817 = vmatprep.subr.bf16.mxu0 0
        %818 = vmatpush2.bf16.msra.mxu0 0
        %819 = vmatprep.mubr.bf16.mxu0 0
        %820 = vmatmul.mubr.bf16.gmra.mxu0 %v785
        %v821 = vpop.f32.mrf.mxu0
        %v822 = vadd.f32 0.0, %v821
        %v823 = vpop.f32.mrf.mxu0
        %v824 = vpop.f32.mrf.mxu0
        %v825 = vpop.f32.mrf.mxu0
        %826 = vdwg.mxu0
        %v827 = vadd.f32 %v586, %v822
        %v828 = vmul.f32 %v827, 0.5
        %v829 = vtanh.pop %v828
        %v830 = vadd.f32 %v829, 1.0
        %v831 = vmul.f32 %v830, 0.5
        %v832 = vtanh.pop %v827
        %v833 = vmul.f32 %v831, %v767
        %835 = vrot.lane.b32.xlu0 %v832, 64
        %v836 = vpop.permute.xlu0 %835
        %v838 = vmul.f32 %v831, %v836
        %840 = vrot.lane.b32.xlu0 %v838, 32
        %v841 = vpop.permute.xlu0 %840
        %v843 = vadd.f32 %v833, %v841
        %v844 = vtanh.pop %v843
        %846 = vrot.lane.b32.xlu0 %v844, 64
        %v847 = vpop.permute.xlu0 %846
        %v849 = vmul.f32 %v831, %v847
        %851 = vrot.lane.b32.xlu0 %v849, 32
        %v852 = vpop.permute.xlu0 %851
        %854 = vst.msk [vmem:[#allocation2 + $0x10] sm:$0xff] %vm627, %v852
        %855 = vst.msk [vmem:[#allocation3 + $0x28] sm:$0xff] %vm627, %v852
        %v856 = vpack.c.bf16 %v849, %v849
        %858 = vrot.lane.b32.xlu0 %v856, 32
        %v859 = vpop.permute.xlu0 %858
        %v861 = vsel %vm627, %v859, 0
        %863 = vmatprep.subr.bf16.mxu0 0
        %864 = vmatpush1.bf16.msra.mxu0 0
        %865 = vmatprep.subr.bf16.mxu0 0
        %866 = vmatpush1.bf16.msra.mxu0 0
        %867 = vmatprep.subr.bf16.mxu0 0
        %868 = vmatpush1.bf16.msra.mxu0 0
        %869 = vmatprep.subr.bf16.mxu0 0
        %870 = vmatpush1.bf16.msra.mxu0 0
        %871 = vmatprep.subr.bf16.mxu0 0
        %872 = vmatpush1.bf16.msra.mxu0 0
        %873 = vmatprep.subr.bf16.mxu0 0
        %874 = vmatpush1.bf16.msra.mxu0 0
        %875 = vmatprep.subr.bf16.mxu0 0
        %876 = vmatpush1.bf16.msra.mxu0 %v624
        %877 = vmatprep.subr.bf16.mxu0 0
        %878 = vmatpush1.bf16.msra.mxu0 %v623
        %879 = vmatprep.subr.bf16.mxu0 0
        %880 = vmatpush2.bf16.msra.mxu0 0
        %881 = vmatprep.subr.bf16.mxu0 0
        %882 = vmatpush2.bf16.msra.mxu0 0
        %883 = vmatprep.subr.bf16.mxu0 0
        %884 = vmatpush2.bf16.msra.mxu0 0
        %885 = vmatprep.subr.bf16.mxu0 0
        %886 = vmatpush2.bf16.msra.mxu0 0
        %887 = vmatprep.subr.bf16.mxu0 0
        %888 = vmatpush2.bf16.msra.mxu0 0
        %889 = vmatprep.subr.bf16.mxu0 0
        %890 = vmatpush2.bf16.msra.mxu0 0
        %891 = vmatprep.subr.bf16.mxu0 0
        %892 = vmatpush2.bf16.msra.mxu0 0
        %893 = vmatprep.subr.bf16.mxu0 0
        %894 = vmatpush2.bf16.msra.mxu0 0
        %895 = vmatprep.mubr.bf16.mxu0 0
        %896 = vmatmul.mubr.bf16.gmra.mxu0 %v861
        %v897 = vpop.f32.mrf.mxu0
        %v898 = vadd.f32 0.0, %v897
        %v899 = vpop.f32.mrf.mxu0
        %v900 = vpop.f32.mrf.mxu0
        %v901 = vpop.f32.mrf.mxu0
        %902 = vdwg.mxu0
        %v903 = vadd.f32 %v589, %v898
        %v904 = vmul.f32 %v903, 0.5
        %v905 = vtanh.pop %v904
        %v906 = vadd.f32 %v905, 1.0
        %v907 = vmul.f32 %v906, 0.5
        %v908 = vtanh.pop %v903
        %v909 = vmul.f32 %v907, %v843
        %911 = vrot.lane.b32.xlu0 %v908, 64
        %v912 = vpop.permute.xlu0 %911
        %v914 = vmul.f32 %v907, %v912
        %916 = vrot.lane.b32.xlu0 %v914, 32
        %v917 = vpop.permute.xlu0 %916
        %v919 = vadd.f32 %v909, %v917
        %v920 = vtanh.pop %v919
        %922 = vrot.lane.b32.xlu0 %v920, 64
        %v923 = vpop.permute.xlu0 %922
        %v925 = vmul.f32 %v907, %v923
        %927 = vrot.lane.b32.xlu0 %v925, 32
        %v928 = vpop.permute.xlu0 %927
        %930 = vst.msk [vmem:[#allocation2 + $0x18] sm:$0xff] %vm627, %v928
        %931 = vst.msk [vmem:[#allocation3 + $0x20] sm:$0xff] %vm627, %v928
        %v932 = vpack.c.bf16 %v925, %v925
        %934 = vrot.lane.b32.xlu0 %v932, 32
        %v935 = vpop.permute.xlu0 %934
        %v937 = vsel %vm627, %v935, 0
        %939 = vmatprep.subr.bf16.mxu0 0
        %940 = vmatpush1.bf16.msra.mxu0 0
        %941 = vmatprep.subr.bf16.mxu0 0
        %942 = vmatpush1.bf16.msra.mxu0 0
        %943 = vmatprep.subr.bf16.mxu0 0
        %944 = vmatpush1.bf16.msra.mxu0 0
        %945 = vmatprep.subr.bf16.mxu0 0
        %946 = vmatpush1.bf16.msra.mxu0 0
        %947 = vmatprep.subr.bf16.mxu0 0
        %948 = vmatpush1.bf16.msra.mxu0 0
        %949 = vmatprep.subr.bf16.mxu0 0
        %950 = vmatpush1.bf16.msra.mxu0 0
        %951 = vmatprep.subr.bf16.mxu0 0
        %952 = vmatpush1.bf16.msra.mxu0 %v624
        %953 = vmatprep.subr.bf16.mxu0 0
        %954 = vmatpush1.bf16.msra.mxu0 %v623
        %955 = vmatprep.subr.bf16.mxu0 0
        %956 = vmatpush2.bf16.msra.mxu0 0
        %957 = vmatprep.subr.bf16.mxu0 0
        %958 = vmatpush2.bf16.msra.mxu0 0
        %959 = vmatprep.subr.bf16.mxu0 0
        %960 = vmatpush2.bf16.msra.mxu0 0
        %961 = vmatprep.subr.bf16.mxu0 0
        %962 = vmatpush2.bf16.msra.mxu0 0
        %963 = vmatprep.subr.bf16.mxu0 0
        %964 = vmatpush2.bf16.msra.mxu0 0
        %965 = vmatprep.subr.bf16.mxu0 0
        %966 = vmatpush2.bf16.msra.mxu0 0
        %967 = vmatprep.subr.bf16.mxu0 0
        %968 = vmatpush2.bf16.msra.mxu0 0
        %969 = vmatprep.subr.bf16.mxu0 0
        %970 = vmatpush2.bf16.msra.mxu0 0
        %971 = vmatprep.mubr.bf16.mxu0 0
        %972 = vmatmul.mubr.bf16.gmra.mxu0 %v937
        %v973 = vpop.f32.mrf.mxu0
        %v974 = vadd.f32 0.0, %v973
        %v975 = vpop.f32.mrf.mxu0
        %v976 = vpop.f32.mrf.mxu0
        %v977 = vpop.f32.mrf.mxu0
        %978 = vdwg.mxu0
        %v979 = vadd.f32 %v594, %v974
        %v980 = vmul.f32 %v979, 0.5
        %v981 = vtanh.pop %v980
        %v982 = vadd.f32 %v981, 1.0
        %v983 = vmul.f32 %v982, 0.5
        %v984 = vtanh.pop %v979
        %v985 = vmul.f32 %v983, %v919
        %987 = vrot.lane.b32.xlu0 %v984, 64
        %v988 = vpop.permute.xlu0 %987
        %v990 = vmul.f32 %v983, %v988
        %992 = vrot.lane.b32.xlu0 %v990, 32
        %v993 = vpop.permute.xlu0 %992
        %v995 = vadd.f32 %v985, %v993
        %v996 = vtanh.pop %v995
        %998 = vrot.lane.b32.xlu0 %v996, 64
        %v999 = vpop.permute.xlu0 %998
        %v1001 = vmul.f32 %v983, %v999
        %1003 = vrot.lane.b32.xlu0 %v1001, 32
        %v1004 = vpop.permute.xlu0 %1003
        %1006 = vst.msk [vmem:[#allocation2 + $0x20] sm:$0xff] %vm627, %v1004
        %1007 = vst.msk [vmem:[#allocation3 + $0x18] sm:$0xff] %vm627, %v1004
        %v1008 = vpack.c.bf16 %v1001, %v1001
        %1010 = vrot.lane.b32.xlu0 %v1008, 32
        %v1011 = vpop.permute.xlu0 %1010
        %v1013 = vsel %vm627, %v1011, 0
        %1015 = vmatprep.subr.bf16.mxu0 0
        %1016 = vmatpush1.bf16.msra.mxu0 0
        %1017 = vmatprep.subr.bf16.mxu0 0
        %1018 = vmatpush1.bf16.msra.mxu0 0
        %1019 = vmatprep.subr.bf16.mxu0 0
        %1020 = vmatpush1.bf16.msra.mxu0 0
        %1021 = vmatprep.subr.bf16.mxu0 0
        %1022 = vmatpush1.bf16.msra.mxu0 0
        %1023 = vmatprep.subr.bf16.mxu0 0
        %1024 = vmatpush1.bf16.msra.mxu0 0
        %1025 = vmatprep.subr.bf16.mxu0 0
        %1026 = vmatpush1.bf16.msra.mxu0 0
        %1027 = vmatprep.subr.bf16.mxu0 0
        %1028 = vmatpush1.bf16.msra.mxu0 %v624
        %1029 = vmatprep.subr.bf16.mxu0 0
        %1030 = vmatpush1.bf16.msra.mxu0 %v623
        %1031 = vmatprep.subr.bf16.mxu0 0
        %1032 = vmatpush2.bf16.msra.mxu0 0
        %1033 = vmatprep.subr.bf16.mxu0 0
        %1034 = vmatpush2.bf16.msra.mxu0 0
        %1035 = vmatprep.subr.bf16.mxu0 0
        %1036 = vmatpush2.bf16.msra.mxu0 0
        %1037 = vmatprep.subr.bf16.mxu0 0
        %1038 = vmatpush2.bf16.msra.mxu0 0
        %1039 = vmatprep.subr.bf16.mxu0 0
        %1040 = vmatpush2.bf16.msra.mxu0 0
        %1041 = vmatprep.subr.bf16.mxu0 0
        %1042 = vmatpush2.bf16.msra.mxu0 0
        %1043 = vmatprep.subr.bf16.mxu0 0
        %1044 = vmatpush2.bf16.msra.mxu0 0
        %1045 = vmatprep.subr.bf16.mxu0 0
        %1046 = vmatpush2.bf16.msra.mxu0 0
        %1047 = vmatprep.mubr.bf16.mxu0 0
        %1048 = vmatmul.mubr.bf16.gmra.mxu0 %v1013
        %v1049 = vpop.f32.mrf.mxu0
        %v1050 = vadd.f32 0.0, %v1049
        %v1051 = vpop.f32.mrf.mxu0
        %v1052 = vpop.f32.mrf.mxu0
        %v1053 = vpop.f32.mrf.mxu0
        %1054 = vdwg.mxu0
        %v1055 = vadd.f32 %v597, %v1050
        %v1056 = vmul.f32 %v1055, 0.5
        %v1057 = vtanh.pop %v1056
        %v1058 = vadd.f32 %v1057, 1.0
        %v1059 = vmul.f32 %v1058, 0.5
        %v1060 = vtanh.pop %v1055
        %v1061 = vmul.f32 %v1059, %v995
        %1063 = vrot.lane.b32.xlu0 %v1060, 64
        %v1064 = vpop.permute.xlu0 %1063
        %v1066 = vmul.f32 %v1059, %v1064
        %1068 = vrot.lane.b32.xlu0 %v1066, 32
        %v1069 = vpop.permute.xlu0 %1068
        %v1071 = vadd.f32 %v1061, %v1069
        %v1072 = vtanh.pop %v1071
        %1074 = vrot.lane.b32.xlu0 %v1072, 64
        %v1075 = vpop.permute.xlu0 %1074
        %v1077 = vmul.f32 %v1059, %v1075
        %1079 = vrot.lane.b32.xlu0 %v1077, 32
        %v1080 = vpop.permute.xlu0 %1079
        %1082 = vst.msk [vmem:[#allocation2 + $0x28] sm:$0xff] %vm627, %v1080
        %1083 = vst.msk [vmem:[#allocation3 + $0x10] sm:$0xff] %vm627, %v1080
        %v1084 = vpack.c.bf16 %v1077, %v1077
        %1086 = vrot.lane.b32.xlu0 %v1084, 32
        %v1087 = vpop.permute.xlu0 %1086
        %v1089 = vsel %vm627, %v1087, 0
        %1091 = vmatprep.subr.bf16.mxu0 0
        %1092 = vmatpush1.bf16.msra.mxu0 0
        %1093 = vmatprep.subr.bf16.mxu0 0
        %1094 = vmatpush1.bf16.msra.mxu0 0
        %1095 = vmatprep.subr.bf16.mxu0 0
        %1096 = vmatpush1.bf16.msra.mxu0 0
        %1097 = vmatprep.subr.bf16.mxu0 0
        %1098 = vmatpush1.bf16.msra.mxu0 0
        %1099 = vmatprep.subr.bf16.mxu0 0
        %1100 = vmatpush1.bf16.msra.mxu0 0
        %1101 = vmatprep.subr.bf16.mxu0 0
        %1102 = vmatpush1.bf16.msra.mxu0 0
        %1103 = vmatprep.subr.bf16.mxu0 0
        %1104 = vmatpush1.bf16.msra.mxu0 %v624
        %1105 = vmatprep.subr.bf16.mxu0 0
        %1106 = vmatpush1.bf16.msra.mxu0 %v623
        %1107 = vmatprep.subr.bf16.mxu0 0
        %1108 = vmatpush2.bf16.msra.mxu0 0
        %1109 = vmatprep.subr.bf16.mxu0 0
        %1110 = vmatpush2.bf16.msra.mxu0 0
        %1111 = vmatprep.subr.bf16.mxu0 0
        %1112 = vmatpush2.bf16.msra.mxu0 0
        %1113 = vmatprep.subr.bf16.mxu0 0
        %1114 = vmatpush2.bf16.msra.mxu0 0
        %1115 = vmatprep.subr.bf16.mxu0 0
        %1116 = vmatpush2.bf16.msra.mxu0 0
        %1117 = vmatprep.subr.bf16.mxu0 0
        %1118 = vmatpush2.bf16.msra.mxu0 0
        %1119 = vmatprep.subr.bf16.mxu0 0
        %1120 = vmatpush2.bf16.msra.mxu0 0
        %1121 = vmatprep.subr.bf16.mxu0 0
        %1122 = vmatpush2.bf16.msra.mxu0 0
        %1123 = vmatprep.mubr.bf16.mxu0 0
        %1124 = vmatmul.mubr.bf16.gmra.mxu0 %v1089
        %v1125 = vpop.f32.mrf.mxu0
        %v1126 = vadd.f32 0.0, %v1125
        %v1127 = vpop.f32.mrf.mxu0
        %v1128 = vpop.f32.mrf.mxu0
        %v1129 = vpop.f32.mrf.mxu0
        %1130 = vdwg.mxu0
        %v1131 = vadd.f32 %v602, %v1126
        %v1132 = vmul.f32 %v1131, 0.5
        %v1133 = vtanh.pop %v1132
        %v1134 = vadd.f32 %v1133, 1.0
        %v1135 = vmul.f32 %v1134, 0.5
        %v1136 = vtanh.pop %v1131
        %v1137 = vmul.f32 %v1135, %v1071
        %1139 = vrot.lane.b32.xlu0 %v1136, 64
        %v1140 = vpop.permute.xlu0 %1139
        %v1142 = vmul.f32 %v1135, %v1140
        %1144 = vrot.lane.b32.xlu0 %v1142, 32
        %v1145 = vpop.permute.xlu0 %1144
        %v1147 = vadd.f32 %v1137, %v1145
        %v1148 = vtanh.pop %v1147
        %1150 = vrot.lane.b32.xlu0 %v1148, 64
        %v1151 = vpop.permute.xlu0 %1150
        %v1153 = vmul.f32 %v1135, %v1151
        %1155 = vrot.lane.b32.xlu0 %v1153, 32
        %v1156 = vpop.permute.xlu0 %1155
        %1158 = vst.msk [vmem:[#allocation2 + $0x30] sm:$0xff] %vm627, %v1156
        %1159 = vst.msk [vmem:[#allocation3 + $0x8] sm:$0xff] %vm627, %v1156
        %v1160 = vpack.c.bf16 %v1153, %v1153
        %1162 = vrot.lane.b32.xlu0 %v1160, 32
        %v1163 = vpop.permute.xlu0 %1162
        %v1165 = vsel %vm627, %v1163, 0
        %1167 = vmatprep.subr.bf16.mxu0 0
        %1168 = vmatpush1.bf16.msra.mxu0 0
        %1169 = vmatprep.subr.bf16.mxu0 0
        %1170 = vmatpush1.bf16.msra.mxu0 0
        %1171 = vmatprep.subr.bf16.mxu0 0
        %1172 = vmatpush1.bf16.msra.mxu0 0
        %1173 = vmatprep.subr.bf16.mxu0 0
        %1174 = vmatpush1.bf16.msra.mxu0 0
        %1175 = vmatprep.subr.bf16.mxu0 0
        %1176 = vmatpush1.bf16.msra.mxu0 0
        %1177 = vmatprep.subr.bf16.mxu0 0
        %1178 = vmatpush1.bf16.msra.mxu0 0
        %1179 = vmatprep.subr.bf16.mxu0 0
        %1180 = vmatpush1.bf16.msra.mxu0 %v624
        %1181 = vmatprep.subr.bf16.mxu0 0
        %1182 = vmatpush1.bf16.msra.mxu0 %v623
        %1183 = vmatprep.subr.bf16.mxu0 0
        %1184 = vmatpush2.bf16.msra.mxu0 0
        %1185 = vmatprep.subr.bf16.mxu0 0
        %1186 = vmatpush2.bf16.msra.mxu0 0
        %1187 = vmatprep.subr.bf16.mxu0 0
        %1188 = vmatpush2.bf16.msra.mxu0 0
        %1189 = vmatprep.subr.bf16.mxu0 0
        %1190 = vmatpush2.bf16.msra.mxu0 0
        %1191 = vmatprep.subr.bf16.mxu0 0
        %1192 = vmatpush2.bf16.msra.mxu0 0
        %1193 = vmatprep.subr.bf16.mxu0 0
        %1194 = vmatpush2.bf16.msra.mxu0 0
        %1195 = vmatprep.subr.bf16.mxu0 0
        %1196 = vmatpush2.bf16.msra.mxu0 0
        %1197 = vmatprep.subr.bf16.mxu0 0
        %1198 = vmatpush2.bf16.msra.mxu0 0
        %1199 = vmatprep.mubr.bf16.mxu0 0
        %1200 = vmatmul.mubr.bf16.gmra.mxu0 %v1165
        %v1201 = vpop.f32.mrf.mxu0
        %v1202 = vadd.f32 0.0, %v1201
        %v1203 = vpop.f32.mrf.mxu0
        %v1204 = vpop.f32.mrf.mxu0
        %v1205 = vpop.f32.mrf.mxu0
        %1206 = vdwg.mxu0
        %v1207 = vadd.f32 %v605, %v1202
        %v1208 = vmul.f32 %v1207, 0.5
        %v1209 = vtanh.pop %v1208
        %v1210 = vadd.f32 %v1209, 1.0
        %v1211 = vmul.f32 %v1210, 0.5
        %v1212 = vtanh.pop %v1207
        %v1213 = vmul.f32 %v1211, %v1147
        %1215 = vrot.lane.b32.xlu0 %v1212, 64
        %v1216 = vpop.permute.xlu0 %1215
        %v1218 = vmul.f32 %v1211, %v1216
        %1220 = vrot.lane.b32.xlu0 %v1218, 32
        %v1221 = vpop.permute.xlu0 %1220
        %v1223 = vadd.f32 %v1213, %v1221
        %v1224 = vtanh.pop %v1223
        %1226 = vrot.lane.b32.xlu0 %v1224, 64
        %v1227 = vpop.permute.xlu0 %1226
        %v1229 = vmul.f32 %v1211, %v1227
        %1231 = vrot.lane.b32.xlu0 %v1229, 32
        %v1232 = vpop.permute.xlu0 %1231
        %1234 = vst.msk [vmem:[#allocation2 + $0x38] sm:$0xff] %vm627, %v1232
        %1235 = vst.msk [vmem:[#allocation3] sm:$0xff] %vm627, %v1232
        %v1236 = vld [vmem:[#allocation2] sm:$0xff]
        %v1237 = vld [vmem:[#allocation2 + $0x8] sm:$0xff]
        %v1238 = vld [vmem:[#allocation2 + $0x10] sm:$0xff]
        %v1239 = vld [vmem:[#allocation2 + $0x18] sm:$0xff]
        %v1240 = vld [vmem:[#allocation2 + $0x20] sm:$0xff]
        %v1241 = vld [vmem:[#allocation2 + $0x28] sm:$0xff]
        %v1242 = vld [vmem:[#allocation2 + $0x30] sm:$0xff]
        %v1243 = vld [vmem:[#allocation2 + $0x38] sm:$0xff]
        %v1244 = vld [vmem:[%s6] sm:$0xff]
        %v1245 = vld [vmem:[%s6 + $0x8] sm:$0xff]
        %v1246 = vld [vmem:[%s6 + $0x10] sm:$0xff]
        %v1247 = vld [vmem:[%s6 + $0x18] sm:$0xff]
        %v1248 = vld [vmem:[#allocation3] sm:$0xff]
        %v1249 = vld [vmem:[#allocation3 + $0x8] sm:$0xff]
        %v1250 = vld [vmem:[#allocation3 + $0x10] sm:$0xff]
        %v1251 = vld [vmem:[#allocation3 + $0x18] sm:$0xff]
        %v1252 = vld [vmem:[#allocation3 + $0x20] sm:$0xff]
        %v1253 = vld [vmem:[#allocation3 + $0x28] sm:$0xff]
        %v1254 = vld [vmem:[#allocation3 + $0x30] sm:$0xff]
        %v1255 = vld [vmem:[#allocation3 + $0x38] sm:$0xff]
        %v1256 = vld [vmem:[%s7] sm:$0xff]
        %v1257 = vld [vmem:[%s7 + $0x8] sm:$0xff]
        %v1258 = vld [vmem:[%s7 + $0x10] sm:$0xff]
        %v1259 = vld [vmem:[%s7 + $0x18] sm:$0xff]
        %v1261 = vsel %vm627, %v1248, 0
        %v1264 = vsel %vm627, %v1249, 0
        %v1267 = vsel %vm627, %v1250, 0
        %v1270 = vsel %vm627, %v1251, 0
        %v1273 = vsel %vm627, %v1252, 0
        %v1276 = vsel %vm627, %v1253, 0
        %v1279 = vsel %vm627, %v1254, 0
        %v1282 = vsel %vm627, %v1255, 0
        %1284 = vmatprep.subr.mxu0 0.0
        %1285 = vmatpush1.msra.mxu0 0.0
        %1286 = vmatprep.subr.mxu0 0.0
        %1287 = vmatpush1.msra.mxu0 0.0
        %1288 = vmatprep.subr.mxu0 0.0
        %1289 = vmatpush1.msra.mxu0 0.0
        %1290 = vmatprep.subr.mxu0 0.0
        %1291 = vmatpush1.msra.mxu0 0.0
        %1292 = vmatprep.subr.mxu0 0.0
        %1293 = vmatpush1.msra.mxu0 0.0
        %1294 = vmatprep.subr.mxu0 0.0
        %1295 = vmatpush1.msra.mxu0 0.0
        %1296 = vmatprep.subr.mxu0 0.0
        %1297 = vmatpush1.msra.mxu0 0.0
        %1298 = vmatprep.subr.mxu0 0.0
        %1299 = vmatpush1.msra.mxu0 0.0
        %1300 = vmatprep.subr.mxu0 0.0
        %1301 = vmatpush1.msra.mxu0 0.0
        %1302 = vmatprep.subr.mxu0 0.0
        %1303 = vmatpush1.msra.mxu0 0.0
        %1304 = vmatprep.subr.mxu0 0.0
        %1305 = vmatpush1.msra.mxu0 0.0
        %1306 = vmatprep.subr.mxu0 0.0
        %1307 = vmatpush1.msra.mxu0 0.0
        %1308 = vmatprep.subr.mxu0 0.0
        %1309 = vmatpush1.msra.mxu0 %v1259
        %1310 = vmatprep.subr.mxu0 0.0
        %1311 = vmatpush1.msra.mxu0 %v1258
        %1312 = vmatprep.subr.mxu0 0.0
        %1313 = vmatpush1.msra.mxu0 %v1257
        %1314 = vmatprep.subr.mxu0 0.0
        %1315 = vmatpush1.msra.mxu0 %v1256
        %1316 = vmatprep.subr.mxu0 0.0
        %1317 = vmatpush2.msra.mxu0 0.0
        %1318 = vmatprep.subr.mxu0 0.0
        %1319 = vmatpush2.msra.mxu0 0.0
        %1320 = vmatprep.subr.mxu0 0.0
        %1321 = vmatpush2.msra.mxu0 0.0
        %1322 = vmatprep.subr.mxu0 0.0
        %1323 = vmatpush2.msra.mxu0 0.0
        %1324 = vmatprep.subr.mxu0 0.0
        %1325 = vmatpush2.msra.mxu0 0.0
        %1326 = vmatprep.subr.mxu0 0.0
        %1327 = vmatpush2.msra.mxu0 0.0
        %1328 = vmatprep.subr.mxu0 0.0
        %1329 = vmatpush2.msra.mxu0 0.0
        %1330 = vmatprep.subr.mxu0 0.0
        %1331 = vmatpush2.msra.mxu0 0.0
        %1332 = vmatprep.subr.mxu0 0.0
        %1333 = vmatpush2.msra.mxu0 0.0
        %1334 = vmatprep.subr.mxu0 0.0
        %1335 = vmatpush2.msra.mxu0 0.0
        %1336 = vmatprep.subr.mxu0 0.0
        %1337 = vmatpush2.msra.mxu0 0.0
        %1338 = vmatprep.subr.mxu0 0.0
        %1339 = vmatpush2.msra.mxu0 0.0
        %1340 = vmatprep.subr.mxu0 0.0
        %1341 = vmatpush2.msra.mxu0 0.0
        %1342 = vmatprep.subr.mxu0 0.0
        %1343 = vmatpush2.msra.mxu0 0.0
        %1344 = vmatprep.subr.mxu0 0.0
        %1345 = vmatpush2.msra.mxu0 0.0
        %1346 = vmatprep.subr.mxu0 0.0
        %1347 = vmatpush2.msra.mxu0 0.0
        %1348 = vmatprep.mubr.f32.mxu0 0.0
        %1349 = vmatmul.mubr.f32.gmra.mxu0 %v1261
        %v1350 = vpop.f32.mrf.mxu0
        %v1351 = vadd.f32 0.0, %v1350
        %v1352 = vpop.f32.mrf.mxu0
        %1353 = vmatprep.mubr.f32.mxu0 0.0
        %1354 = vmatmul.mubr.f32.gmra.mxu0 %v1264
        %v1355 = vpop.f32.mrf.mxu0
        %v1356 = vadd.f32 0.0, %v1355
        %v1357 = vpop.f32.mrf.mxu0
        %1358 = vmatprep.mubr.f32.mxu0 0.0
        %1359 = vmatmul.mubr.f32.gmra.mxu0 %v1267
        %v1360 = vpop.f32.mrf.mxu0
        %v1361 = vadd.f32 0.0, %v1360
        %v1362 = vpop.f32.mrf.mxu0
        %1363 = vmatprep.mubr.f32.mxu0 0.0
        %1364 = vmatmul.mubr.f32.gmra.mxu0 %v1270
        %v1365 = vpop.f32.mrf.mxu0
        %v1366 = vadd.f32 0.0, %v1365
        %v1367 = vpop.f32.mrf.mxu0
        %1368 = vmatprep.mubr.f32.mxu0 0.0
        %1369 = vmatmul.mubr.f32.gmra.mxu0 %v1273
        %v1370 = vpop.f32.mrf.mxu0
        %v1371 = vadd.f32 0.0, %v1370
        %v1372 = vpop.f32.mrf.mxu0
        %1373 = vmatprep.mubr.f32.mxu0 0.0
        %1374 = vmatmul.mubr.f32.gmra.mxu0 %v1276
        %v1375 = vpop.f32.mrf.mxu0
        %v1376 = vadd.f32 0.0, %v1375
        %v1377 = vpop.f32.mrf.mxu0
        %1378 = vmatprep.mubr.f32.mxu0 0.0
        %1379 = vmatmul.mubr.f32.gmra.mxu0 %v1279
        %v1380 = vpop.f32.mrf.mxu0
        %v1381 = vadd.f32 0.0, %v1380
        %v1382 = vpop.f32.mrf.mxu0
        %1383 = vmatprep.mubr.f32.mxu0 0.0
        %1384 = vmatmul.mubr.f32.gmra.mxu0 %v1282
        %v1385 = vpop.f32.mrf.mxu0
        %v1386 = vadd.f32 0.0, %v1385
        %v1387 = vpop.f32.mrf.mxu0
        %1388 = vdwg.mxu0
        %v1390 = vsel %vm627, %v1236, 0
        %v1393 = vsel %vm627, %v1237, 0
        %v1396 = vsel %vm627, %v1238, 0
        %v1399 = vsel %vm627, %v1239, 0
        %v1402 = vsel %vm627, %v1240, 0
        %v1405 = vsel %vm627, %v1241, 0
        %v1408 = vsel %vm627, %v1242, 0
        %v1411 = vsel %vm627, %v1243, 0
        %1413 = vmatprep.subr.mxu0 0.0
        %1414 = vmatpush1.msra.mxu0 0.0
        %1415 = vmatprep.subr.mxu0 0.0
        %1416 = vmatpush1.msra.mxu0 0.0
        %1417 = vmatprep.subr.mxu0 0.0
        %1418 = vmatpush1.msra.mxu0 0.0
        %1419 = vmatprep.subr.mxu0 0.0
        %1420 = vmatpush1.msra.mxu0 0.0
        %1421 = vmatprep.subr.mxu0 0.0
        %1422 = vmatpush1.msra.mxu0 0.0
        %1423 = vmatprep.subr.mxu0 0.0
        %1424 = vmatpush1.msra.mxu0 0.0
        %1425 = vmatprep.subr.mxu0 0.0
        %1426 = vmatpush1.msra.mxu0 0.0
        %1427 = vmatprep.subr.mxu0 0.0
        %1428 = vmatpush1.msra.mxu0 0.0
        %1429 = vmatprep.subr.mxu0 0.0
        %1430 = vmatpush1.msra.mxu0 0.0
        %1431 = vmatprep.subr.mxu0 0.0
        %1432 = vmatpush1.msra.mxu0 0.0
        %1433 = vmatprep.subr.mxu0 0.0
        %1434 = vmatpush1.msra.mxu0 0.0
        %1435 = vmatprep.subr.mxu0 0.0
        %1436 = vmatpush1.msra.mxu0 0.0
        %1437 = vmatprep.subr.mxu0 0.0
        %1438 = vmatpush1.msra.mxu0 %v1247
        %1439 = vmatprep.subr.mxu0 0.0
        %1440 = vmatpush1.msra.mxu0 %v1246
        %1441 = vmatprep.subr.mxu0 0.0
        %1442 = vmatpush1.msra.mxu0 %v1245
        %1443 = vmatprep.subr.mxu0 0.0
        %1444 = vmatpush1.msra.mxu0 %v1244
        %1445 = vmatprep.subr.mxu0 0.0
        %1446 = vmatpush2.msra.mxu0 0.0
        %1447 = vmatprep.subr.mxu0 0.0
        %1448 = vmatpush2.msra.mxu0 0.0
        %1449 = vmatprep.subr.mxu0 0.0
        %1450 = vmatpush2.msra.mxu0 0.0
        %1451 = vmatprep.subr.mxu0 0.0
        %1452 = vmatpush2.msra.mxu0 0.0
        %1453 = vmatprep.subr.mxu0 0.0
        %1454 = vmatpush2.msra.mxu0 0.0
        %1455 = vmatprep.subr.mxu0 0.0
        %1456 = vmatpush2.msra.mxu0 0.0
        %1457 = vmatprep.subr.mxu0 0.0
        %1458 = vmatpush2.msra.mxu0 0.0
        %1459 = vmatprep.subr.mxu0 0.0
        %1460 = vmatpush2.msra.mxu0 0.0
        %1461 = vmatprep.subr.mxu0 0.0
        %1462 = vmatpush2.msra.mxu0 0.0
        %1463 = vmatprep.subr.mxu0 0.0
        %1464 = vmatpush2.msra.mxu0 0.0
        %1465 = vmatprep.subr.mxu0 0.0
        %1466 = vmatpush2.msra.mxu0 0.0
        %1467 = vmatprep.subr.mxu0 0.0
        %1468 = vmatpush2.msra.mxu0 0.0
        %1469 = vmatprep.subr.mxu0 0.0
        %1470 = vmatpush2.msra.mxu0 0.0
        %1471 = vmatprep.subr.mxu0 0.0
        %1472 = vmatpush2.msra.mxu0 0.0
        %1473 = vmatprep.subr.mxu0 0.0
        %1474 = vmatpush2.msra.mxu0 0.0
        %1475 = vmatprep.subr.mxu0 0.0
        %1476 = vmatpush2.msra.mxu0 0.0
        %1477 = vmatprep.mubr.f32.mxu0 0.0
        %1478 = vmatmul.mubr.f32.gmra.mxu0 %v1390
        %v1479 = vpop.f32.mrf.mxu0
        %v1480 = vadd.f32 %v1351, %v1479
        %v1481 = vpop.f32.mrf.mxu0
        %1482 = vmatprep.mubr.f32.mxu0 0.0
        %1483 = vmatmul.mubr.f32.gmra.mxu0 %v1393
        %v1484 = vpop.f32.mrf.mxu0
        %v1485 = vadd.f32 %v1356, %v1484
        %v1486 = vpop.f32.mrf.mxu0
        %1487 = vmatprep.mubr.f32.mxu0 0.0
        %1488 = vmatmul.mubr.f32.gmra.mxu0 %v1396
        %v1489 = vpop.f32.mrf.mxu0
        %v1490 = vadd.f32 %v1361, %v1489
        %v1491 = vpop.f32.mrf.mxu0
        %1492 = vmatprep.mubr.f32.mxu0 0.0
        %1493 = vmatmul.mubr.f32.gmra.mxu0 %v1399
        %v1494 = vpop.f32.mrf.mxu0
        %v1495 = vadd.f32 %v1366, %v1494
        %v1496 = vpop.f32.mrf.mxu0
        %1497 = vmatprep.mubr.f32.mxu0 0.0
        %1498 = vmatmul.mubr.f32.gmra.mxu0 %v1402
        %v1499 = vpop.f32.mrf.mxu0
        %v1500 = vadd.f32 %v1371, %v1499
        %v1501 = vpop.f32.mrf.mxu0
        %1502 = vmatprep.mubr.f32.mxu0 0.0
        %1503 = vmatmul.mubr.f32.gmra.mxu0 %v1405
        %v1504 = vpop.f32.mrf.mxu0
        %v1505 = vadd.f32 %v1376, %v1504
        %v1506 = vpop.f32.mrf.mxu0
        %1507 = vmatprep.mubr.f32.mxu0 0.0
        %1508 = vmatmul.mubr.f32.gmra.mxu0 %v1408
        %v1509 = vpop.f32.mrf.mxu0
        %v1510 = vadd.f32 %v1381, %v1509
        %v1511 = vpop.f32.mrf.mxu0
        %1512 = vmatprep.mubr.f32.mxu0 0.0
        %1513 = vmatmul.mubr.f32.gmra.mxu0 %v1411
        %v1514 = vpop.f32.mrf.mxu0
        %v1515 = vadd.f32 %v1386, %v1514
        %v1516 = vpop.f32.mrf.mxu0
        %1517 = vdwg.mxu0
        %v1518 = vld [vmem:[%s8] sm:$0x1]
        %v1520 = vlaneseq
        %v1521 = vshrl.u32 %v1520, 7
        %v1522 = vsub.s32 0, %v1521
        %v1523 = vrot.slane %v1518, %v1522
        %v1525 = vadd.f32 %v1480, %v1523
        %v1526 = vadd.f32 %v1485, %v1523
        %v1527 = vadd.f32 %v1490, %v1523
        %v1528 = vadd.f32 %v1495, %v1523
        %v1529 = vadd.f32 %v1500, %v1523
        %v1530 = vadd.f32 %v1505, %v1523
        %v1531 = vadd.f32 %v1510, %v1523
        %v1532 = vadd.f32 %v1515, %v1523
        %vm1533 = vcmask 39936
        %1534 = vst.msk [vmem:[%s460] sm:$0xff] %vm1533, %v1525
        %1535 = vst.msk [vmem:[%s460 + $0x8] sm:$0xff] %vm1533, %v1526
        %1536 = vst.msk [vmem:[%s460 + $0x10] sm:$0xff] %vm1533, %v1527
        %1537 = vst.msk [vmem:[%s460 + $0x18] sm:$0xff] %vm1533, %v1528
        %1538 = vst.msk [vmem:[%s460 + $0x20] sm:$0xff] %vm1533, %v1529
        %1539 = vst.msk [vmem:[%s460 + $0x28] sm:$0xff] %vm1533, %v1530
        %1540 = vst.msk [vmem:[%s460 + $0x30] sm:$0xff] %vm1533, %v1531
        %1541 = vst.msk [vmem:[%s460 + $0x38] sm:$0xff] %vm1533, %v1532
        %v1542 = vld [vmem:[%s9] sm:$0x1f]
        %v1543 = vlaneseq
        %v1544 = vand.u32 %v1543, 127
        %vm1545 = vcmp.eq.s32.totalorder %v1544, 3
        %v1546 = vsel %vm1545, 0.0, -10000.0
        %1548 = vset.pattern.permute.xlu0 0
        %1549 = vperm.xlu0 %1548, %v1546
        %v1550 = vpop.permute.xlu0 %1549
        %v1552 = vlaneseq
        %v1553 = vshrl.u32 %v1552, 7
        %v1554 = vsub.s32 0, %v1553
        %v1555 = vrot.slane %v1542, %v1554
        %v1556 = vadd.f32 %v1550, %v1555
        %1557 = vset.pattern.permute.xlu0 1
        %1558 = vperm.xlu0 %1557, %v1546
        %v1559 = vpop.permute.xlu0 %1558
        %v1561 = vlaneseq
        %v1562 = vshrl.u32 %v1561, 7
        %v1563 = vsub.s32 1, %v1562
        %v1564 = vrot.slane %v1542, %v1563
        %v1565 = vadd.f32 %v1559, %v1564
        %1566 = vset.pattern.permute.xlu0 2
        %1567 = vperm.xlu0 %1566, %v1546
        %v1568 = vpop.permute.xlu0 %1567
        %v1570 = vlaneseq
        %v1571 = vshrl.u32 %v1570, 7
        %v1572 = vsub.s32 2, %v1571
        %v1573 = vrot.slane %v1542, %v1572
        %v1574 = vadd.f32 %v1568, %v1573
        %1575 = vset.pattern.permute.xlu0 3
        %1576 = vperm.xlu0 %1575, %v1546
        %v1577 = vpop.permute.xlu0 %1576
        %v1579 = vlaneseq
        %v1580 = vshrl.u32 %v1579, 7
        %v1581 = vsub.s32 3, %v1580
        %v1582 = vrot.slane %v1542, %v1581
        %v1583 = vadd.f32 %v1577, %v1582
        %1584 = vset.pattern.permute.xlu0 4
        %1585 = vperm.xlu0 %1584, %v1546
        %v1586 = vpop.permute.xlu0 %1585
        %v1588 = vlaneseq
        %v1589 = vshrl.u32 %v1588, 7
        %v1590 = vsub.s32 4, %v1589
        %v1591 = vrot.slane %v1542, %v1590
        %v1592 = vadd.f32 %v1586, %v1591
        %v1593 = vmax.f32 %v1556, %v1565
        %v1594 = vmax.f32 %v1593, %v1574
        %v1595 = vmax.f32 %v1594, %v1583
        %v1596 = vmax.f32 %v1595, %v1592
        %v1597 = vadd.f32 %v1596, %v1525
        %1599 = vset.pattern.permute.xlu0 0
        %1600 = vperm.xlu0 %1599, %v1597
        %v1601 = vpop.permute.xlu0 %1600
        %v1603 = vadd.f32 %v1601, %v1555
        %1604 = vset.pattern.permute.xlu0 1
        %1605 = vperm.xlu0 %1604, %v1597
        %v1606 = vpop.permute.xlu0 %1605
        %v1608 = vadd.f32 %v1606, %v1564
        %1609 = vset.pattern.permute.xlu0 2
        %1610 = vperm.xlu0 %1609, %v1597
        %v1611 = vpop.permute.xlu0 %1610
        %v1613 = vadd.f32 %v1611, %v1573
        %1614 = vset.pattern.permute.xlu0 3
        %1615 = vperm.xlu0 %1614, %v1597
        %v1616 = vpop.permute.xlu0 %1615
        %v1618 = vadd.f32 %v1616, %v1582
        %1619 = vset.pattern.permute.xlu0 4
        %1620 = vperm.xlu0 %1619, %v1597
        %v1621 = vpop.permute.xlu0 %1620
        %v1623 = vadd.f32 %v1621, %v1591
        %v1624 = vmax.f32 %v1603, %v1608
        %v1625 = vmax.f32 %v1624, %v1613
        %v1626 = vmax.f32 %v1625, %v1618
        %v1627 = vmax.f32 %v1626, %v1623
        %vm1628 = vcmp.eq.f32.partialorder %v1623, %v1627
        %v1629 = vsel %vm1628, 4, 5
        %vm1630 = vcmp.eq.f32.partialorder %v1618, %v1627
        %v1631 = vsel %vm1630, 3, %v1629
        %vm1632 = vcmp.eq.f32.partialorder %v1613, %v1627
        %v1633 = vsel %vm1632, 2, %v1631
        %vm1634 = vcmp.eq.f32.partialorder %v1608, %v1627
        %v1635 = vsel %vm1634, 1, %v1633
        %vm1636 = vcmp.eq.f32.partialorder %v1603, %v1627
        %v1637 = vsel %vm1636, 0, %v1635
        %v1638 = vadd.f32 %v1627, %v1526
        %1640 = vset.pattern.permute.xlu0 0
        %1641 = vperm.xlu0 %1640, %v1638
        %v1642 = vpop.permute.xlu0 %1641
        %v1644 = vadd.f32 %v1642, %v1555
        %1645 = vset.pattern.permute.xlu0 1
        %1646 = vperm.xlu0 %1645, %v1638
        %v1647 = vpop.permute.xlu0 %1646
        %v1649 = vadd.f32 %v1647, %v1564
        %1650 = vset.pattern.permute.xlu0 2
        %1651 = vperm.xlu0 %1650, %v1638
        %v1652 = vpop.permute.xlu0 %1651
        %v1654 = vadd.f32 %v1652, %v1573
        %1655 = vset.pattern.permute.xlu0 3
        %1656 = vperm.xlu0 %1655, %v1638
        %v1657 = vpop.permute.xlu0 %1656
        %v1659 = vadd.f32 %v1657, %v1582
        %1660 = vset.pattern.permute.xlu0 4
        %1661 = vperm.xlu0 %1660, %v1638
        %v1662 = vpop.permute.xlu0 %1661
        %v1664 = vadd.f32 %v1662, %v1591
        %v1665 = vmax.f32 %v1644, %v1649
        %v1666 = vmax.f32 %v1665, %v1654
        %v1667 = vmax.f32 %v1666, %v1659
        %v1668 = vmax.f32 %v1667, %v1664
        %vm1669 = vcmp.eq.f32.partialorder %v1664, %v1668
        %v1670 = vsel %vm1669, 4, 5
        %vm1671 = vcmp.eq.f32.partialorder %v1659, %v1668
        %v1672 = vsel %vm1671, 3, %v1670
        %vm1673 = vcmp.eq.f32.partialorder %v1654, %v1668
        %v1674 = vsel %vm1673, 2, %v1672
        %vm1675 = vcmp.eq.f32.partialorder %v1649, %v1668
        %v1676 = vsel %vm1675, 1, %v1674
        %vm1677 = vcmp.eq.f32.partialorder %v1644, %v1668
        %v1678 = vsel %vm1677, 0, %v1676
        %v1679 = vadd.f32 %v1668, %v1527
        %1681 = vset.pattern.permute.xlu0 0
        %1682 = vperm.xlu0 %1681, %v1679
        %v1683 = vpop.permute.xlu0 %1682
        %v1685 = vadd.f32 %v1683, %v1555
        %1686 = vset.pattern.permute.xlu0 1
        %1687 = vperm.xlu0 %1686, %v1679
        %v1688 = vpop.permute.xlu0 %1687
        %v1690 = vadd.f32 %v1688, %v1564
        %1691 = vset.pattern.permute.xlu0 2
        %1692 = vperm.xlu0 %1691, %v1679
        %v1693 = vpop.permute.xlu0 %1692
        %v1695 = vadd.f32 %v1693, %v1573
        %1696 = vset.pattern.permute.xlu0 3
        %1697 = vperm.xlu0 %1696, %v1679
        %v1698 = vpop.permute.xlu0 %1697
        %v1700 = vadd.f32 %v1698, %v1582
        %1701 = vset.pattern.permute.xlu0 4
        %1702 = vperm.xlu0 %1701, %v1679
        %v1703 = vpop.permute.xlu0 %1702
        %v1705 = vadd.f32 %v1703, %v1591
        %v1706 = vmax.f32 %v1685, %v1690
        %v1707 = vmax.f32 %v1706, %v1695
        %v1708 = vmax.f32 %v1707, %v1700
        %v1709 = vmax.f32 %v1708, %v1705
        %vm1710 = vcmp.eq.f32.partialorder %v1705, %v1709
        %v1711 = vsel %vm1710, 4, 5
        %vm1712 = vcmp.eq.f32.partialorder %v1700, %v1709
        %v1713 = vsel %vm1712, 3, %v1711
        %vm1714 = vcmp.eq.f32.partialorder %v1695, %v1709
        %v1715 = vsel %vm1714, 2, %v1713
        %vm1716 = vcmp.eq.f32.partialorder %v1690, %v1709
        %v1717 = vsel %vm1716, 1, %v1715
        %vm1718 = vcmp.eq.f32.partialorder %v1685, %v1709
        %v1719 = vsel %vm1718, 0, %v1717
        %v1720 = vadd.f32 %v1709, %v1528
        %1722 = vset.pattern.permute.xlu0 0
        %1723 = vperm.xlu0 %1722, %v1720
        %v1724 = vpop.permute.xlu0 %1723
        %v1726 = vadd.f32 %v1724, %v1555
        %1727 = vset.pattern.permute.xlu0 1
        %1728 = vperm.xlu0 %1727, %v1720
        %v1729 = vpop.permute.xlu0 %1728
        %v1731 = vadd.f32 %v1729, %v1564
        %1732 = vset.pattern.permute.xlu0 2
        %1733 = vperm.xlu0 %1732, %v1720
        %v1734 = vpop.permute.xlu0 %1733
        %v1736 = vadd.f32 %v1734, %v1573
        %1737 = vset.pattern.permute.xlu0 3
        %1738 = vperm.xlu0 %1737, %v1720
        %v1739 = vpop.permute.xlu0 %1738
        %v1741 = vadd.f32 %v1739, %v1582
        %1742 = vset.pattern.permute.xlu0 4
        %1743 = vperm.xlu0 %1742, %v1720
        %v1744 = vpop.permute.xlu0 %1743
        %v1746 = vadd.f32 %v1744, %v1591
        %v1747 = vmax.f32 %v1726, %v1731
        %v1748 = vmax.f32 %v1747, %v1736
        %v1749 = vmax.f32 %v1748, %v1741
        %v1750 = vmax.f32 %v1749, %v1746
        %vm1751 = vcmp.eq.f32.partialorder %v1746, %v1750
        %v1752 = vsel %vm1751, 4, 5
        %vm1753 = vcmp.eq.f32.partialorder %v1741, %v1750
        %v1754 = vsel %vm1753, 3, %v1752
        %vm1755 = vcmp.eq.f32.partialorder %v1736, %v1750
        %v1756 = vsel %vm1755, 2, %v1754
        %vm1757 = vcmp.eq.f32.partialorder %v1731, %v1750
        %v1758 = vsel %vm1757, 1, %v1756
        %vm1759 = vcmp.eq.f32.partialorder %v1726, %v1750
        %v1760 = vsel %vm1759, 0, %v1758
        %v1761 = vadd.f32 %v1750, %v1529
        %1763 = vset.pattern.permute.xlu0 0
        %1764 = vperm.xlu0 %1763, %v1761
        %v1765 = vpop.permute.xlu0 %1764
        %v1767 = vadd.f32 %v1765, %v1555
        %1768 = vset.pattern.permute.xlu0 1
        %1769 = vperm.xlu0 %1768, %v1761
        %v1770 = vpop.permute.xlu0 %1769
        %v1772 = vadd.f32 %v1770, %v1564
        %1773 = vset.pattern.permute.xlu0 2
        %1774 = vperm.xlu0 %1773, %v1761
        %v1775 = vpop.permute.xlu0 %1774
        %v1777 = vadd.f32 %v1775, %v1573
        %1778 = vset.pattern.permute.xlu0 3
        %1779 = vperm.xlu0 %1778, %v1761
        %v1780 = vpop.permute.xlu0 %1779
        %v1782 = vadd.f32 %v1780, %v1582
        %1783 = vset.pattern.permute.xlu0 4
        %1784 = vperm.xlu0 %1783, %v1761
        %v1785 = vpop.permute.xlu0 %1784
        %v1787 = vadd.f32 %v1785, %v1591
        %v1788 = vmax.f32 %v1767, %v1772
        %v1789 = vmax.f32 %v1788, %v1777
        %v1790 = vmax.f32 %v1789, %v1782
        %v1791 = vmax.f32 %v1790, %v1787
        %vm1792 = vcmp.eq.f32.partialorder %v1787, %v1791
        %v1793 = vsel %vm1792, 4, 5
        %vm1794 = vcmp.eq.f32.partialorder %v1782, %v1791
        %v1795 = vsel %vm1794, 3, %v1793
        %vm1796 = vcmp.eq.f32.partialorder %v1777, %v1791
        %v1797 = vsel %vm1796, 2, %v1795
        %vm1798 = vcmp.eq.f32.partialorder %v1772, %v1791
        %v1799 = vsel %vm1798, 1, %v1797
        %vm1800 = vcmp.eq.f32.partialorder %v1767, %v1791
        %v1801 = vsel %vm1800, 0, %v1799
        %v1802 = vadd.f32 %v1791, %v1530
        %1804 = vset.pattern.permute.xlu0 0
        %1805 = vperm.xlu0 %1804, %v1802
        %v1806 = vpop.permute.xlu0 %1805
        %v1808 = vadd.f32 %v1806, %v1555
        %1809 = vset.pattern.permute.xlu0 1
        %1810 = vperm.xlu0 %1809, %v1802
        %v1811 = vpop.permute.xlu0 %1810
        %v1813 = vadd.f32 %v1811, %v1564
        %1814 = vset.pattern.permute.xlu0 2
        %1815 = vperm.xlu0 %1814, %v1802
        %v1816 = vpop.permute.xlu0 %1815
        %v1818 = vadd.f32 %v1816, %v1573
        %1819 = vset.pattern.permute.xlu0 3
        %1820 = vperm.xlu0 %1819, %v1802
        %v1821 = vpop.permute.xlu0 %1820
        %v1823 = vadd.f32 %v1821, %v1582
        %1824 = vset.pattern.permute.xlu0 4
        %1825 = vperm.xlu0 %1824, %v1802
        %v1826 = vpop.permute.xlu0 %1825
        %v1828 = vadd.f32 %v1826, %v1591
        %v1829 = vmax.f32 %v1808, %v1813
        %v1830 = vmax.f32 %v1829, %v1818
        %v1831 = vmax.f32 %v1830, %v1823
        %v1832 = vmax.f32 %v1831, %v1828
        %vm1833 = vcmp.eq.f32.partialorder %v1828, %v1832
        %v1834 = vsel %vm1833, 4, 5
        %vm1835 = vcmp.eq.f32.partialorder %v1823, %v1832
        %v1836 = vsel %vm1835, 3, %v1834
        %vm1837 = vcmp.eq.f32.partialorder %v1818, %v1832
        %v1838 = vsel %vm1837, 2, %v1836
        %vm1839 = vcmp.eq.f32.partialorder %v1813, %v1832
        %v1840 = vsel %vm1839, 1, %v1838
        %vm1841 = vcmp.eq.f32.partialorder %v1808, %v1832
        %v1842 = vsel %vm1841, 0, %v1840
        %v1843 = vadd.f32 %v1832, %v1531
        %1845 = vset.pattern.permute.xlu0 0
        %1846 = vperm.xlu0 %1845, %v1843
        %v1847 = vpop.permute.xlu0 %1846
        %v1849 = vadd.f32 %v1847, %v1555
        %1850 = vset.pattern.permute.xlu0 1
        %1851 = vperm.xlu0 %1850, %v1843
        %v1852 = vpop.permute.xlu0 %1851
        %v1854 = vadd.f32 %v1852, %v1564
        %1855 = vset.pattern.permute.xlu0 2
        %1856 = vperm.xlu0 %1855, %v1843
        %v1857 = vpop.permute.xlu0 %1856
        %v1859 = vadd.f32 %v1857, %v1573
        %1860 = vset.pattern.permute.xlu0 3
        %1861 = vperm.xlu0 %1860, %v1843
        %v1862 = vpop.permute.xlu0 %1861
        %v1864 = vadd.f32 %v1862, %v1582
        %1865 = vset.pattern.permute.xlu0 4
        %1866 = vperm.xlu0 %1865, %v1843
        %v1867 = vpop.permute.xlu0 %1866
        %v1869 = vadd.f32 %v1867, %v1591
        %v1870 = vmax.f32 %v1849, %v1854
        %v1871 = vmax.f32 %v1870, %v1859
        %v1872 = vmax.f32 %v1871, %v1864
        %v1873 = vmax.f32 %v1872, %v1869
        %vm1874 = vcmp.eq.f32.partialorder %v1869, %v1873
        %v1875 = vsel %vm1874, 4, 5
        %vm1876 = vcmp.eq.f32.partialorder %v1864, %v1873
        %v1877 = vsel %vm1876, 3, %v1875
        %vm1878 = vcmp.eq.f32.partialorder %v1859, %v1873
        %v1879 = vsel %vm1878, 2, %v1877
        %vm1880 = vcmp.eq.f32.partialorder %v1854, %v1873
        %v1881 = vsel %vm1880, 1, %v1879
        %vm1882 = vcmp.eq.f32.partialorder %v1849, %v1873
        %v1883 = vsel %vm1882, 0, %v1881
        %v1884 = vadd.f32 %v1873, %v1532
        %v1885 = vld [vmem:[%s10] sm:$0x1]
        %v1887 = vlaneseq
        %v1888 = vshrl.u32 %v1887, 7
        %v1889 = vsub.s32 0, %v1888
        %v1890 = vrot.slane %v1885, %v1889
        %v1892 = vadd.f32 %v1884, %v1890
        %v1893 = vsel %vm1533, %v1892, -inf
        %1894 = vmax.xlane.f32.xlu0 %v1893
        %v1895 = vpop.xlane.xlu0 %1894
        %vm1896 = vcmp.eq.f32.partialorder %v1892, %v1895
        %v1897 = vsel %vm1896, %v1544, 5
        %v1898 = vsel %vm1533, %v1897, 2147483647
        %v1899 = vand.u32 %v1898, 65535
        %v1900 = vshra.s32 %v1898, 16
        %v1901 = vcvt.s32.f32 %v1899
        %v1902 = vcvt.s32.f32 %v1900
        %1903 = vmin.xlane.f32.xlu0 %v1902
        %v1904 = vpop.xlane.xlu0 %1903
        %vm1905 = vcmp.eq.f32.partialorder %v1902, %v1904
        %v1906 = vsel %vm1905, %v1901, inf
        %1907 = vmin.xlane.f32.xlu0 %v1906
        %v1908 = vpop.xlane.xlu0 %1907
        %v1909 = vcvt.f32.s32 %v1908
        %v1910 = vcvt.f32.s32 %v1904
        %v1911 = vshll.u32 %v1910, 16
        %v1912 = vadd.s32 %v1911, %v1909
        %vm1913 = vcmp.eq.s32.totalorder %v1544, 8
        %v1914 = vsel %vm1913, %v1895, 0.0
        %vm1915 = vcmp.eq.s32.totalorder %v1544, 7
        %v1916 = vcvt.s32.f32 %v1912
        %v1917 = vsel %vm1915, %v1916, %v1914
        %vm1918 = vcmp.eq.s32.totalorder %v1544, %v1912
        %v1919 = vsel %vm1918, %v1883, 0
        %v1920 = vsel %vm1533, %v1919, 0
        %v1921 = vand.u32 %v1920, 65535
        %v1922 = vshrl.u32 %v1920, 16
        %v1923 = vcvt.s32.f32 %v1921
        %v1924 = vcvt.s32.f32 %v1922
        %1925 = vadd.xlane.f32.xlu0 %v1923
        %v1926 = vpop.xlane.xlu0 %1925
        %1927 = vadd.xlane.f32.xlu0 %v1924
        %v1928 = vpop.xlane.xlu0 %1927
        %v1929 = vcvt.f32.s32 %v1926
        %v1930 = vcvt.f32.s32 %v1928
        %v1931 = vshll.u32 %v1930, 16
        %v1932 = vadd.s32 %v1931, %v1929
        %vm1933 = vcmp.eq.s32.totalorder %v1544, 6
        %v1934 = vcvt.s32.f32 %v1932
        %v1935 = vsel %vm1933, %v1934, %v1917
        %vm1936 = vcmp.eq.s32.totalorder %v1544, %v1932
        %v1937 = vsel %vm1936, %v1842, 0
        %v1938 = vsel %vm1533, %v1937, 0
        %v1939 = vand.u32 %v1938, 65535
        %v1940 = vshrl.u32 %v1938, 16
        %v1941 = vcvt.s32.f32 %v1939
        %v1942 = vcvt.s32.f32 %v1940
        %1943 = vadd.xlane.f32.xlu0 %v1941
        %v1944 = vpop.xlane.xlu0 %1943
        %1945 = vadd.xlane.f32.xlu0 %v1942
        %v1946 = vpop.xlane.xlu0 %1945
        %v1947 = vcvt.f32.s32 %v1944
        %v1948 = vcvt.f32.s32 %v1946
        %v1949 = vshll.u32 %v1948, 16
        %v1950 = vadd.s32 %v1949, %v1947
        %vm1951 = vcmp.eq.s32.totalorder %v1544, 5
        %v1952 = vcvt.s32.f32 %v1950
        %v1953 = vsel %vm1951, %v1952, %v1935
        %vm1954 = vcmp.eq.s32.totalorder %v1544, %v1950
        %v1955 = vsel %vm1954, %v1801, 0
        %v1956 = vsel %vm1533, %v1955, 0
        %v1957 = vand.u32 %v1956, 65535
        %v1958 = vshrl.u32 %v1956, 16
        %v1959 = vcvt.s32.f32 %v1957
        %v1960 = vcvt.s32.f32 %v1958
        %1961 = vadd.xlane.f32.xlu0 %v1959
        %v1962 = vpop.xlane.xlu0 %1961
        %1963 = vadd.xlane.f32.xlu0 %v1960
        %v1964 = vpop.xlane.xlu0 %1963
        %v1965 = vcvt.f32.s32 %v1962
        %v1966 = vcvt.f32.s32 %v1964
        %v1967 = vshll.u32 %v1966, 16
        %v1968 = vadd.s32 %v1967, %v1965
        %vm1969 = vcmp.eq.s32.totalorder %v1544, 4
        %v1970 = vcvt.s32.f32 %v1968
        %v1971 = vsel %vm1969, %v1970, %v1953
        %vm1972 = vcmp.eq.s32.totalorder %v1544, %v1968
        %v1973 = vsel %vm1972, %v1760, 0
        %v1974 = vsel %vm1533, %v1973, 0
        %v1975 = vand.u32 %v1974, 65535
        %v1976 = vshrl.u32 %v1974, 16
        %v1977 = vcvt.s32.f32 %v1975
        %v1978 = vcvt.s32.f32 %v1976
        %1979 = vadd.xlane.f32.xlu0 %v1977
        %v1980 = vpop.xlane.xlu0 %1979
        %1981 = vadd.xlane.f32.xlu0 %v1978
        %v1982 = vpop.xlane.xlu0 %1981
        %v1983 = vcvt.f32.s32 %v1980
        %v1984 = vcvt.f32.s32 %v1982
        %v1985 = vshll.u32 %v1984, 16
        %v1986 = vadd.s32 %v1985, %v1983
        %v1987 = vcvt.s32.f32 %v1986
        %v1988 = vsel %vm1545, %v1987, %v1971
        %vm1989 = vcmp.eq.s32.totalorder %v1544, %v1986
        %v1990 = vsel %vm1989, %v1719, 0
        %v1991 = vsel %vm1533, %v1990, 0
        %v1992 = vand.u32 %v1991, 65535
        %v1993 = vshrl.u32 %v1991, 16
        %v1994 = vcvt.s32.f32 %v1992
        %v1995 = vcvt.s32.f32 %v1993
        %1996 = vadd.xlane.f32.xlu0 %v1994
        %v1997 = vpop.xlane.xlu0 %1996
        %1998 = vadd.xlane.f32.xlu0 %v1995
        %v1999 = vpop.xlane.xlu0 %1998
        %v2000 = vcvt.f32.s32 %v1997
        %v2001 = vcvt.f32.s32 %v1999
        %v2002 = vshll.u32 %v2001, 16
        %v2003 = vadd.s32 %v2002, %v2000
        %vm2004 = vcmp.eq.s32.totalorder %v1544, 2
        %v2005 = vcvt.s32.f32 %v2003
        %v2006 = vsel %vm2004, %v2005, %v1988
        %vm2007 = vcmp.eq.s32.totalorder %v1544, %v2003
        %v2008 = vsel %vm2007, %v1678, 0
        %v2009 = vsel %vm1533, %v2008, 0
        %v2010 = vand.u32 %v2009, 65535
        %v2011 = vshrl.u32 %v2009, 16
        %v2012 = vcvt.s32.f32 %v2010
        %v2013 = vcvt.s32.f32 %v2011
        %2014 = vadd.xlane.f32.xlu0 %v2012
        %v2015 = vpop.xlane.xlu0 %2014
        %2016 = vadd.xlane.f32.xlu0 %v2013
        %v2017 = vpop.xlane.xlu0 %2016
        %v2018 = vcvt.f32.s32 %v2015
        %v2019 = vcvt.f32.s32 %v2017
        %v2020 = vshll.u32 %v2019, 16
        %v2021 = vadd.s32 %v2020, %v2018
        %vm2022 = vcmp.eq.s32.totalorder %v1544, 1
        %v2023 = vcvt.s32.f32 %v2021
        %v2024 = vsel %vm2022, %v2023, %v2006
        %vm2025 = vcmp.eq.s32.totalorder %v1544, %v2021
        %v2026 = vsel %vm2025, %v1637, 0
        %v2027 = vsel %vm1533, %v2026, 0
        %v2028 = vand.u32 %v2027, 65535
        %v2029 = vshrl.u32 %v2027, 16
        %v2030 = vcvt.s32.f32 %v2028
        %v2031 = vcvt.s32.f32 %v2029
        %2032 = vadd.xlane.f32.xlu0 %v2030
        %v2033 = vpop.xlane.xlu0 %2032
        %2034 = vadd.xlane.f32.xlu0 %v2031
        %v2035 = vpop.xlane.xlu0 %2034
        %v2036 = vcvt.f32.s32 %v2033
        %v2037 = vcvt.f32.s32 %v2035
        %v2038 = vshll.u32 %v2037, 16
        %v2039 = vadd.s32 %v2038, %v2036
        %vm2040 = vcmp.eq.s32.totalorder %v1544, 0
        %v2041 = vcvt.s32.f32 %v2039
        %v2042 = vsel %vm2040, %v2041, %v2024
        %2043 = vst [vmem:[%s441] sm:$0xff] %v2042
        %s2044 = smul.u32 8, %s27
        %p2045 = scmp.lt.s32.totalorder %s2044, 15
        %s2046 = scalar_select %p2045, %s2044, 15
        %s2047 = smul.addr %s2046, 8
        %s2048 = scalar_lea.vmem %s11, %s2047
        %s2049 = sand.u32 %s307, 1
        %s2050 = scalar_lea.sflag [#allocation5], %s2049
        %s2051 = sand.u32 %s307, 1
        %s2052 = smul.addr %s2051, 8
        %s2053 = scalar_lea.vmem [#allocation4], %s2052
        // Predicated region
        $region65: #{tpu_custom_call.1} parent=63 // pred_check
          %p2054 = pneg %p291
        $region66: #{tpu_custom_call.1} parent=63 // pred_check_branch
          %2056 = sbr.rel (%p2054) target = $region68
        $region67: #{tpu_custom_call.1} parent=63 // pred_region
          %s2057 = smul.u32 8, %s27
        $region68: #{tpu_custom_call.1} parent=63 // pred_fallthru
          _
        // Predicated region
        $region69: #{tpu_custom_call.1} parent=63 // pred_check
          %p2058 = pneg %p317
        $region70: #{tpu_custom_call.1} parent=63 // pred_check_branch
          %2060 = sbr.rel (%p2058) target = $region72
        $region71: #{tpu_custom_call.1} parent=63 // pred_region
          %s2062 = ssub.s32 128, 128
          %2063 = vsyncadd %s2050, %s2062
          %s2064 = smul.addr %s27, 128
          %s2065 = scalar_lea.hbm %s12, %s2064
          %s2067 = sshll.u32 %s2053, 4
          %s2068 = int_to_ptr.vmem [resolvable:$true] %s2067
          %2070 = dma.vmem_to_hbm [thread:$0]  %s2068, 128, %s2065, %s2050
        $region72: #{tpu_custom_call.1} parent=63 // pred_fallthru
          _
      $region64: #{tpu_custom_call.1} parent=5 // pred_fallthru
        _
      %p2071 = scmp.le.s32.totalorder 2, %s22
      // Predicated region
      $region73: #{tpu_custom_call.1} parent=5 // pred_check
        %p2072 = pneg %p2071
      $region74: #{tpu_custom_call.1} parent=5 // pred_check_branch
        %2074 = sbr.rel (%p2072) target = $region76
      $region75: #{tpu_custom_call.1} parent=5 // pred_region
        %s2075 = ssub.s32 %s22, 2
        // Predicated region
        $region77: #{tpu_custom_call.1} parent=75 // pred_check
          %p2076 = pneg %p297
        $region78: #{tpu_custom_call.1} parent=75 // pred_check_branch
          %2078 = sbr.rel (%p2076) target = $region80
        $region79: #{tpu_custom_call.1} parent=75 // pred_region
          %s2079 = smul.u32 8, %s28
          %p2080 = scmp.lt.s32.totalorder %s2079, 15
          %s2081 = scalar_select %p2080, %s2079, 15
          %s2082 = smul.addr %s2081, 8
          %s2083 = scalar_lea.vmem %s11, %s2082
        $region80: #{tpu_custom_call.1} parent=75 // pred_fallthru
          _
        // Predicated region
        $region81: #{tpu_custom_call.1} parent=75 // pred_check
          %p2084 = pneg %p323
        $region82: #{tpu_custom_call.1} parent=75 // pred_check_branch
          %2086 = sbr.rel (%p2084) target = $region84
        $region83: #{tpu_custom_call.1} parent=75 // pred_region
          %s2087 = sand.u32 %s308, 1
          %s2088 = scalar_lea.sflag [#allocation5], %s2087
          %s2089 = sand.u32 %s308, 1
          %s2090 = smul.addr %s2089, 8
          %s2091 = scalar_lea.vmem [#allocation4], %s2090
          %2092 = dma.done %s2088, 128
        $region84: #{tpu_custom_call.1} parent=75 // pred_fallthru
          _
      $region76: #{tpu_custom_call.1} parent=5 // pred_fallthru
        _
    $region6: #{tpu_custom_call.1} parent=1 // loop_footer
      %s26 = sadd.s32 1, %s22
    $region7: #{tpu_custom_call.1} parent=1 // loop_footer_branch
      %21 = sbr.rel target = $region3
    $region8: #{tpu_custom_call.1} parent=1 // loop_exit
      _
    %2093 = vsyncpa [#allocation5], 1
    %s2094 = scalar_lea.sflag [#allocation5], 1
    %2095 = vsyncpa %s2094, 1

</llo_original>
